<compile_context>
chip_gen: v7x
topology: tpu7x:2x2x1
jax: 0.10.0
libtpu: 0.0.40
codegen_flags: <defaults>
</compile_context>

<pallas_src>
import functools
import math

import jax
import jax.numpy as jnp
from jax.experimental import pallas as pl
from jax.experimental.pallas import tpu as pltpu


def transformer_block_kernel(
    xq_ref,     # (tq, H)   query tile of x (also residual path)
    xkv_ref,    # (S, H)    full sequence (K/V source, read only at tile 0)
    wq_ref,     # (H, H)    bf16, pre-transposed Q weight   (x @ wq)
    bq_ref,     # (1, H)    f32
    wkv_ref,    # (H, 2H)   bf16, pre-transposed fused [K|V] weight
    bkv_ref,    # (1, 2H)   f32
    wo_ref,     # (H, H)    bf16, pre-transposed out-proj weight
    bo_ref,     # (1, H)    f32
    g1_ref,     # (1, H)
    be1_ref,    # (1, H)
    w1_ref,     # (H, 4H)   bf16, pre-transposed
    b1_ref,     # (1, 4H)
    w2_ref,     # (4H, H)   bf16, pre-transposed
    b2_ref,     # (1, H)
    g2_ref,     # (1, H)
    be2_ref,    # (1, H)
    o_ref,      # (tq, H)
    k_scr,      # (N, S, hd) bf16   per-batch K cache
    v_scr,      # (N, S, hd) bf16   per-batch V cache
    q_scr,      # (N, tq, hd) bf16  per-tile Q (head-batched layout)
    ctx_scr,    # (tq, H)    bf16   per-tile attention context (head-concat layout)
    *,
    scale,
    num_heads,
):
    f32 = jnp.float32
    bf16 = jnp.bfloat16
    eps = 1e-5

    tq, H = xq_ref.shape
    S = xkv_ref.shape[0]
    hd = H // num_heads

    # ---- K/V projection: once per batch element (first query tile only) ----
    @pl.when(pl.program_id(1) == 0)
    def _():
        kv = jnp.dot(xkv_ref[...].astype(bf16), wkv_ref[...],
                     preferred_element_type=f32) + bkv_ref[...]        # (S, 2H) f32
        kv_bf = kv.astype(bf16)
        for n in range(num_heads):                                     # static unroll
            k_scr[n] = kv_bf[:, n * hd:(n + 1) * hd]                   # (S, hd)
            v_scr[n] = kv_bf[:, H + n * hd:H + (n + 1) * hd]           # (S, hd)

    # ---- Q projection (lane-dense), scale folded in, per-head relayout into scratch ----
    x_q = xq_ref[...].astype(f32)                                      # (tq, H) residual
    q2d = jnp.dot(x_q.astype(bf16), wq_ref[...],
                  preferred_element_type=f32) + bq_ref[...]            # (tq, H) f32
    q_bf = (q2d * scale).astype(bf16)
    for n in range(num_heads):                                         # static unroll
        q_scr[n] = q_bf[:, n * hd:(n + 1) * hd]                        # (tq, hd)

    # ---- scaled dot-product attention (head-batched), softmax in f32 ----
    s = jnp.einsum("nqd,nkd->nqk", q_scr[...], k_scr[...],
                   preferred_element_type=f32)                         # (N, tq, S)
    m = jnp.max(s, axis=-1, keepdims=True)
    p = jnp.exp(s - m)
    l = jnp.sum(p, axis=-1, keepdims=True)
    inv = pl.reciprocal(l, approx=True)
    inv = inv * (2.0 - l * inv)          # one Newton step -> ~f32 accuracy, no VPU divide
    ctx = jnp.einsum("nqk,nkd->nqd", (p * inv).astype(bf16), v_scr[...],
                     preferred_element_type=f32)                       # (N, tq, hd) f32

    # ---- pack heads lane-dense, output projection with head reduction on the MXU ----
    for n in range(num_heads):                                         # static unroll
        ctx_scr[:, n * hd:(n + 1) * hd] = ctx[n].astype(bf16)          # (tq, hd) slices
    attn_out = jnp.dot(ctx_scr[...], wo_ref[...],
                       preferred_element_type=f32) + bo_ref[...]       # (tq, H)

    # ---- residual + LayerNorm1 (dropout = identity) ----
    y = x_q + attn_out
    mu = jnp.mean(y, axis=-1, keepdims=True)
    var = jnp.mean((y - mu) ** 2, axis=-1, keepdims=True)
    y = (y - mu) * jax.lax.rsqrt(var + eps)
    y = y * g1_ref[...] + be1_ref[...]

    # ---- feed-forward: Linear(H, 4H) -> ReLU -> Linear(4H, H) ----
    h1 = jnp.dot(y.astype(bf16), w1_ref[...],
                 preferred_element_type=f32) + b1_ref[...]             # (tq, 4H)
    h1 = jnp.maximum(h1, 0.0)
    ff = jnp.dot(h1.astype(bf16), w2_ref[...],
                 preferred_element_type=f32) + b2_ref[...]             # (tq, H)

    # ---- residual + LayerNorm2 ----
    z = y + ff
    mu2 = jnp.mean(z, axis=-1, keepdims=True)
    var2 = jnp.mean((z - mu2) ** 2, axis=-1, keepdims=True)
    z = (z - mu2) * jax.lax.rsqrt(var2 + eps)
    z = z * g2_ref[...] + be2_ref[...]

    o_ref[...] = z.astype(o_ref.dtype)


def _vmem_limit_bytes(S, H, num_heads, tq):
    """VMEM budget: counts Pallas' 2x double-buffering of every input, the persistent
    K/V/Q/ctx scratch (lane-padded), and f32 activation temporaries.  Capped at 56 MiB so
    the request is always legal on v7x (64 MiB per TensorCore)."""
    hd = H // num_heads
    hd_pad = ((hd + 127) // 128) * 128
    ff = 4 * H
    weights_bf16 = H * H + H * 2 * H + H * H + H * ff + ff * H
    scalars_f32 = H + 2 * H + H + ff + H + 4 * H
    resident = 2 * (2 * weights_bf16 + 4 * scalars_f32)                 # double-buffered
    io = 2 * (tq * H + S * H + tq * H) * 4                              # xq, xkv, out
    scratch = (2 * num_heads * S * hd_pad + num_heads * tq * hd_pad + tq * H) * 2
    acts = (2 * num_heads * tq * S + S * 2 * H + tq * ff + 8 * tq * H) * 4
    est = resident + io + scratch + acts
    return int(min(max(2 * est, 32 * 1024 * 1024), 56 * 1024 * 1024))


def transformer_block(x, params, num_heads, q_tile=None):
    """x: (B, S, H) float32. params: dict of weights in PyTorch conventions."""
    B, S, H = x.shape
    assert H % num_heads == 0, "hidden_dim must be divisible by num_heads"
    hd = H // num_heads
    ff = 4 * H

    # Default query tile: 256 rows fills the v6e/v7x MXU; fall back to S for short seqs.
    tq = q_tile if q_tile is not None else min(S, 256)
    assert S % tq == 0, "sequence length must be divisible by the query tile"

    bf16 = jnp.bfloat16
    f32 = jnp.float32

    # ---- one-time HBM-side weight preprocessing (transpose / fuse / bf16) ----
    w_in = params["in_proj_weight"].astype(f32)       # (3H, H), rows = [Q; K; V]
    b_in = params["in_proj_bias"].astype(f32)         # (3H,)

    wq_t = w_in[0 * H:1 * H].T.astype(bf16)                                  # (H, H)
    bq = b_in[0 * H:1 * H].reshape(1, H)
    wkv_t = jnp.concatenate([w_in[1 * H:2 * H].T, w_in[2 * H:3 * H].T],
                            axis=1).astype(bf16)                             # (H, 2H)
    bkv = jnp.concatenate([b_in[1 * H:2 * H], b_in[2 * H:3 * H]]).reshape(1, 2 * H)

    wo_t = params["out_proj_weight"].astype(f32).T.astype(bf16)              # (H, H)
    bo = params["out_proj_bias"].astype(f32).reshape(1, H)

    w1_t = params["ff1_weight"].astype(f32).T.astype(bf16)                   # (H, 4H)
    b1 = params["ff1_bias"].astype(f32).reshape(1, ff)
    w2_t = params["ff2_weight"].astype(f32).T.astype(bf16)                   # (4H, H)
    b2 = params["ff2_bias"].astype(f32).reshape(1, H)

    g1 = params["norm1_weight"].astype(f32).reshape(1, H)
    be1 = params["norm1_bias"].astype(f32).reshape(1, H)
    g2 = params["norm2_weight"].astype(f32).reshape(1, H)
    be2 = params["norm2_bias"].astype(f32).reshape(1, H)

    weights = [wq_t, bq, wkv_t, bkv, wo_t, bo, g1, be1, w1_t, b1, w2_t, b2, g2, be2]

    def resident(a):
        return pl.BlockSpec(a.shape, lambda b, i, _nd=a.ndim: (0,) * _nd)

    in_specs = [
        pl.BlockSpec((pl.Squeezed(), tq, H), lambda b, i: (b, i, 0)),  # query tile of x
        pl.BlockSpec((pl.Squeezed(), S, H), lambda b, i: (b, 0, 0)),   # full x for K/V
    ] + [resident(w) for w in weights]

    out_specs = pl.BlockSpec((pl.Squeezed(), tq, H), lambda b, i: (b, i, 0))

    kernel = functools.partial(transformer_block_kernel,
                               scale=1.0 / math.sqrt(hd),
                               num_heads=num_heads)

    return pl.pallas_call(
        kernel,
        out_shape=jax.ShapeDtypeStruct((B, S, H), x.dtype),
        grid_spec=pltpu.PrefetchScalarGridSpec(
            num_scalar_prefetch=0,
            grid=(B, S // tq),
            in_specs=in_specs,
            out_specs=out_specs,
            scratch_shapes=[
                pltpu.VMEM((num_heads, S, hd), bf16),    # K cache (per batch element)
                pltpu.VMEM((num_heads, S, hd), bf16),    # V cache (per batch element)
                pltpu.VMEM((num_heads, tq, hd), bf16),   # Q (head-batched layout)
                pltpu.VMEM((tq, H), bf16),               # context (head-concat layout)
            ],
        ),
        compiler_params=pltpu.CompilerParams(
            # batch axis parallel (megacore); S-tile axis carries the K/V cache -> arbitrary
            dimension_semantics=("parallel", "arbitrary"),
            vmem_limit_bytes=_vmem_limit_bytes(S, H, num_heads, tq),
        ),
    )(x, x, *weights)


def reference_block(x, p, num_heads):
    """Pure-JAX reference (eval-mode PyTorch semantics) with the same bf16-in / f32-acc
    matmul policy (and scale-folded-into-Q) as the kernel, so the comparison isolates
    kernel correctness."""
    B, S, H = x.shape
    hd = H // num_heads
    eps = 1e-5
    scale = 1.0 / math.sqrt(hd)
    bf = jnp.bfloat16
    f32 = jnp.float32

    def mm(a, b):  # (..., K) x (K, M) in bf16 with f32 accumulation
        return jnp.einsum("...k,km->...m", a.astype(bf), b.astype(bf),
                          preferred_element_type=f32)

    x32 = x.astype(f32)
    qkv = mm(x32, p["in_proj_weight"].T) + p["in_proj_bias"]
    q, k, v = jnp.split(qkv, 3, axis=-1)
    q = q * scale                                   # scale folded into Q (matches kernel)

    def heads(t):
        return t.reshape(B, S, num_heads, hd).transpose(0, 2, 1, 3)

    q, k, v = heads(q), heads(k), heads(v)
    scores = jnp.einsum("bnqd,bnkd->bnqk", q.astype(bf), k.astype(bf),
                        preferred_element_type=f32)
    probs = jax.nn.softmax(scores, axis=-1)
    ctx = jnp.einsum("bnqk,bnkd->bnqd", probs.astype(bf), v.astype(bf),
                     preferred_element_type=f32)
    ctx = ctx.transpose(0, 2, 1, 3).reshape(B, S, H)
    attn = mm(ctx, p["out_proj_weight"].T) + p["out_proj_bias"]

    def ln(t, g, b):
        mu = jnp.mean(t, axis=-1, keepdims=True)
        var = jnp.mean((t - mu) ** 2, axis=-1, keepdims=True)
        return (t - mu) * jax.lax.rsqrt(var + eps) * g + b

    y = ln(x32 + attn, p["norm1_weight"], p["norm1_bias"])
    h1 = jax.nn.relu(mm(y, p["ff1_weight"].T) + p["ff1_bias"])
    ffo = mm(h1, p["ff2_weight"].T) + p["ff2_bias"]
    return ln(y + ffo, p["norm2_weight"], p["norm2_bias"])


if __name__ == "__main__":
    # Small, lane-dense shapes. q_tile=32 with S=64 gives grid (B, 2) so the
    # K/V-cache reuse path (program_id(1) > 0) is exercised; production default is
    # q_tile=256 (v6e/v7x MXU rows).
    B, S, H = 2, 64, 128
    num_heads = 4

    key = jax.random.PRNGKey(0)
    keys = jax.random.split(key, 12)

    # Deterministic synthetic parameters (PyTorch layout: Linear weight is (out, in)).
    params = {
        "in_proj_weight": 0.05 * jax.random.normal(keys[0], (3 * H, H), jnp.float32),
        "in_proj_bias": 0.01 * jax.random.normal(keys[1], (3 * H,), jnp.float32),
        "out_proj_weight": 0.05 * jax.random.normal(keys[2], (H, H), jnp.float32),
        "out_proj_bias": 0.01 * jax.random.normal(keys[3], (H,), jnp.float32),
        "norm1_weight": 1.0 + 0.1 * jax.random.normal(keys[4], (H,), jnp.float32),
        "norm1_bias": 0.05 * jax.random.normal(keys[5], (H,), jnp.float32),
        "ff1_weight": 0.05 * jax.random.normal(keys[6], (4 * H, H), jnp.float32),
        "ff1_bias": 0.01 * jax.random.normal(keys[7], (4 * H,), jnp.float32),
        "ff2_weight": 0.05 * jax.random.normal(keys[8], (H, 4 * H), jnp.float32),
        "ff2_bias": 0.01 * jax.random.normal(keys[9], (H,), jnp.float32),
        "norm2_weight": 1.0 + 0.1 * jax.random.normal(keys[10], (H,), jnp.float32),
        "norm2_bias": 0.05 * jax.random.normal(keys[11], (H,), jnp.float32),
    }

    x = jax.random.normal(jax.random.PRNGKey(42), (B, S, H), jnp.float32)

    out = transformer_block(x, params, num_heads, q_tile=32)
    out = jax.block_until_ready(out)

    ref = reference_block(x, params, num_heads)
    assert out.shape == (B, S, H)
    max_err = float(jnp.max(jnp.abs(out - ref)))
    assert jnp.allclose(out, ref, atol=2e-3, rtol=2e-3), f"mismatch vs reference (max {max_err})"

    print("KERNEL_OK")
</pallas_src>

<mosaic_0001>
module attributes {stable_mosaic.version = 11 : i64} {
  func.func @transformer_block_kernel(%arg0: i32, %arg1: i32, %arg2: memref<1x32x128xf32, #tpu.memory_space<vmem>>, %arg3: memref<1x64x128xf32, #tpu.memory_space<vmem>>, %arg4: memref<128x128xbf16, #tpu.memory_space<vmem>>, %arg5: memref<1x128xf32, #tpu.memory_space<vmem>>, %arg6: memref<128x256xbf16, #tpu.memory_space<vmem>>, %arg7: memref<1x256xf32, #tpu.memory_space<vmem>>, %arg8: memref<128x128xbf16, #tpu.memory_space<vmem>>, %arg9: memref<1x128xf32, #tpu.memory_space<vmem>>, %arg10: memref<1x128xf32, #tpu.memory_space<vmem>>, %arg11: memref<1x128xf32, #tpu.memory_space<vmem>>, %arg12: memref<128x512xbf16, #tpu.memory_space<vmem>>, %arg13: memref<1x512xf32, #tpu.memory_space<vmem>>, %arg14: memref<512x128xbf16, #tpu.memory_space<vmem>>, %arg15: memref<1x128xf32, #tpu.memory_space<vmem>>, %arg16: memref<1x128xf32, #tpu.memory_space<vmem>>, %arg17: memref<1x128xf32, #tpu.memory_space<vmem>>, %arg18: memref<1x32x128xf32, #tpu.memory_space<vmem>>, %arg19: memref<4x64x32xbf16, #tpu.memory_space<vmem>>, %arg20: memref<4x64x32xbf16, #tpu.memory_space<vmem>>, %arg21: memref<4x32x32xbf16, #tpu.memory_space<vmem>>, %arg22: memref<32x128xbf16, #tpu.memory_space<vmem>>) attributes {dimension_semantics = [#tpu.dimension_semantics<parallel>, #tpu.dimension_semantics<arbitrary>], iteration_bounds = array<i64: 2, 2>, scalar_prefetch = 0 : i64, scratch_operands = 4 : i64, tpu.core_type = #tpu.core_type<tc>, window_params = [{transform_indices = @transform_0, window_bounds = array<i64: 1, 32, 128>}, {transform_indices = @transform_1, window_bounds = array<i64: 1, 64, 128>}, {pipeline_mode = #tpu.pipeline_mode<synchronous>, transform_indices = @transform_2, window_bounds = array<i64: 128, 128>}, {pipeline_mode = #tpu.pipeline_mode<synchronous>, transform_indices = @transform_3, window_bounds = array<i64: 1, 128>}, {pipeline_mode = #tpu.pipeline_mode<synchronous>, transform_indices = @transform_4, window_bounds = array<i64: 128, 256>}, {pipeline_mode = #tpu.pipeline_mode<synchronous>, transform_indices = @transform_5, window_bounds = array<i64: 1, 256>}, {pipeline_mode = #tpu.pipeline_mode<synchronous>, transform_indices = @transform_6, window_bounds = array<i64: 128, 128>}, {pipeline_mode = #tpu.pipeline_mode<synchronous>, transform_indices = @transform_7, window_bounds = array<i64: 1, 128>}, {pipeline_mode = #tpu.pipeline_mode<synchronous>, transform_indices = @transform_8, window_bounds = array<i64: 1, 128>}, {pipeline_mode = #tpu.pipeline_mode<synchronous>, transform_indices = @transform_9, window_bounds = array<i64: 1, 128>}, {pipeline_mode = #tpu.pipeline_mode<synchronous>, transform_indices = @transform_10, window_bounds = array<i64: 128, 512>}, {pipeline_mode = #tpu.pipeline_mode<synchronous>, transform_indices = @transform_11, window_bounds = array<i64: 1, 512>}, {pipeline_mode = #tpu.pipeline_mode<synchronous>, transform_indices = @transform_12, window_bounds = array<i64: 512, 128>}, {pipeline_mode = #tpu.pipeline_mode<synchronous>, transform_indices = @transform_13, window_bounds = array<i64: 1, 128>}, {pipeline_mode = #tpu.pipeline_mode<synchronous>, transform_indices = @transform_14, window_bounds = array<i64: 1, 128>}, {pipeline_mode = #tpu.pipeline_mode<synchronous>, transform_indices = @transform_15, window_bounds = array<i64: 1, 128>}, {transform_indices = @transform_16, window_bounds = array<i64: 1, 32, 128>}]} {
    %c0_i32 = arith.constant 0 : i32
    %0 = arith.cmpi eq, %arg1, %c0_i32 : i32
    %1 = arith.extui %0 : i1 to i32
    %c0_i32_0 = arith.constant 0 : i32
    %2 = arith.cmpi ne, %1, %c0_i32_0 : i32
    scf.if %2 {
      %c0_75 = arith.constant 0 : index
      %c0_76 = arith.constant 0 : index
      %c0_77 = arith.constant 0 : index
      %139 = vector.load %arg3[%c0_75, %c0_76, %c0_77] : memref<1x64x128xf32, #tpu.memory_space<vmem>>, vector<1x64x128xf32>
      %140 = vector.shape_cast %139 : vector<1x64x128xf32> to vector<64x128xf32>
      %141 = arith.truncf %140 : vector<64x128xf32> to vector<64x128xbf16>
      %c0_78 = arith.constant 0 : index
      %c0_79 = arith.constant 0 : index
      %142 = vector.load %arg6[%c0_78, %c0_79] : memref<128x256xbf16, #tpu.memory_space<vmem>>, vector<128x256xbf16>
      %cst_80 = arith.constant dense<0.000000e+00> : vector<64x256xf32>
      %143 = tpu.matmul %141, %142, %cst_80 {dimension_numbers = #tpu.dot_dimension_numbers<[1], [0], [0], [1], [0, 0, 1, 1], [], []>} : vector<64x128xbf16>, vector<128x256xbf16>, vector<64x256xf32> -> vector<64x256xf32>
      %c0_81 = arith.constant 0 : index
      %c0_82 = arith.constant 0 : index
      %144 = vector.load %arg7[%c0_81, %c0_82] : memref<1x256xf32, #tpu.memory_space<vmem>>, vector<1x256xf32>
      %145 = vector.broadcast %144 : vector<1x256xf32> to vector<64x256xf32>
      %146 = arith.addf %143, %145 : vector<64x256xf32>
      %147 = arith.truncf %146 : vector<64x256xf32> to vector<64x256xbf16>
      %148 = vector.extract_strided_slice %147 {offsets = [0, 0], sizes = [64, 32], strides = [1, 1]} : vector<64x256xbf16> to vector<64x32xbf16>
      %c0_83 = arith.constant 0 : index
      %c0_84 = arith.constant 0 : index
      %c0_85 = arith.constant 0 : index
      %149 = vector.load %arg19[%c0_83, %c0_84, %c0_85] : memref<4x64x32xbf16, #tpu.memory_space<vmem>>, vector<1x64x32xbf16>
      %150 = vector.shape_cast %149 : vector<1x64x32xbf16> to vector<64x32xbf16>
      %151 = vector.shape_cast %148 : vector<64x32xbf16> to vector<1x64x32xbf16>
      tpu.vector_store %arg19[%c0_83, %c0_84, %c0_85], %151 {strides = array<i32>} : memref<4x64x32xbf16, #tpu.memory_space<vmem>>, vector<1x64x32xbf16>,
      %152 = vector.extract_strided_slice %147 {offsets = [0, 128], sizes = [64, 32], strides = [1, 1]} : vector<64x256xbf16> to vector<64x32xbf16>
      %c0_86 = arith.constant 0 : index
      %c0_87 = arith.constant 0 : index
      %c0_88 = arith.constant 0 : index
      %153 = vector.load %arg20[%c0_86, %c0_87, %c0_88] : memref<4x64x32xbf16, #tpu.memory_space<vmem>>, vector<1x64x32xbf16>
      %154 = vector.shape_cast %153 : vector<1x64x32xbf16> to vector<64x32xbf16>
      %155 = vector.shape_cast %152 : vector<64x32xbf16> to vector<1x64x32xbf16>
      tpu.vector_store %arg20[%c0_86, %c0_87, %c0_88], %155 {strides = array<i32>} : memref<4x64x32xbf16, #tpu.memory_space<vmem>>, vector<1x64x32xbf16>,
      %156 = vector.extract_strided_slice %147 {offsets = [0, 32], sizes = [64, 32], strides = [1, 1]} : vector<64x256xbf16> to vector<64x32xbf16>
      %c1_89 = arith.constant 1 : index
      %c0_90 = arith.constant 0 : index
      %c0_91 = arith.constant 0 : index
      %157 = vector.load %arg19[%c1_89, %c0_90, %c0_91] : memref<4x64x32xbf16, #tpu.memory_space<vmem>>, vector<1x64x32xbf16>
      %158 = vector.shape_cast %157 : vector<1x64x32xbf16> to vector<64x32xbf16>
      %159 = vector.shape_cast %156 : vector<64x32xbf16> to vector<1x64x32xbf16>
      tpu.vector_store %arg19[%c1_89, %c0_90, %c0_91], %159 {strides = array<i32>} : memref<4x64x32xbf16, #tpu.memory_space<vmem>>, vector<1x64x32xbf16>,
      %160 = vector.extract_strided_slice %147 {offsets = [0, 160], sizes = [64, 32], strides = [1, 1]} : vector<64x256xbf16> to vector<64x32xbf16>
      %c1_92 = arith.constant 1 : index
      %c0_93 = arith.constant 0 : index
      %c0_94 = arith.constant 0 : index
      %161 = vector.load %arg20[%c1_92, %c0_93, %c0_94] : memref<4x64x32xbf16, #tpu.memory_space<vmem>>, vector<1x64x32xbf16>
      %162 = vector.shape_cast %161 : vector<1x64x32xbf16> to vector<64x32xbf16>
      %163 = vector.shape_cast %160 : vector<64x32xbf16> to vector<1x64x32xbf16>
      tpu.vector_store %arg20[%c1_92, %c0_93, %c0_94], %163 {strides = array<i32>} : memref<4x64x32xbf16, #tpu.memory_space<vmem>>, vector<1x64x32xbf16>,
      %164 = vector.extract_strided_slice %147 {offsets = [0, 64], sizes = [64, 32], strides = [1, 1]} : vector<64x256xbf16> to vector<64x32xbf16>
      %c2_95 = arith.constant 2 : index
      %c0_96 = arith.constant 0 : index
      %c0_97 = arith.constant 0 : index
      %165 = vector.load %arg19[%c2_95, %c0_96, %c0_97] : memref<4x64x32xbf16, #tpu.memory_space<vmem>>, vector<1x64x32xbf16>
      %166 = vector.shape_cast %165 : vector<1x64x32xbf16> to vector<64x32xbf16>
      %167 = vector.shape_cast %164 : vector<64x32xbf16> to vector<1x64x32xbf16>
      tpu.vector_store %arg19[%c2_95, %c0_96, %c0_97], %167 {strides = array<i32>} : memref<4x64x32xbf16, #tpu.memory_space<vmem>>, vector<1x64x32xbf16>,
      %168 = vector.extract_strided_slice %147 {offsets = [0, 192], sizes = [64, 32], strides = [1, 1]} : vector<64x256xbf16> to vector<64x32xbf16>
      %c2_98 = arith.constant 2 : index
      %c0_99 = arith.constant 0 : index
      %c0_100 = arith.constant 0 : index
      %169 = vector.load %arg20[%c2_98, %c0_99, %c0_100] : memref<4x64x32xbf16, #tpu.memory_space<vmem>>, vector<1x64x32xbf16>
      %170 = vector.shape_cast %169 : vector<1x64x32xbf16> to vector<64x32xbf16>
      %171 = vector.shape_cast %168 : vector<64x32xbf16> to vector<1x64x32xbf16>
      tpu.vector_store %arg20[%c2_98, %c0_99, %c0_100], %171 {strides = array<i32>} : memref<4x64x32xbf16, #tpu.memory_space<vmem>>, vector<1x64x32xbf16>,
      %172 = vector.extract_strided_slice %147 {offsets = [0, 96], sizes = [64, 32], strides = [1, 1]} : vector<64x256xbf16> to vector<64x32xbf16>
      %c3_101 = arith.constant 3 : index
      %c0_102 = arith.constant 0 : index
      %c0_103 = arith.constant 0 : index
      %173 = vector.load %arg19[%c3_101, %c0_102, %c0_103] : memref<4x64x32xbf16, #tpu.memory_space<vmem>>, vector<1x64x32xbf16>
      %174 = vector.shape_cast %173 : vector<1x64x32xbf16> to vector<64x32xbf16>
      %175 = vector.shape_cast %172 : vector<64x32xbf16> to vector<1x64x32xbf16>
      tpu.vector_store %arg19[%c3_101, %c0_102, %c0_103], %175 {strides = array<i32>} : memref<4x64x32xbf16, #tpu.memory_space<vmem>>, vector<1x64x32xbf16>,
      %176 = vector.extract_strided_slice %147 {offsets = [0, 224], sizes = [64, 32], strides = [1, 1]} : vector<64x256xbf16> to vector<64x32xbf16>
      %c3_104 = arith.constant 3 : index
      %c0_105 = arith.constant 0 : index
      %c0_106 = arith.constant 0 : index
      %177 = vector.load %arg20[%c3_104, %c0_105, %c0_106] : memref<4x64x32xbf16, #tpu.memory_space<vmem>>, vector<1x64x32xbf16>
      %178 = vector.shape_cast %177 : vector<1x64x32xbf16> to vector<64x32xbf16>
      %179 = vector.shape_cast %176 : vector<64x32xbf16> to vector<1x64x32xbf16>
      tpu.vector_store %arg20[%c3_104, %c0_105, %c0_106], %179 {strides = array<i32>} : memref<4x64x32xbf16, #tpu.memory_space<vmem>>, vector<1x64x32xbf16>,
    } else {
    }
    %c0 = arith.constant 0 : index
    %c0_1 = arith.constant 0 : index
    %c0_2 = arith.constant 0 : index
    %3 = vector.load %arg2[%c0, %c0_1, %c0_2] : memref<1x32x128xf32, #tpu.memory_space<vmem>>, vector<1x32x128xf32>
    %4 = vector.shape_cast %3 : vector<1x32x128xf32> to vector<32x128xf32>
    %5 = arith.truncf %4 : vector<32x128xf32> to vector<32x128xbf16>
    %c0_3 = arith.constant 0 : index
    %c0_4 = arith.constant 0 : index
    %6 = vector.load %arg4[%c0_3, %c0_4] : memref<128x128xbf16, #tpu.memory_space<vmem>>, vector<128x128xbf16>
    %cst = arith.constant dense<0.000000e+00> : vector<32x128xf32>
    %7 = tpu.matmul %5, %6, %cst {dimension_numbers = #tpu.dot_dimension_numbers<[1], [0], [0], [1], [0, 0, 1, 1], [], []>} : vector<32x128xbf16>, vector<128x128xbf16>, vector<32x128xf32> -> vector<32x128xf32>
    %c0_5 = arith.constant 0 : index
    %c0_6 = arith.constant 0 : index
    %8 = vector.load %arg5[%c0_5, %c0_6] : memref<1x128xf32, #tpu.memory_space<vmem>>, vector<1x128xf32>
    %9 = vector.broadcast %8 : vector<1x128xf32> to vector<32x128xf32>
    %10 = arith.addf %7, %9 : vector<32x128xf32>
    %cst_7 = arith.constant 0.176776692 : f32
    %11 = vector.broadcast %cst_7 : f32 to vector<32x128xf32>
    %12 = arith.mulf %10, %11 : vector<32x128xf32>
    %13 = arith.truncf %12 : vector<32x128xf32> to vector<32x128xbf16>
    %14 = vector.extract_strided_slice %13 {offsets = [0, 0], sizes = [32, 32], strides = [1, 1]} : vector<32x128xbf16> to vector<32x32xbf16>
    %c0_8 = arith.constant 0 : index
    %c0_9 = arith.constant 0 : index
    %c0_10 = arith.constant 0 : index
    %15 = vector.load %arg21[%c0_8, %c0_9, %c0_10] : memref<4x32x32xbf16, #tpu.memory_space<vmem>>, vector<1x32x32xbf16>
    %16 = vector.shape_cast %15 : vector<1x32x32xbf16> to vector<32x32xbf16>
    %17 = vector.shape_cast %14 : vector<32x32xbf16> to vector<1x32x32xbf16>
    tpu.vector_store %arg21[%c0_8, %c0_9, %c0_10], %17 {strides = array<i32>} : memref<4x32x32xbf16, #tpu.memory_space<vmem>>, vector<1x32x32xbf16>,
    %18 = vector.extract_strided_slice %13 {offsets = [0, 32], sizes = [32, 32], strides = [1, 1]} : vector<32x128xbf16> to vector<32x32xbf16>
    %c1 = arith.constant 1 : index
    %c0_11 = arith.constant 0 : index
    %c0_12 = arith.constant 0 : index
    %19 = vector.load %arg21[%c1, %c0_11, %c0_12] : memref<4x32x32xbf16, #tpu.memory_space<vmem>>, vector<1x32x32xbf16>
    %20 = vector.shape_cast %19 : vector<1x32x32xbf16> to vector<32x32xbf16>
    %21 = vector.shape_cast %18 : vector<32x32xbf16> to vector<1x32x32xbf16>
    tpu.vector_store %arg21[%c1, %c0_11, %c0_12], %21 {strides = array<i32>} : memref<4x32x32xbf16, #tpu.memory_space<vmem>>, vector<1x32x32xbf16>,
    %22 = vector.extract_strided_slice %13 {offsets = [0, 64], sizes = [32, 32], strides = [1, 1]} : vector<32x128xbf16> to vector<32x32xbf16>
    %c2 = arith.constant 2 : index
    %c0_13 = arith.constant 0 : index
    %c0_14 = arith.constant 0 : index
    %23 = vector.load %arg21[%c2, %c0_13, %c0_14] : memref<4x32x32xbf16, #tpu.memory_space<vmem>>, vector<1x32x32xbf16>
    %24 = vector.shape_cast %23 : vector<1x32x32xbf16> to vector<32x32xbf16>
    %25 = vector.shape_cast %22 : vector<32x32xbf16> to vector<1x32x32xbf16>
    tpu.vector_store %arg21[%c2, %c0_13, %c0_14], %25 {strides = array<i32>} : memref<4x32x32xbf16, #tpu.memory_space<vmem>>, vector<1x32x32xbf16>,
    %26 = vector.extract_strided_slice %13 {offsets = [0, 96], sizes = [32, 32], strides = [1, 1]} : vector<32x128xbf16> to vector<32x32xbf16>
    %c3 = arith.constant 3 : index
    %c0_15 = arith.constant 0 : index
    %c0_16 = arith.constant 0 : index
    %27 = vector.load %arg21[%c3, %c0_15, %c0_16] : memref<4x32x32xbf16, #tpu.memory_space<vmem>>, vector<1x32x32xbf16>
    %28 = vector.shape_cast %27 : vector<1x32x32xbf16> to vector<32x32xbf16>
    %29 = vector.shape_cast %26 : vector<32x32xbf16> to vector<1x32x32xbf16>
    tpu.vector_store %arg21[%c3, %c0_15, %c0_16], %29 {strides = array<i32>} : memref<4x32x32xbf16, #tpu.memory_space<vmem>>, vector<1x32x32xbf16>,
    %c0_17 = arith.constant 0 : index
    %c0_18 = arith.constant 0 : index
    %c0_19 = arith.constant 0 : index
    %30 = vector.load %arg21[%c0_17, %c0_18, %c0_19] : memref<4x32x32xbf16, #tpu.memory_space<vmem>>, vector<4x32x32xbf16>
    %c0_20 = arith.constant 0 : index
    %c0_21 = arith.constant 0 : index
    %c0_22 = arith.constant 0 : index
    %31 = vector.load %arg19[%c0_20, %c0_21, %c0_22] : memref<4x64x32xbf16, #tpu.memory_space<vmem>>, vector<4x64x32xbf16>
    "tpu.trace_start"() <{level = 10 : i32, message = "nqd,nkd->nqk"}> : () -> ()
    %cst_23 = arith.constant dense<0.000000e+00> : vector<4x32x64xf32>
    %32 = tpu.matmul %30, %31, %cst_23 {dimension_numbers = #tpu.dot_dimension_numbers<[2], [2], [1], [1], [0, 0, 0, 1, 1, 1], [0], [0]>} : vector<4x32x32xbf16>, vector<4x64x32xbf16>, vector<4x32x64xf32> -> vector<4x32x64xf32>
    "tpu.trace_stop"() : () -> ()
    %cst_24 = arith.constant dense<0xFF800000> : vector<4x32xf32>
    %33 = vector.multi_reduction <maximumf>, %32, %cst_24 [2] : vector<4x32x64xf32> to vector<4x32xf32>
    %34 = vector.shape_cast %33 : vector<4x32xf32> to vector<4x32x1xf32>
    %35 = vector.broadcast %34 : vector<4x32x1xf32> to vector<4x32x64xf32>
    %36 = arith.subf %32, %35 : vector<4x32x64xf32>
    %37 = math.exp %36 : vector<4x32x64xf32>
    %cst_25 = arith.constant dense<0.000000e+00> : vector<4x32xf32>
    %38 = vector.multi_reduction <add>, %37, %cst_25 [2] : vector<4x32x64xf32> to vector<4x32xf32>
    %39 = vector.shape_cast %38 : vector<4x32xf32> to vector<4x32x1xf32>
    %40 = tpu.reciprocal %39 {approx = true} : vector<4x32x1xf32> -> vector<4x32x1xf32>
    %41 = arith.mulf %39, %40 : vector<4x32x1xf32>
    %cst_26 = arith.constant 2.000000e+00 : f32
    %42 = vector.broadcast %cst_26 : f32 to vector<4x32x1xf32>
    %43 = arith.subf %42, %41 : vector<4x32x1xf32>
    %44 = arith.mulf %40, %43 : vector<4x32x1xf32>
    %45 = vector.broadcast %44 : vector<4x32x1xf32> to vector<4x32x64xf32>
    %46 = arith.mulf %37, %45 : vector<4x32x64xf32>
    %47 = arith.truncf %46 : vector<4x32x64xf32> to vector<4x32x64xbf16>
    %c0_27 = arith.constant 0 : index
    %c0_28 = arith.constant 0 : index
    %c0_29 = arith.constant 0 : index
    %48 = vector.load %arg20[%c0_27, %c0_28, %c0_29] : memref<4x64x32xbf16, #tpu.memory_space<vmem>>, vector<4x64x32xbf16>
    "tpu.trace_start"() <{level = 10 : i32, message = "nqk,nkd->nqd"}> : () -> ()
    %cst_30 = arith.constant dense<0.000000e+00> : vector<4x32x32xf32>
    %49 = tpu.matmul %47, %48, %cst_30 {dimension_numbers = #tpu.dot_dimension_numbers<[2], [1], [1], [2], [0, 0, 0, 1, 1, 2], [0], [0]>} : vector<4x32x64xbf16>, vector<4x64x32xbf16>, vector<4x32x32xf32> -> vector<4x32x32xf32>
    "tpu.trace_stop"() : () -> ()
    %50 = vector.extract_strided_slice %49 {offsets = [0, 0, 0], sizes = [1, 32, 32], strides = [1, 1, 1]} : vector<4x32x32xf32> to vector<1x32x32xf32>
    %51 = vector.shape_cast %50 : vector<1x32x32xf32> to vector<32x32xf32>
    %52 = arith.truncf %51 : vector<32x32xf32> to vector<32x32xbf16>
    %c0_31 = arith.constant 0 : index
    %c0_32 = arith.constant 0 : index
    %53 = vector.load %arg22[%c0_31, %c0_32] : memref<32x128xbf16, #tpu.memory_space<vmem>>, vector<32x32xbf16>
    tpu.vector_store %arg22[%c0_31, %c0_32], %52 {strides = array<i32>} : memref<32x128xbf16, #tpu.memory_space<vmem>>, vector<32x32xbf16>,
    %54 = vector.extract_strided_slice %49 {offsets = [1, 0, 0], sizes = [1, 32, 32], strides = [1, 1, 1]} : vector<4x32x32xf32> to vector<1x32x32xf32>
    %55 = vector.shape_cast %54 : vector<1x32x32xf32> to vector<32x32xf32>
    %56 = arith.truncf %55 : vector<32x32xf32> to vector<32x32xbf16>
    %c0_33 = arith.constant 0 : index
    %c32 = arith.constant 32 : index
    %57 = vector.load %arg22[%c0_33, %c32] : memref<32x128xbf16, #tpu.memory_space<vmem>>, vector<32x32xbf16>
    tpu.vector_store %arg22[%c0_33, %c32], %56 {strides = array<i32>} : memref<32x128xbf16, #tpu.memory_space<vmem>>, vector<32x32xbf16>,
    %58 = vector.extract_strided_slice %49 {offsets = [2, 0, 0], sizes = [1, 32, 32], strides = [1, 1, 1]} : vector<4x32x32xf32> to vector<1x32x32xf32>
    %59 = vector.shape_cast %58 : vector<1x32x32xf32> to vector<32x32xf32>
    %60 = arith.truncf %59 : vector<32x32xf32> to vector<32x32xbf16>
    %c0_34 = arith.constant 0 : index
    %c64 = arith.constant 64 : index
    %61 = vector.load %arg22[%c0_34, %c64] : memref<32x128xbf16, #tpu.memory_space<vmem>>, vector<32x32xbf16>
    tpu.vector_store %arg22[%c0_34, %c64], %60 {strides = array<i32>} : memref<32x128xbf16, #tpu.memory_space<vmem>>, vector<32x32xbf16>,
    %62 = vector.extract_strided_slice %49 {offsets = [3, 0, 0], sizes = [1, 32, 32], strides = [1, 1, 1]} : vector<4x32x32xf32> to vector<1x32x32xf32>
    %63 = vector.shape_cast %62 : vector<1x32x32xf32> to vector<32x32xf32>
    %64 = arith.truncf %63 : vector<32x32xf32> to vector<32x32xbf16>
    %c0_35 = arith.constant 0 : index
    %c96 = arith.constant 96 : index
    %65 = vector.load %arg22[%c0_35, %c96] : memref<32x128xbf16, #tpu.memory_space<vmem>>, vector<32x32xbf16>
    tpu.vector_store %arg22[%c0_35, %c96], %64 {strides = array<i32>} : memref<32x128xbf16, #tpu.memory_space<vmem>>, vector<32x32xbf16>,
    %c0_36 = arith.constant 0 : index
    %c0_37 = arith.constant 0 : index
    %66 = vector.load %arg22[%c0_36, %c0_37] : memref<32x128xbf16, #tpu.memory_space<vmem>>, vector<32x128xbf16>
    %c0_38 = arith.constant 0 : index
    %c0_39 = arith.constant 0 : index
    %67 = vector.load %arg8[%c0_38, %c0_39] : memref<128x128xbf16, #tpu.memory_space<vmem>>, vector<128x128xbf16>
    %cst_40 = arith.constant dense<0.000000e+00> : vector<32x128xf32>
    %68 = tpu.matmul %66, %67, %cst_40 {dimension_numbers = #tpu.dot_dimension_numbers<[1], [0], [0], [1], [0, 0, 1, 1], [], []>} : vector<32x128xbf16>, vector<128x128xbf16>, vector<32x128xf32> -> vector<32x128xf32>
    %c0_41 = arith.constant 0 : index
    %c0_42 = arith.constant 0 : index
    %69 = vector.load %arg9[%c0_41, %c0_42] : memref<1x128xf32, #tpu.memory_space<vmem>>, vector<1x128xf32>
    %70 = vector.broadcast %69 : vector<1x128xf32> to vector<32x128xf32>
    %71 = arith.addf %68, %70 : vector<32x128xf32>
    %72 = arith.addf %4, %71 : vector<32x128xf32>
    %cst_43 = arith.constant dense<0.000000e+00> : vector<32xf32>
    %73 = vector.multi_reduction <add>, %72, %cst_43 [1] : vector<32x128xf32> to vector<32xf32>
    %74 = vector.shape_cast %73 : vector<32xf32> to vector<32x1xf32>
    %cst_44 = arith.constant 1.280000e+02 : f32
    %75 = vector.broadcast %cst_44 : f32 to vector<32x1xf32>
    %76 = arith.divf %74, %75 : vector<32x1xf32>
    %77 = vector.broadcast %76 : vector<32x1xf32> to vector<32x128xf32>
    %78 = arith.subf %72, %77 : vector<32x128xf32>
    %79 = arith.mulf %78, %78 : vector<32x128xf32>
    %cst_45 = arith.constant dense<0.000000e+00> : vector<32xf32>
    %80 = vector.multi_reduction <add>, %79, %cst_45 [1] : vector<32x128xf32> to vector<32xf32>
    %81 = vector.shape_cast %80 : vector<32xf32> to vector<32x1xf32>
    %cst_46 = arith.constant 1.280000e+02 : f32
    %82 = vector.broadcast %cst_46 : f32 to vector<32x1xf32>
    %83 = arith.divf %81, %82 : vector<32x1xf32>
    %84 = vector.broadcast %76 : vector<32x1xf32> to vector<32x128xf32>
    %85 = arith.subf %72, %84 : vector<32x128xf32>
    %cst_47 = arith.constant 9.99999974E-6 : f32
    %86 = vector.broadcast %cst_47 : f32 to vector<32x1xf32>
    %87 = arith.addf %83, %86 : vector<32x1xf32>
    %88 = math.rsqrt %87 : vector<32x1xf32>
    %89 = vector.broadcast %88 : vector<32x1xf32> to vector<32x128xf32>
    %90 = arith.mulf %85, %89 : vector<32x128xf32>
    %c0_48 = arith.constant 0 : index
    %c0_49 = arith.constant 0 : index
    %91 = vector.load %arg10[%c0_48, %c0_49] : memref<1x128xf32, #tpu.memory_space<vmem>>, vector<1x128xf32>
    %92 = vector.broadcast %91 : vector<1x128xf32> to vector<32x128xf32>
    %93 = arith.mulf %90, %92 : vector<32x128xf32>
    %c0_50 = arith.constant 0 : index
    %c0_51 = arith.constant 0 : index
    %94 = vector.load %arg11[%c0_50, %c0_51] : memref<1x128xf32, #tpu.memory_space<vmem>>, vector<1x128xf32>
    %95 = vector.broadcast %94 : vector<1x128xf32> to vector<32x128xf32>
    %96 = arith.addf %93, %95 : vector<32x128xf32>
    %97 = arith.truncf %96 : vector<32x128xf32> to vector<32x128xbf16>
    %c0_52 = arith.constant 0 : index
    %c0_53 = arith.constant 0 : index
    %98 = vector.load %arg12[%c0_52, %c0_53] : memref<128x512xbf16, #tpu.memory_space<vmem>>, vector<128x512xbf16>
    %cst_54 = arith.constant dense<0.000000e+00> : vector<32x512xf32>
    %99 = tpu.matmul %97, %98, %cst_54 {dimension_numbers = #tpu.dot_dimension_numbers<[1], [0], [0], [1], [0, 0, 1, 1], [], []>} : vector<32x128xbf16>, vector<128x512xbf16>, vector<32x512xf32> -> vector<32x512xf32>
    %c0_55 = arith.constant 0 : index
    %c0_56 = arith.constant 0 : index
    %100 = vector.load %arg13[%c0_55, %c0_56] : memref<1x512xf32, #tpu.memory_space<vmem>>, vector<1x512xf32>
    %101 = vector.broadcast %100 : vector<1x512xf32> to vector<32x512xf32>
    %102 = arith.addf %99, %101 : vector<32x512xf32>
    %cst_57 = arith.constant 0.000000e+00 : f32
    %103 = vector.broadcast %cst_57 : f32 to vector<32x512xf32>
    %104 = arith.maximumf %102, %103 : vector<32x512xf32>
    %105 = arith.truncf %104 : vector<32x512xf32> to vector<32x512xbf16>
    %c0_58 = arith.constant 0 : index
    %c0_59 = arith.constant 0 : index
    %106 = vector.load %arg14[%c0_58, %c0_59] : memref<512x128xbf16, #tpu.memory_space<vmem>>, vector<512x128xbf16>
    %cst_60 = arith.constant dense<0.000000e+00> : vector<32x128xf32>
    %107 = tpu.matmul %105, %106, %cst_60 {dimension_numbers = #tpu.dot_dimension_numbers<[1], [0], [0], [1], [0, 0, 1, 1], [], []>} : vector<32x512xbf16>, vector<512x128xbf16>, vector<32x128xf32> -> vector<32x128xf32>
    %c0_61 = arith.constant 0 : index
    %c0_62 = arith.constant 0 : index
    %108 = vector.load %arg15[%c0_61, %c0_62] : memref<1x128xf32, #tpu.memory_space<vmem>>, vector<1x128xf32>
    %109 = vector.broadcast %108 : vector<1x128xf32> to vector<32x128xf32>
    %110 = arith.addf %107, %109 : vector<32x128xf32>
    %111 = arith.addf %96, %110 : vector<32x128xf32>
    %cst_63 = arith.constant dense<0.000000e+00> : vector<32xf32>
    %112 = vector.multi_reduction <add>, %111, %cst_63 [1] : vector<32x128xf32> to vector<32xf32>
    %113 = vector.shape_cast %112 : vector<32xf32> to vector<32x1xf32>
    %cst_64 = arith.constant 1.280000e+02 : f32
    %114 = vector.broadcast %cst_64 : f32 to vector<32x1xf32>
    %115 = arith.divf %113, %114 : vector<32x1xf32>
    %116 = vector.broadcast %115 : vector<32x1xf32> to vector<32x128xf32>
    %117 = arith.subf %111, %116 : vector<32x128xf32>
    %118 = arith.mulf %117, %117 : vector<32x128xf32>
    %cst_65 = arith.constant dense<0.000000e+00> : vector<32xf32>
    %119 = vector.multi_reduction <add>, %118, %cst_65 [1] : vector<32x128xf32> to vector<32xf32>
    %120 = vector.shape_cast %119 : vector<32xf32> to vector<32x1xf32>
    %cst_66 = arith.constant 1.280000e+02 : f32
    %121 = vector.broadcast %cst_66 : f32 to vector<32x1xf32>
    %122 = arith.divf %120, %121 : vector<32x1xf32>
    %123 = vector.broadcast %115 : vector<32x1xf32> to vector<32x128xf32>
    %124 = arith.subf %111, %123 : vector<32x128xf32>
    %cst_67 = arith.constant 9.99999974E-6 : f32
    %125 = vector.broadcast %cst_67 : f32 to vector<32x1xf32>
    %126 = arith.addf %122, %125 : vector<32x1xf32>
    %127 = math.rsqrt %126 : vector<32x1xf32>
    %128 = vector.broadcast %127 : vector<32x1xf32> to vector<32x128xf32>
    %129 = arith.mulf %124, %128 : vector<32x128xf32>
    %c0_68 = arith.constant 0 : index
    %c0_69 = arith.constant 0 : index
    %130 = vector.load %arg16[%c0_68, %c0_69] : memref<1x128xf32, #tpu.memory_space<vmem>>, vector<1x128xf32>
    %131 = vector.broadcast %130 : vector<1x128xf32> to vector<32x128xf32>
    %132 = arith.mulf %129, %131 : vector<32x128xf32>
    %c0_70 = arith.constant 0 : index
    %c0_71 = arith.constant 0 : index
    %133 = vector.load %arg17[%c0_70, %c0_71] : memref<1x128xf32, #tpu.memory_space<vmem>>, vector<1x128xf32>
    %134 = vector.broadcast %133 : vector<1x128xf32> to vector<32x128xf32>
    %135 = arith.addf %132, %134 : vector<32x128xf32>
    %c0_72 = arith.constant 0 : index
    %c0_73 = arith.constant 0 : index
    %c0_74 = arith.constant 0 : index
    %136 = vector.load %arg18[%c0_72, %c0_73, %c0_74] : memref<1x32x128xf32, #tpu.memory_space<vmem>>, vector<1x32x128xf32>
    %137 = vector.shape_cast %136 : vector<1x32x128xf32> to vector<32x128xf32>
    %138 = vector.shape_cast %135 : vector<32x128xf32> to vector<1x32x128xf32>
    tpu.vector_store %arg18[%c0_72, %c0_73, %c0_74], %138 {strides = array<i32>} : memref<1x32x128xf32, #tpu.memory_space<vmem>>, vector<1x32x128xf32>,
    return
  }
  func.func @transform_0(%arg0: i32, %arg1: i32) -> (i32, i32, i32) {
    %c0_i32 = arith.constant 0 : i32
    %c0_i32_0 = arith.constant 0 : i32
    return %arg0, %arg1, %c0_i32 : i32, i32, i32
  }
  func.func @transform_1(%arg0: i32, %arg1: i32) -> (i32, i32, i32) {
    %c0_i32 = arith.constant 0 : i32
    %c0_i32_0 = arith.constant 0 : i32
    %c0_i32_1 = arith.constant 0 : i32
    return %arg0, %c0_i32, %c0_i32_0 : i32, i32, i32
  }
  func.func @transform_2(%arg0: i32, %arg1: i32) -> (i32, i32) {
    %c0_i32 = arith.constant 0 : i32
    %c0_i32_0 = arith.constant 0 : i32
    %c0_i32_1 = arith.constant 0 : i32
    return %c0_i32, %c0_i32_0 : i32, i32
  }
  func.func @transform_3(%arg0: i32, %arg1: i32) -> (i32, i32) {
    %c0_i32 = arith.constant 0 : i32
    %c0_i32_0 = arith.constant 0 : i32
    %c0_i32_1 = arith.constant 0 : i32
    return %c0_i32, %c0_i32_0 : i32, i32
  }
  func.func @transform_4(%arg0: i32, %arg1: i32) -> (i32, i32) {
    %c0_i32 = arith.constant 0 : i32
    %c0_i32_0 = arith.constant 0 : i32
    %c0_i32_1 = arith.constant 0 : i32
    return %c0_i32, %c0_i32_0 : i32, i32
  }
  func.func @transform_5(%arg0: i32, %arg1: i32) -> (i32, i32) {
    %c0_i32 = arith.constant 0 : i32
    %c0_i32_0 = arith.constant 0 : i32
    %c0_i32_1 = arith.constant 0 : i32
    return %c0_i32, %c0_i32_0 : i32, i32
  }
  func.func @transform_6(%arg0: i32, %arg1: i32) -> (i32, i32) {
    %c0_i32 = arith.constant 0 : i32
    %c0_i32_0 = arith.constant 0 : i32
    %c0_i32_1 = arith.constant 0 : i32
    return %c0_i32, %c0_i32_0 : i32, i32
  }
  func.func @transform_7(%arg0: i32, %arg1: i32) -> (i32, i32) {
    %c0_i32 = arith.constant 0 : i32
    %c0_i32_0 = arith.constant 0 : i32
    %c0_i32_1 = arith.constant 0 : i32
    return %c0_i32, %c0_i32_0 : i32, i32
  }
  func.func @transform_8(%arg0: i32, %arg1: i32) -> (i32, i32) {
    %c0_i32 = arith.constant 0 : i32
    %c0_i32_0 = arith.constant 0 : i32
    %c0_i32_1 = arith.constant 0 : i32
    return %c0_i32, %c0_i32_0 : i32, i32
  }
  func.func @transform_9(%arg0: i32, %arg1: i32) -> (i32, i32) {
    %c0_i32 = arith.constant 0 : i32
    %c0_i32_0 = arith.constant 0 : i32
    %c0_i32_1 = arith.constant 0 : i32
    return %c0_i32, %c0_i32_0 : i32, i32
  }
  func.func @transform_10(%arg0: i32, %arg1: i32) -> (i32, i32) {
    %c0_i32 = arith.constant 0 : i32
    %c0_i32_0 = arith.constant 0 : i32
    %c0_i32_1 = arith.constant 0 : i32
    return %c0_i32, %c0_i32_0 : i32, i32
  }
  func.func @transform_11(%arg0: i32, %arg1: i32) -> (i32, i32) {
    %c0_i32 = arith.constant 0 : i32
    %c0_i32_0 = arith.constant 0 : i32
    %c0_i32_1 = arith.constant 0 : i32
    return %c0_i32, %c0_i32_0 : i32, i32
  }
  func.func @transform_12(%arg0: i32, %arg1: i32) -> (i32, i32) {
    %c0_i32 = arith.constant 0 : i32
    %c0_i32_0 = arith.constant 0 : i32
    %c0_i32_1 = arith.constant 0 : i32
    return %c0_i32, %c0_i32_0 : i32, i32
  }
  func.func @transform_13(%arg0: i32, %arg1: i32) -> (i32, i32) {
    %c0_i32 = arith.constant 0 : i32
    %c0_i32_0 = arith.constant 0 : i32
    %c0_i32_1 = arith.constant 0 : i32
    return %c0_i32, %c0_i32_0 : i32, i32
  }
  func.func @transform_14(%arg0: i32, %arg1: i32) -> (i32, i32) {
    %c0_i32 = arith.constant 0 : i32
    %c0_i32_0 = arith.constant 0 : i32
    %c0_i32_1 = arith.constant 0 : i32
    return %c0_i32, %c0_i32_0 : i32, i32
  }
  func.func @transform_15(%arg0: i32, %arg1: i32) -> (i32, i32) {
    %c0_i32 = arith.constant 0 : i32
    %c0_i32_0 = arith.constant 0 : i32
    %c0_i32_1 = arith.constant 0 : i32
    return %c0_i32, %c0_i32_0 : i32, i32
  }
  func.func @transform_16(%arg0: i32, %arg1: i32) -> (i32, i32, i32) {
    %c0_i32 = arith.constant 0 : i32
    %c0_i32_0 = arith.constant 0 : i32
    return %arg0, %arg1, %c0_i32 : i32, i32, i32
  }
}

</mosaic_0001>

<llo_original>
// kernel: tpu_custom_call.1
$region0: #{tpu_custom_call.1}
  #allocation0 [shape = 'u32[]', space=smem, size = 0x4, offset = 0x4, fixed_abs, tag = 'smem constant byte address 0x4 - core index']
  #allocation1 [shape = 'u32[144,128]{1,0:T(1,128)}', space=vmem, size = 0x12000, scoped, tag = 'internal scratch']
  #allocation2 [shape = 'bf16[4,64,32]{2,1,0:T(16,128)(2,1)}', space=vmem, size = 0x10000, scoped, tag = 'scratch operand']
  #allocation3 [shape = 'bf16[4,64,32]{2,1,0:T(16,128)(2,1)}', space=vmem, size = 0x10000, scoped, tag = 'scratch operand']
  #allocation4 [shape = 'bf16[4,32,32]{2,1,0:T(16,128)(2,1)}', space=vmem, size = 0x8000, scoped, tag = 'scratch operand']
  #allocation5 [shape = 'bf16[32,128]{1,0:T(16,128)(2,1)}', space=vmem, size = 0x2000, scoped, tag = 'scratch operand']
  %s0 = inlined_call_operand.hbm [shape: f32[2,64,128], index: 0, kind: input, shape index: {}]
  %s1 = inlined_call_operand.hbm [shape: f32[2,64,128], index: 1, kind: input, shape index: {}]
  %s2 = inlined_call_operand.hbm [shape: bf16[128,128], index: 2, kind: input, shape index: {}]
  %s3 = inlined_call_operand.vmem [shape: f32[1,128], index: 3, kind: input, shape index: {}]
  %s4 = inlined_call_operand.hbm [shape: bf16[128,256], index: 4, kind: input, shape index: {}]
  %s5 = inlined_call_operand.vmem [shape: f32[1,256], index: 5, kind: input, shape index: {}]
  %s6 = inlined_call_operand.hbm [shape: bf16[128,128], index: 6, kind: input, shape index: {}]
  %s7 = inlined_call_operand.vmem [shape: f32[1,128], index: 7, kind: input, shape index: {}]
  %s8 = inlined_call_operand.vmem [shape: f32[1,128], index: 8, kind: input, shape index: {}]
  %s9 = inlined_call_operand.vmem [shape: f32[1,128], index: 9, kind: input, shape index: {}]
  %s10 = inlined_call_operand.hbm [shape: bf16[128,512], index: 10, kind: input, shape index: {}]
  %s11 = inlined_call_operand.vmem [shape: f32[1,512], index: 11, kind: input, shape index: {}]
  %s12 = inlined_call_operand.hbm [shape: bf16[512,128], index: 12, kind: input, shape index: {}]
  %s13 = inlined_call_operand.vmem [shape: f32[1,128], index: 13, kind: input, shape index: {}]
  %s14 = inlined_call_operand.vmem [shape: f32[1,128], index: 14, kind: input, shape index: {}]
  %s15 = inlined_call_operand.vmem [shape: f32[1,128], index: 15, kind: input, shape index: {}]
  %s16 = inlined_call_operand.hbm [shape: f32[2,64,128], index: 16, kind: output, shape index: {}]
  %s17 = sld [smem:[#allocation0]]
  $region129: #{tpu_custom_call.1} parent=0
    _
  %s19 = ssub.s32 1, %s17
  %s20 = scalar_select 0, %s19, %s17
  $region1: #{tpu_custom_call.1} parent=0
    #allocation6 [shape = 'u8[32768]{0}', space=vmem, size = 0x8000, scoped, tag = 'input window, operand 0']
    #allocation7 [shape = 's32[2]{0}', space=sflag, size = 0x8, scoped, tag = 'scoped memory for tpu_custom_call.1']
    #allocation8 [shape = 's32[2]{0}', space=sflag, size = 0x8, scoped, tag = 'scoped memory for tpu_custom_call.1']
    #allocation9 [shape = 'u8[65536]{0}', space=vmem, size = 0x10000, scoped, tag = 'input window, operand 1']
    #allocation10 [shape = 's32[2]{0}', space=sflag, size = 0x8, scoped, tag = 'scoped memory for tpu_custom_call.1']
    #allocation11 [shape = 'u8[32768]{0}', space=vmem, size = 0x8000, scoped, tag = 'input window, operand 2, single buffered']
    #allocation12 [shape = 'u8[65536]{0}', space=vmem, size = 0x10000, scoped, tag = 'input window, operand 4, single buffered']
    #allocation13 [shape = 's32[1]{0}', space=sflag, size = 0x4, scoped, tag = 'scoped memory for tpu_custom_call.1']
    #allocation14 [shape = 'u8[32768]{0}', space=vmem, size = 0x8000, scoped, tag = 'input window, operand 6, single buffered']
    #allocation15 [shape = 'u8[131072]{0}', space=vmem, size = 0x20000, scoped, tag = 'input window, operand 10, single buffered']
    #allocation16 [shape = 's32[1]{0}', space=sflag, size = 0x4, scoped, tag = 'scoped memory for tpu_custom_call.1']
    #allocation17 [shape = 'u8[131072]{0}', space=vmem, size = 0x20000, scoped, tag = 'input window, operand 12, single buffered']
    #allocation18 [shape = 'u8[32768]{0}', space=vmem, size = 0x8000, scoped, tag = 'output window, operand 0']
    %21 = vsyncpa [#allocation7], 0
    %s22 = scalar_lea.sflag [#allocation7], 1
    %23 = vsyncpa %s22, 0
    %24 = vsyncpa [#allocation10], 0
    %s25 = scalar_lea.sflag [#allocation10], 1
    %26 = vsyncpa %s25, 0
    %27 = vsyncpa [#allocation13], 0
    %28 = vsyncpa [#allocation16], 0
    %29 = vsyncpa [#allocation8], 0
    %s30 = scalar_lea.sflag [#allocation8], 1
    %31 = vsyncpa %s30, 0
    loop: start=0, step=1, limit=6
    $region2: #{tpu_custom_call.1} parent=1 // loop_pre_header
      _
    $region3: #{tpu_custom_call.1} parent=1 // loop_header
      %s33 = sphi 0, %s37
      %p34 = scmp.ge.s32.totalorder %s33, 6
      %s40 = sphi 0, %s52
      %s41 = sphi 0, %s48
      %s42 = sphi 0, %s40
      %s43 = sphi 0, %s41
      %s44 = sphi 0, %s42
      %s45 = sphi 0, %s43
      %s57 = sphi 0, %s59
      %s60 = sphi 0, %s57
      %s61 = sphi 0, %s60
      %s77 = sphi 0, %s61
      %s83 = sphi 0, %s85
      %s86 = sphi 0, %s83
      %s87 = sphi 0, %s86
      %s103 = sphi 0, %s87
      %s107 = sphi 0, %s107
      %s109 = sphi 0, %s107
      %s110 = sphi 0, %s109
      %s124 = sphi 0, %s110
      %s128 = sphi 0, %s128
      %s130 = sphi 0, %s128
      %s131 = sphi 0, %s130
      %s145 = sphi 0, %s131
      %s149 = sphi 0, %s149
      %s151 = sphi 0, %s149
      %s152 = sphi 0, %s151
      %s166 = sphi 0, %s152
      %s170 = sphi 0, %s170
      %s172 = sphi 0, %s170
      %s173 = sphi 0, %s172
      %s187 = sphi 0, %s173
      %s191 = sphi 0, %s191
      %s193 = sphi 0, %s191
      %s194 = sphi 0, %s193
      %s208 = sphi 0, %s194
      %s212 = sphi 0, %s212
      %s214 = sphi 0, %s212
      %s215 = sphi 0, %s214
      %s229 = sphi 0, %s215
      %s233 = sphi 0, %s233
      %s235 = sphi 0, %s233
      %s236 = sphi 0, %s235
      %s250 = sphi 0, %s236
      %s254 = sphi 0, %s254
      %s256 = sphi 0, %s254
      %s257 = sphi 0, %s256
      %s271 = sphi 0, %s257
      %s275 = sphi 0, %s275
      %s277 = sphi 0, %s275
      %s278 = sphi 0, %s277
      %s292 = sphi 0, %s278
      %s296 = sphi 0, %s296
      %s298 = sphi 0, %s296
      %s299 = sphi 0, %s298
      %s313 = sphi 0, %s299
      %s317 = sphi 0, %s317
      %s319 = sphi 0, %s317
      %s320 = sphi 0, %s319
      %s334 = sphi 0, %s320
      %s338 = sphi 0, %s338
      %s340 = sphi 0, %s338
      %s341 = sphi 0, %s340
      %s355 = sphi 0, %s341
      %s359 = sphi 0, %s359
      %s361 = sphi 0, %s359
      %s362 = sphi 0, %s361
      %s376 = sphi 0, %s362
      %s380 = sphi 0, %s380
      %s382 = sphi 0, %s380
      %s383 = sphi 0, %s382
      %s397 = sphi 0, %s383
      %s405 = sphi 0, %s407
      %s408 = sphi 0, %s405
      %s409 = sphi 0, %s408
      %s425 = sphi 0, %s409
    $region4: #{tpu_custom_call.1} parent=1 // loop_header_branch
      %36 = sbr.rel (%p34) target = $region8
    $region5: #{tpu_custom_call.1} parent=1 // loop_body
      %s38 = ssub.s32 %s33, 1
      %s39 = ssub.s32 %s33, 2
      %s46 = sadd.s32 1, %s41
      %p47 = scmp.ge.s32.totalorder %s46, 2
      %s48 = scalar_select %p47, 0, %s46
      %s49 = sadd.s32 1, %s40
      %s50 = scalar_select %p47, %s49, %s40
      %p51 = scmp.ge.s32.totalorder %s50, 2
      %s52 = scalar_select %p51, 0, %s50
      %s53 = ssub.s32 %s40, %s52
      %s54 = ssub.s32 %s41, %s48
      %s55 = sor.u32 %s53, %s54
      %p56 = scmp.eq.s32.totalorder %s55, 0
      %s58 = sadd.s32 %s57, 1
      %s59 = scalar_select %p56, %s57, %s58
      %p62 = pneg %p56
      %p63 = scmp.eq.s32.totalorder %s33, 3
      %p64 = por %p62, %p63
      %p65 = scmp.ne.s32.totalorder %s57, %s60
      %p66 = scmp.eq.s32.totalorder %s33, 0
      %p67 = por %p65, %p66
      %p68 = scmp.ne.s32.totalorder %s57, %s60
      %p69 = scmp.eq.s32.totalorder %s38, 3
      %p70 = por %p68, %p69
      %p71 = scmp.ne.s32.totalorder %s60, %s61
      %p72 = scmp.eq.s32.totalorder %s38, 0
      %p73 = por %p71, %p72
      %p74 = scmp.ne.s32.totalorder %s60, %s61
      %p75 = scmp.eq.s32.totalorder %s39, 3
      %p76 = por %p74, %p75
      %p78 = scmp.ne.s32.totalorder %s61, %s77
      %p79 = scmp.eq.s32.totalorder %s39, 0
      %p80 = por %p78, %p79
      %s81 = ssub.s32 %s40, %s52
      %p82 = scmp.eq.s32.totalorder %s81, 0
      %s84 = sadd.s32 %s83, 1
      %s85 = scalar_select %p82, %s83, %s84
      %p88 = pneg %p82
      %p89 = scmp.eq.s32.totalorder %s33, 3
      %p90 = por %p88, %p89
      %p91 = scmp.ne.s32.totalorder %s83, %s86
      %p92 = scmp.eq.s32.totalorder %s33, 0
      %p93 = por %p91, %p92
      %p94 = scmp.ne.s32.totalorder %s83, %s86
      %p95 = scmp.eq.s32.totalorder %s38, 3
      %p96 = por %p94, %p95
      %p97 = scmp.ne.s32.totalorder %s86, %s87
      %p98 = scmp.eq.s32.totalorder %s38, 0
      %p99 = por %p97, %p98
      %p100 = scmp.ne.s32.totalorder %s86, %s87
      %p101 = scmp.eq.s32.totalorder %s39, 3
      %p102 = por %p100, %p101
      %p104 = scmp.ne.s32.totalorder %s87, %s103
      %p105 = scmp.eq.s32.totalorder %s39, 0
      %p106 = por %p104, %p105
      %s108 = sadd.s32 %s107, 1
      %p111 = scmp.eq.s32.totalorder %s33, 3
      %p112 = scmp.ne.s32.totalorder %s107, %s109
      %p113 = scmp.eq.s32.totalorder %s33, 0
      %p114 = por %p112, %p113
      %p115 = scmp.ne.s32.totalorder %s107, %s109
      %p116 = scmp.eq.s32.totalorder %s38, 3
      %p117 = por %p115, %p116
      %p118 = scmp.ne.s32.totalorder %s109, %s110
      %p119 = scmp.eq.s32.totalorder %s38, 0
      %p120 = por %p118, %p119
      %p121 = scmp.ne.s32.totalorder %s109, %s110
      %p122 = scmp.eq.s32.totalorder %s39, 3
      %p123 = por %p121, %p122
      %p125 = scmp.ne.s32.totalorder %s110, %s124
      %p126 = scmp.eq.s32.totalorder %s39, 0
      %p127 = por %p125, %p126
      %s129 = sadd.s32 %s128, 1
      %p132 = scmp.eq.s32.totalorder %s33, 3
      %p133 = scmp.ne.s32.totalorder %s128, %s130
      %p134 = scmp.eq.s32.totalorder %s33, 0
      %p135 = por %p133, %p134
      %p136 = scmp.ne.s32.totalorder %s128, %s130
      %p137 = scmp.eq.s32.totalorder %s38, 3
      %p138 = por %p136, %p137
      %p139 = scmp.ne.s32.totalorder %s130, %s131
      %p140 = scmp.eq.s32.totalorder %s38, 0
      %p141 = por %p139, %p140
      %p142 = scmp.ne.s32.totalorder %s130, %s131
      %p143 = scmp.eq.s32.totalorder %s39, 3
      %p144 = por %p142, %p143
      %p146 = scmp.ne.s32.totalorder %s131, %s145
      %p147 = scmp.eq.s32.totalorder %s39, 0
      %p148 = por %p146, %p147
      %s150 = sadd.s32 %s149, 1
      %p153 = scmp.eq.s32.totalorder %s33, 3
      %p154 = scmp.ne.s32.totalorder %s149, %s151
      %p155 = scmp.eq.s32.totalorder %s33, 0
      %p156 = por %p154, %p155
      %p157 = scmp.ne.s32.totalorder %s149, %s151
      %p158 = scmp.eq.s32.totalorder %s38, 3
      %p159 = por %p157, %p158
      %p160 = scmp.ne.s32.totalorder %s151, %s152
      %p161 = scmp.eq.s32.totalorder %s38, 0
      %p162 = por %p160, %p161
      %p163 = scmp.ne.s32.totalorder %s151, %s152
      %p164 = scmp.eq.s32.totalorder %s39, 3
      %p165 = por %p163, %p164
      %p167 = scmp.ne.s32.totalorder %s152, %s166
      %p168 = scmp.eq.s32.totalorder %s39, 0
      %p169 = por %p167, %p168
      %s171 = sadd.s32 %s170, 1
      %p174 = scmp.eq.s32.totalorder %s33, 3
      %p175 = scmp.ne.s32.totalorder %s170, %s172
      %p176 = scmp.eq.s32.totalorder %s33, 0
      %p177 = por %p175, %p176
      %p178 = scmp.ne.s32.totalorder %s170, %s172
      %p179 = scmp.eq.s32.totalorder %s38, 3
      %p180 = por %p178, %p179
      %p181 = scmp.ne.s32.totalorder %s172, %s173
      %p182 = scmp.eq.s32.totalorder %s38, 0
      %p183 = por %p181, %p182
      %p184 = scmp.ne.s32.totalorder %s172, %s173
      %p185 = scmp.eq.s32.totalorder %s39, 3
      %p186 = por %p184, %p185
      %p188 = scmp.ne.s32.totalorder %s173, %s187
      %p189 = scmp.eq.s32.totalorder %s39, 0
      %p190 = por %p188, %p189
      %s192 = sadd.s32 %s191, 1
      %p195 = scmp.eq.s32.totalorder %s33, 3
      %p196 = scmp.ne.s32.totalorder %s191, %s193
      %p197 = scmp.eq.s32.totalorder %s33, 0
      %p198 = por %p196, %p197
      %p199 = scmp.ne.s32.totalorder %s191, %s193
      %p200 = scmp.eq.s32.totalorder %s38, 3
      %p201 = por %p199, %p200
      %p202 = scmp.ne.s32.totalorder %s193, %s194
      %p203 = scmp.eq.s32.totalorder %s38, 0
      %p204 = por %p202, %p203
      %p205 = scmp.ne.s32.totalorder %s193, %s194
      %p206 = scmp.eq.s32.totalorder %s39, 3
      %p207 = por %p205, %p206
      %p209 = scmp.ne.s32.totalorder %s194, %s208
      %p210 = scmp.eq.s32.totalorder %s39, 0
      %p211 = por %p209, %p210
      %s213 = sadd.s32 %s212, 1
      %p216 = scmp.eq.s32.totalorder %s33, 3
      %p217 = scmp.ne.s32.totalorder %s212, %s214
      %p218 = scmp.eq.s32.totalorder %s33, 0
      %p219 = por %p217, %p218
      %p220 = scmp.ne.s32.totalorder %s212, %s214
      %p221 = scmp.eq.s32.totalorder %s38, 3
      %p222 = por %p220, %p221
      %p223 = scmp.ne.s32.totalorder %s214, %s215
      %p224 = scmp.eq.s32.totalorder %s38, 0
      %p225 = por %p223, %p224
      %p226 = scmp.ne.s32.totalorder %s214, %s215
      %p227 = scmp.eq.s32.totalorder %s39, 3
      %p228 = por %p226, %p227
      %p230 = scmp.ne.s32.totalorder %s215, %s229
      %p231 = scmp.eq.s32.totalorder %s39, 0
      %p232 = por %p230, %p231
      %s234 = sadd.s32 %s233, 1
      %p237 = scmp.eq.s32.totalorder %s33, 3
      %p238 = scmp.ne.s32.totalorder %s233, %s235
      %p239 = scmp.eq.s32.totalorder %s33, 0
      %p240 = por %p238, %p239
      %p241 = scmp.ne.s32.totalorder %s233, %s235
      %p242 = scmp.eq.s32.totalorder %s38, 3
      %p243 = por %p241, %p242
      %p244 = scmp.ne.s32.totalorder %s235, %s236
      %p245 = scmp.eq.s32.totalorder %s38, 0
      %p246 = por %p244, %p245
      %p247 = scmp.ne.s32.totalorder %s235, %s236
      %p248 = scmp.eq.s32.totalorder %s39, 3
      %p249 = por %p247, %p248
      %p251 = scmp.ne.s32.totalorder %s236, %s250
      %p252 = scmp.eq.s32.totalorder %s39, 0
      %p253 = por %p251, %p252
      %s255 = sadd.s32 %s254, 1
      %p258 = scmp.eq.s32.totalorder %s33, 3
      %p259 = scmp.ne.s32.totalorder %s254, %s256
      %p260 = scmp.eq.s32.totalorder %s33, 0
      %p261 = por %p259, %p260
      %p262 = scmp.ne.s32.totalorder %s254, %s256
      %p263 = scmp.eq.s32.totalorder %s38, 3
      %p264 = por %p262, %p263
      %p265 = scmp.ne.s32.totalorder %s256, %s257
      %p266 = scmp.eq.s32.totalorder %s38, 0
      %p267 = por %p265, %p266
      %p268 = scmp.ne.s32.totalorder %s256, %s257
      %p269 = scmp.eq.s32.totalorder %s39, 3
      %p270 = por %p268, %p269
      %p272 = scmp.ne.s32.totalorder %s257, %s271
      %p273 = scmp.eq.s32.totalorder %s39, 0
      %p274 = por %p272, %p273
      %s276 = sadd.s32 %s275, 1
      %p279 = scmp.eq.s32.totalorder %s33, 3
      %p280 = scmp.ne.s32.totalorder %s275, %s277
      %p281 = scmp.eq.s32.totalorder %s33, 0
      %p282 = por %p280, %p281
      %p283 = scmp.ne.s32.totalorder %s275, %s277
      %p284 = scmp.eq.s32.totalorder %s38, 3
      %p285 = por %p283, %p284
      %p286 = scmp.ne.s32.totalorder %s277, %s278
      %p287 = scmp.eq.s32.totalorder %s38, 0
      %p288 = por %p286, %p287
      %p289 = scmp.ne.s32.totalorder %s277, %s278
      %p290 = scmp.eq.s32.totalorder %s39, 3
      %p291 = por %p289, %p290
      %p293 = scmp.ne.s32.totalorder %s278, %s292
      %p294 = scmp.eq.s32.totalorder %s39, 0
      %p295 = por %p293, %p294
      %s297 = sadd.s32 %s296, 1
      %p300 = scmp.eq.s32.totalorder %s33, 3
      %p301 = scmp.ne.s32.totalorder %s296, %s298
      %p302 = scmp.eq.s32.totalorder %s33, 0
      %p303 = por %p301, %p302
      %p304 = scmp.ne.s32.totalorder %s296, %s298
      %p305 = scmp.eq.s32.totalorder %s38, 3
      %p306 = por %p304, %p305
      %p307 = scmp.ne.s32.totalorder %s298, %s299
      %p308 = scmp.eq.s32.totalorder %s38, 0
      %p309 = por %p307, %p308
      %p310 = scmp.ne.s32.totalorder %s298, %s299
      %p311 = scmp.eq.s32.totalorder %s39, 3
      %p312 = por %p310, %p311
      %p314 = scmp.ne.s32.totalorder %s299, %s313
      %p315 = scmp.eq.s32.totalorder %s39, 0
      %p316 = por %p314, %p315
      %s318 = sadd.s32 %s317, 1
      %p321 = scmp.eq.s32.totalorder %s33, 3
      %p322 = scmp.ne.s32.totalorder %s317, %s319
      %p323 = scmp.eq.s32.totalorder %s33, 0
      %p324 = por %p322, %p323
      %p325 = scmp.ne.s32.totalorder %s317, %s319
      %p326 = scmp.eq.s32.totalorder %s38, 3
      %p327 = por %p325, %p326
      %p328 = scmp.ne.s32.totalorder %s319, %s320
      %p329 = scmp.eq.s32.totalorder %s38, 0
      %p330 = por %p328, %p329
      %p331 = scmp.ne.s32.totalorder %s319, %s320
      %p332 = scmp.eq.s32.totalorder %s39, 3
      %p333 = por %p331, %p332
      %p335 = scmp.ne.s32.totalorder %s320, %s334
      %p336 = scmp.eq.s32.totalorder %s39, 0
      %p337 = por %p335, %p336
      %s339 = sadd.s32 %s338, 1
      %p342 = scmp.eq.s32.totalorder %s33, 3
      %p343 = scmp.ne.s32.totalorder %s338, %s340
      %p344 = scmp.eq.s32.totalorder %s33, 0
      %p345 = por %p343, %p344
      %p346 = scmp.ne.s32.totalorder %s338, %s340
      %p347 = scmp.eq.s32.totalorder %s38, 3
      %p348 = por %p346, %p347
      %p349 = scmp.ne.s32.totalorder %s340, %s341
      %p350 = scmp.eq.s32.totalorder %s38, 0
      %p351 = por %p349, %p350
      %p352 = scmp.ne.s32.totalorder %s340, %s341
      %p353 = scmp.eq.s32.totalorder %s39, 3
      %p354 = por %p352, %p353
      %p356 = scmp.ne.s32.totalorder %s341, %s355
      %p357 = scmp.eq.s32.totalorder %s39, 0
      %p358 = por %p356, %p357
      %s360 = sadd.s32 %s359, 1
      %p363 = scmp.eq.s32.totalorder %s33, 3
      %p364 = scmp.ne.s32.totalorder %s359, %s361
      %p365 = scmp.eq.s32.totalorder %s33, 0
      %p366 = por %p364, %p365
      %p367 = scmp.ne.s32.totalorder %s359, %s361
      %p368 = scmp.eq.s32.totalorder %s38, 3
      %p369 = por %p367, %p368
      %p370 = scmp.ne.s32.totalorder %s361, %s362
      %p371 = scmp.eq.s32.totalorder %s38, 0
      %p372 = por %p370, %p371
      %p373 = scmp.ne.s32.totalorder %s361, %s362
      %p374 = scmp.eq.s32.totalorder %s39, 3
      %p375 = por %p373, %p374
      %p377 = scmp.ne.s32.totalorder %s362, %s376
      %p378 = scmp.eq.s32.totalorder %s39, 0
      %p379 = por %p377, %p378
      %s381 = sadd.s32 %s380, 1
      %p384 = scmp.eq.s32.totalorder %s33, 3
      %p385 = scmp.ne.s32.totalorder %s380, %s382
      %p386 = scmp.eq.s32.totalorder %s33, 0
      %p387 = por %p385, %p386
      %p388 = scmp.ne.s32.totalorder %s380, %s382
      %p389 = scmp.eq.s32.totalorder %s38, 3
      %p390 = por %p388, %p389
      %p391 = scmp.ne.s32.totalorder %s382, %s383
      %p392 = scmp.eq.s32.totalorder %s38, 0
      %p393 = por %p391, %p392
      %p394 = scmp.ne.s32.totalorder %s382, %s383
      %p395 = scmp.eq.s32.totalorder %s39, 3
      %p396 = por %p394, %p395
      %p398 = scmp.ne.s32.totalorder %s383, %s397
      %p399 = scmp.eq.s32.totalorder %s39, 0
      %p400 = por %p398, %p399
      %s401 = ssub.s32 %s40, %s52
      %s402 = ssub.s32 %s41, %s48
      %s403 = sor.u32 %s401, %s402
      %p404 = scmp.eq.s32.totalorder %s403, 0
      %s406 = sadd.s32 %s405, 1
      %s407 = scalar_select %p404, %s405, %s406
      %p410 = pneg %p404
      %p411 = scmp.eq.s32.totalorder %s33, 3
      %p412 = por %p410, %p411
      %p413 = scmp.ne.s32.totalorder %s405, %s408
      %p414 = scmp.eq.s32.totalorder %s33, 0
      %p415 = por %p413, %p414
      %p416 = scmp.ne.s32.totalorder %s405, %s408
      %p417 = scmp.eq.s32.totalorder %s38, 3
      %p418 = por %p416, %p417
      %p419 = scmp.ne.s32.totalorder %s408, %s409
      %p420 = scmp.eq.s32.totalorder %s38, 0
      %p421 = por %p419, %p420
      %p422 = scmp.ne.s32.totalorder %s408, %s409
      %p423 = scmp.eq.s32.totalorder %s39, 3
      %p424 = por %p422, %p423
      %p426 = scmp.ne.s32.totalorder %s409, %s425
      %p427 = scmp.eq.s32.totalorder %s39, 0
      %p428 = por %p426, %p427
      %p429 = scmp.le.s32.totalorder 1, %s33
      %p430 = scmp.lt.s32.totalorder %s33, 5
      %p431 = pnand %p429, %p430
      %p432 = pneg %p431
      // Predicated region
      $region9: #{tpu_custom_call.1} parent=5 // pred_check
        _
      $region10: #{tpu_custom_call.1} parent=5 // pred_check_branch
        %434 = sbr.rel (%p431) target = $region12
      $region11: #{tpu_custom_call.1} parent=5 // pred_region
        %s435 = ssub.s32 %s33, 1
        // Predicated region
        $region13: #{tpu_custom_call.1} parent=11 // pred_check
          %p436 = pneg %p120
        $region14: #{tpu_custom_call.1} parent=11 // pred_check_branch
          %438 = sbr.rel (%p436) target = $region16
        $region15: #{tpu_custom_call.1} parent=11 // pred_region
          %s440 = ssub.s32 1024, 1024
          %441 = vsyncadd [#allocation10], %s440
          %s442 = sshll.u32 [#allocation11], 4
          %s443 = int_to_ptr.vmem [resolvable:$true] %s442
          %448 = dma.hbm_to_vmem [thread:$0]  %s2, 1024, %s443, [#allocation10], 64, 64, 4
        $region16: #{tpu_custom_call.1} parent=11 // pred_fallthru
          _
        // Predicated region
        $region17: #{tpu_custom_call.1} parent=11 // pred_check
          %p449 = pneg %p141
        $region18: #{tpu_custom_call.1} parent=11 // pred_check_branch
          %451 = sbr.rel (%p449) target = $region20
        $region19: #{tpu_custom_call.1} parent=11 // pred_region
          _
        $region20: #{tpu_custom_call.1} parent=11 // pred_fallthru
          _
        // Predicated region
        $region21: #{tpu_custom_call.1} parent=11 // pred_check
          %p452 = pneg %p162
        $region22: #{tpu_custom_call.1} parent=11 // pred_check_branch
          %454 = sbr.rel (%p452) target = $region24
        $region23: #{tpu_custom_call.1} parent=11 // pred_region
          %s456 = ssub.s32 2048, 2048
          %457 = vsyncadd [#allocation13], %s456
          %s458 = sshll.u32 [#allocation12], 4
          %s459 = int_to_ptr.vmem [resolvable:$true] %s458
          %464 = dma.hbm_to_vmem [thread:$0]  %s4, 2048, %s459, [#allocation13], 128, 128, 8
        $region24: #{tpu_custom_call.1} parent=11 // pred_fallthru
          _
        // Predicated region
        $region25: #{tpu_custom_call.1} parent=11 // pred_check
          %p465 = pneg %p183
        $region26: #{tpu_custom_call.1} parent=11 // pred_check_branch
          %467 = sbr.rel (%p465) target = $region28
        $region27: #{tpu_custom_call.1} parent=11 // pred_region
          _
        $region28: #{tpu_custom_call.1} parent=11 // pred_fallthru
          _
        // Predicated region
        $region29: #{tpu_custom_call.1} parent=11 // pred_check
          %p468 = pneg %p204
        $region30: #{tpu_custom_call.1} parent=11 // pred_check_branch
          %470 = sbr.rel (%p468) target = $region32
        $region31: #{tpu_custom_call.1} parent=11 // pred_region
          %s472 = ssub.s32 1024, 1024
          %473 = vsyncadd [#allocation13], %s472
          %s474 = sshll.u32 [#allocation14], 4
          %s475 = int_to_ptr.vmem [resolvable:$true] %s474
          %480 = dma.hbm_to_vmem [thread:$0]  %s6, 1024, %s475, [#allocation13], 64, 64, 4
        $region32: #{tpu_custom_call.1} parent=11 // pred_fallthru
          _
        // Predicated region
        $region33: #{tpu_custom_call.1} parent=11 // pred_check
          %p481 = pneg %p225
        $region34: #{tpu_custom_call.1} parent=11 // pred_check_branch
          %483 = sbr.rel (%p481) target = $region36
        $region35: #{tpu_custom_call.1} parent=11 // pred_region
          _
        $region36: #{tpu_custom_call.1} parent=11 // pred_fallthru
          _
        // Predicated region
        $region37: #{tpu_custom_call.1} parent=11 // pred_check
          %p484 = pneg %p246
        $region38: #{tpu_custom_call.1} parent=11 // pred_check_branch
          %486 = sbr.rel (%p484) target = $region40
        $region39: #{tpu_custom_call.1} parent=11 // pred_region
          _
        $region40: #{tpu_custom_call.1} parent=11 // pred_fallthru
          _
        // Predicated region
        $region41: #{tpu_custom_call.1} parent=11 // pred_check
          %p487 = pneg %p267
        $region42: #{tpu_custom_call.1} parent=11 // pred_check_branch
          %489 = sbr.rel (%p487) target = $region44
        $region43: #{tpu_custom_call.1} parent=11 // pred_region
          _
        $region44: #{tpu_custom_call.1} parent=11 // pred_fallthru
          _
        // Predicated region
        $region45: #{tpu_custom_call.1} parent=11 // pred_check
          %p490 = pneg %p288
        $region46: #{tpu_custom_call.1} parent=11 // pred_check_branch
          %492 = sbr.rel (%p490) target = $region48
        $region47: #{tpu_custom_call.1} parent=11 // pred_region
          %s494 = ssub.s32 4096, 4096
          %495 = vsyncadd [#allocation16], %s494
          %s496 = sshll.u32 [#allocation15], 4
          %s497 = int_to_ptr.vmem [resolvable:$true] %s496
          %502 = dma.hbm_to_vmem [thread:$0]  %s10, 4096, %s497, [#allocation16], 256, 256, 16
        $region48: #{tpu_custom_call.1} parent=11 // pred_fallthru
          _
        // Predicated region
        $region49: #{tpu_custom_call.1} parent=11 // pred_check
          %p503 = pneg %p309
        $region50: #{tpu_custom_call.1} parent=11 // pred_check_branch
          %505 = sbr.rel (%p503) target = $region52
        $region51: #{tpu_custom_call.1} parent=11 // pred_region
          _
        $region52: #{tpu_custom_call.1} parent=11 // pred_fallthru
          _
        // Predicated region
        $region53: #{tpu_custom_call.1} parent=11 // pred_check
          %p506 = pneg %p330
        $region54: #{tpu_custom_call.1} parent=11 // pred_check_branch
          %508 = sbr.rel (%p506) target = $region56
        $region55: #{tpu_custom_call.1} parent=11 // pred_region
          %s510 = ssub.s32 4096, 4096
          %511 = vsyncadd [#allocation16], %s510
          %s512 = sshll.u32 [#allocation17], 4
          %s513 = int_to_ptr.vmem [resolvable:$true] %s512
          %518 = dma.hbm_to_vmem [thread:$0]  %s12, 4096, %s513, [#allocation16], 64, 64, 4
        $region56: #{tpu_custom_call.1} parent=11 // pred_fallthru
          _
        // Predicated region
        $region57: #{tpu_custom_call.1} parent=11 // pred_check
          %p519 = pneg %p351
        $region58: #{tpu_custom_call.1} parent=11 // pred_check_branch
          %521 = sbr.rel (%p519) target = $region60
        $region59: #{tpu_custom_call.1} parent=11 // pred_region
          _
        $region60: #{tpu_custom_call.1} parent=11 // pred_fallthru
          _
        // Predicated region
        $region61: #{tpu_custom_call.1} parent=11 // pred_check
          %p522 = pneg %p372
        $region62: #{tpu_custom_call.1} parent=11 // pred_check_branch
          %524 = sbr.rel (%p522) target = $region64
        $region63: #{tpu_custom_call.1} parent=11 // pred_region
          _
        $region64: #{tpu_custom_call.1} parent=11 // pred_fallthru
          _
        // Predicated region
        $region65: #{tpu_custom_call.1} parent=11 // pred_check
          %p525 = pneg %p393
        $region66: #{tpu_custom_call.1} parent=11 // pred_check_branch
          %527 = sbr.rel (%p525) target = $region68
        $region67: #{tpu_custom_call.1} parent=11 // pred_region
          _
        $region68: #{tpu_custom_call.1} parent=11 // pred_fallthru
          _
      $region12: #{tpu_custom_call.1} parent=5 // pred_fallthru
        _
      %p528 = scmp.lt.s32.totalorder %s33, 4
      // Predicated region
      $region69: #{tpu_custom_call.1} parent=5 // pred_check
        %p529 = pneg %p528
      $region70: #{tpu_custom_call.1} parent=5 // pred_check_branch
        %531 = sbr.rel (%p529) target = $region72
      $region71: #{tpu_custom_call.1} parent=5 // pred_region
        // Predicated region
        $region73: #{tpu_custom_call.1} parent=71 // pred_check
          %p532 = pneg %p67
        $region74: #{tpu_custom_call.1} parent=71 // pred_check_branch
          %534 = sbr.rel (%p532) target = $region76
        $region75: #{tpu_custom_call.1} parent=71 // pred_region
          %s535 = sand.u32 %s57, 1
          %s536 = scalar_lea.sflag [#allocation7], %s535
          %s537 = sand.u32 %s57, 1
          %s538 = smul.addr %s537, 32
          %s539 = scalar_lea.vmem [#allocation6], %s538
          %s540 = smul.u32 4, %s41
          %s542 = ssub.s32 512, 512
          %543 = vsyncadd %s536, %s542
          %s544 = smul.addr %s40, 8
          %s545 = sadd.s32 %s540, %s544
          %s546 = smul.addr %s545, 128
          %s547 = scalar_lea.hbm %s0, %s546
          %s548 = sshll.u32 %s539, 4
          %s549 = int_to_ptr.vmem [resolvable:$true] %s548
          %554 = dma.hbm_to_vmem [thread:$0]  %s547, 512, %s549, %s536, 128, 128, 8
        $region76: #{tpu_custom_call.1} parent=71 // pred_fallthru
          _
        // Predicated region
        $region77: #{tpu_custom_call.1} parent=71 // pred_check
          %p555 = pneg %p93
        $region78: #{tpu_custom_call.1} parent=71 // pred_check_branch
          %557 = sbr.rel (%p555) target = $region80
        $region79: #{tpu_custom_call.1} parent=71 // pred_region
          %s558 = sand.u32 %s33, 1
          %s559 = scalar_lea.sflag [#allocation10], %s558
          %s560 = sand.u32 %s83, 1
          %s561 = smul.addr %s560, 64
          %s562 = scalar_lea.vmem [#allocation9], %s561
          %s564 = ssub.s32 1024, 1024
          %565 = vsyncadd %s559, %s564
          %s566 = smul.addr %s40, 8
          %s567 = smul.addr %s566, 128
          %s568 = scalar_lea.hbm %s1, %s567
          %s569 = sshll.u32 %s562, 4
          %s570 = int_to_ptr.vmem [resolvable:$true] %s569
          %575 = dma.hbm_to_vmem [thread:$0]  %s568, 1024, %s570, %s559, 128, 128, 8
        $region80: #{tpu_custom_call.1} parent=71 // pred_fallthru
          _
      $region72: #{tpu_custom_call.1} parent=5 // pred_fallthru
        _
      %p576 = scmp.le.s32.totalorder 1, %s33
      %p577 = scmp.lt.s32.totalorder %s33, 5
      %p578 = pnand %p576, %p577
      %p579 = pneg %p578
      // Predicated region
      $region81: #{tpu_custom_call.1} parent=5 // pred_check
        _
      $region82: #{tpu_custom_call.1} parent=5 // pred_check_branch
        %581 = sbr.rel (%p578) target = $region84
      $region83: #{tpu_custom_call.1} parent=5 // pred_region
        %s582 = ssub.s32 %s33, 1
        %s583 = sand.u32 %s60, 1
        %s584 = scalar_lea.sflag [#allocation7], %s583
        %s585 = sand.u32 %s60, 1
        %s586 = smul.addr %s585, 32
        %s587 = scalar_lea.vmem [#allocation6], %s586
        // Predicated region
        $region85: #{tpu_custom_call.1} parent=83 // pred_check
          %p588 = pneg %p73
        $region86: #{tpu_custom_call.1} parent=83 // pred_check_branch
          %590 = sbr.rel (%p588) target = $region88
        $region87: #{tpu_custom_call.1} parent=83 // pred_region
          %591 = dma.done %s584, 512
        $region88: #{tpu_custom_call.1} parent=83 // pred_fallthru
          _
        %s592 = sand.u32 %s38, 1
        %s593 = scalar_lea.sflag [#allocation10], %s592
        %s594 = sand.u32 %s86, 1
        %s595 = smul.addr %s594, 64
        %s596 = scalar_lea.vmem [#allocation9], %s595
        // Predicated region
        $region89: #{tpu_custom_call.1} parent=83 // pred_check
          %p597 = pneg %p99
        $region90: #{tpu_custom_call.1} parent=83 // pred_check_branch
          %599 = sbr.rel (%p597) target = $region92
        $region91: #{tpu_custom_call.1} parent=83 // pred_region
          %600 = dma.done %s593, 1024
        $region92: #{tpu_custom_call.1} parent=83 // pred_fallthru
          _
        // Predicated region
        $region93: #{tpu_custom_call.1} parent=83 // pred_check
          %p601 = pneg %p120
        $region94: #{tpu_custom_call.1} parent=83 // pred_check_branch
          %603 = sbr.rel (%p601) target = $region96
        $region95: #{tpu_custom_call.1} parent=83 // pred_region
          %604 = dma.done [#allocation10], 1024
        $region96: #{tpu_custom_call.1} parent=83 // pred_fallthru
          _
        // Predicated region
        $region97: #{tpu_custom_call.1} parent=83 // pred_check
          %p605 = pneg %p162
        $region98: #{tpu_custom_call.1} parent=83 // pred_check_branch
          %607 = sbr.rel (%p605) target = $region100
        $region99: #{tpu_custom_call.1} parent=83 // pred_region
          %608 = dma.done [#allocation13], 2048
        $region100: #{tpu_custom_call.1} parent=83 // pred_fallthru
          _
        // Predicated region
        $region101: #{tpu_custom_call.1} parent=83 // pred_check
          %p609 = pneg %p204
        $region102: #{tpu_custom_call.1} parent=83 // pred_check_branch
          %611 = sbr.rel (%p609) target = $region104
        $region103: #{tpu_custom_call.1} parent=83 // pred_region
          %612 = dma.done [#allocation13], 1024
        $region104: #{tpu_custom_call.1} parent=83 // pred_fallthru
          _
        // Predicated region
        $region105: #{tpu_custom_call.1} parent=83 // pred_check
          %p613 = pneg %p288
        $region106: #{tpu_custom_call.1} parent=83 // pred_check_branch
          %615 = sbr.rel (%p613) target = $region108
        $region107: #{tpu_custom_call.1} parent=83 // pred_region
          %616 = dma.done [#allocation16], 4096
        $region108: #{tpu_custom_call.1} parent=83 // pred_fallthru
          _
        // Predicated region
        $region109: #{tpu_custom_call.1} parent=83 // pred_check
          %p617 = pneg %p330
        $region110: #{tpu_custom_call.1} parent=83 // pred_check_branch
          %619 = sbr.rel (%p617) target = $region112
        $region111: #{tpu_custom_call.1} parent=83 // pred_region
          %620 = dma.done [#allocation16], 4096
        $region112: #{tpu_custom_call.1} parent=83 // pred_fallthru
          _
        %s621 = sand.u32 %s60, 1
        %s622 = scalar_lea.sflag [#allocation7], %s621
        %s623 = sand.u32 %s60, 1
        %s624 = smul.addr %s623, 32
        %s625 = scalar_lea.vmem [#allocation6], %s624
        %p626 = pneg %p73
        %p627 = pneg %p70
        %s628 = sand.u32 %s38, 1
        %s629 = scalar_lea.sflag [#allocation10], %s628
        %s630 = sand.u32 %s86, 1
        %s631 = smul.addr %s630, 64
        %s632 = scalar_lea.vmem [#allocation9], %s631
        %p633 = pneg %p99
        %p634 = pneg %p96
        %p635 = pneg %p120
        %p636 = pneg %p117
        %p637 = pneg %p141
        %p638 = pneg %p138
        %p639 = pneg %p162
        %p640 = pneg %p159
        %p641 = pneg %p183
        %p642 = pneg %p180
        %p643 = pneg %p204
        %p644 = pneg %p201
        %p645 = pneg %p225
        %p646 = pneg %p222
        %p647 = pneg %p246
        %p648 = pneg %p243
        %p649 = pneg %p267
        %p650 = pneg %p264
        %p651 = pneg %p288
        %p652 = pneg %p285
        %p653 = pneg %p309
        %p654 = pneg %p306
        %p655 = pneg %p330
        %p656 = pneg %p327
        %p657 = pneg %p351
        %p658 = pneg %p348
        %p659 = pneg %p372
        %p660 = pneg %p369
        %p661 = pneg %p393
        %p662 = pneg %p390
        %p663 = pneg %p421
        %p664 = pneg %p418
        %s665 = sand.u32 %s408, 1
        %s666 = scalar_lea.sflag [#allocation8], %s665
        %s667 = sand.u32 %s408, 1
        %s668 = smul.addr %s667, 32
        %s669 = scalar_lea.vmem [#allocation18], %s668
        %s670 = smul.u32 4, %s43
        %s671 = smul.u32 4, %s43
        %p673 = scmp.eq.s32.totalorder %s43, 0
        // Predicated region
        $region113: #{tpu_custom_call.1} parent=83 // pred_check
          %p674 = pneg %p673
        $region114: #{tpu_custom_call.1} parent=83 // pred_check_branch
          %676 = sbr.rel (%p674) target = $region116
        $region115: #{tpu_custom_call.1} parent=83 // pred_region
          %v677 = vld [vmem:[%s596] sm:$0xff]
          %v678 = vld [vmem:[%s596 + $0x8] sm:$0xff]
          %v679 = vld [vmem:[%s596 + $0x10] sm:$0xff]
          %v680 = vld [vmem:[%s596 + $0x18] sm:$0xff]
          %v681 = vld [vmem:[%s596 + $0x20] sm:$0xff]
          %v682 = vld [vmem:[%s596 + $0x28] sm:$0xff]
          %v683 = vld [vmem:[%s596 + $0x30] sm:$0xff]
          %v684 = vld [vmem:[%s596 + $0x38] sm:$0xff]
          %v685 = vpack.c.bf16 %v678, %v677
          %v686 = vpack.c.bf16 %v680, %v679
          %v687 = vpack.c.bf16 %v682, %v681
          %v688 = vpack.c.bf16 %v684, %v683
          %v689 = vld [vmem:[#allocation12] sm:$0xff]
          %v690 = vld [vmem:[#allocation12 + $0x8] sm:$0xff]
          %v691 = vld [vmem:[#allocation12 + $0x10] sm:$0xff]
          %v692 = vld [vmem:[#allocation12 + $0x18] sm:$0xff]
          %v693 = vld [vmem:[#allocation12 + $0x20] sm:$0xff]
          %v694 = vld [vmem:[#allocation12 + $0x28] sm:$0xff]
          %v695 = vld [vmem:[#allocation12 + $0x30] sm:$0xff]
          %v696 = vld [vmem:[#allocation12 + $0x38] sm:$0xff]
          %v697 = vld [vmem:[#allocation12 + $0x40] sm:$0xff]
          %v698 = vld [vmem:[#allocation12 + $0x48] sm:$0xff]
          %v699 = vld [vmem:[#allocation12 + $0x50] sm:$0xff]
          %v700 = vld [vmem:[#allocation12 + $0x58] sm:$0xff]
          %v701 = vld [vmem:[#allocation12 + $0x60] sm:$0xff]
          %v702 = vld [vmem:[#allocation12 + $0x68] sm:$0xff]
          %v703 = vld [vmem:[#allocation12 + $0x70] sm:$0xff]
          %v704 = vld [vmem:[#allocation12 + $0x78] sm:$0xff]
          %v705 = vld [vmem:[%s5] sm:$0x3]
          %v707 = vlaneseq
          %v708 = vshrl.u32 %v707, 7
          %v709 = vsub.s32 0, %v708
          %v710 = vrot.slane %v705, %v709
          %v711 = vlaneseq
          %v712 = vshrl.u32 %v711, 7
          %v713 = vsub.s32 1, %v712
          %v714 = vrot.slane %v705, %v713
          %v733 = vunpack.c.l.b16 %v689
          %v734 = vunpack.c.h.b16 %v689
          %v735 = vunpack.c.l.b16 %v690
          %v736 = vunpack.c.h.b16 %v690
          %v737 = vunpack.c.l.b16 %v691
          %v738 = vunpack.c.h.b16 %v691
          %v739 = vunpack.c.l.b16 %v692
          %v740 = vunpack.c.h.b16 %v692
          %v741 = vunpack.c.l.b16 %v693
          %v742 = vunpack.c.h.b16 %v693
          %v743 = vunpack.c.l.b16 %v694
          %v744 = vunpack.c.h.b16 %v694
          %v745 = vunpack.c.l.b16 %v695
          %v746 = vunpack.c.h.b16 %v695
          %v747 = vunpack.c.l.b16 %v696
          %v748 = vunpack.c.h.b16 %v696
          %v749 = vunpack.c.l.b16 %v697
          %v750 = vunpack.c.h.b16 %v697
          %v751 = vunpack.c.l.b16 %v698
          %v752 = vunpack.c.h.b16 %v698
          %v753 = vunpack.c.l.b16 %v699
          %v754 = vunpack.c.h.b16 %v699
          %v755 = vunpack.c.l.b16 %v700
          %v756 = vunpack.c.h.b16 %v700
          %v757 = vunpack.c.l.b16 %v701
          %v758 = vunpack.c.h.b16 %v701
          %v759 = vunpack.c.l.b16 %v702
          %v760 = vunpack.c.h.b16 %v702
          %v761 = vunpack.c.l.b16 %v703
          %v762 = vunpack.c.h.b16 %v703
          %v763 = vunpack.c.l.b16 %v704
          %v764 = vunpack.c.h.b16 %v704
          %v765 = vpack.c.b16 %v735, %v733
          %v766 = vpack.c.b16 %v736, %v734
          %v767 = vpack.c.b16 %v739, %v737
          %v768 = vpack.c.b16 %v740, %v738
          %v769 = vpack.c.b16 %v743, %v741
          %v770 = vpack.c.b16 %v744, %v742
          %v771 = vpack.c.b16 %v747, %v745
          %v772 = vpack.c.b16 %v748, %v746
          %v773 = vpack.c.b16 %v751, %v749
          %v774 = vpack.c.b16 %v752, %v750
          %v775 = vpack.c.b16 %v755, %v753
          %v776 = vpack.c.b16 %v756, %v754
          %v777 = vpack.c.b16 %v759, %v757
          %v778 = vpack.c.b16 %v760, %v758
          %v779 = vpack.c.b16 %v763, %v761
          %v780 = vpack.c.b16 %v764, %v762
          %797 = vmatprep.subr.bf16.mxu0 %v766
          %798 = vmatpush1.bf16.msra.mxu0 %v765
          %799 = vmatprep.subr.bf16.mxu0 %v768
          %800 = vmatpush1.bf16.msra.mxu0 %v767
          %801 = vmatprep.subr.bf16.mxu0 %v770
          %802 = vmatpush1.bf16.msra.mxu0 %v769
          %803 = vmatprep.subr.bf16.mxu0 %v772
          %804 = vmatpush1.bf16.msra.mxu0 %v771
          %805 = vmatprep.subr.bf16.mxu0 %v774
          %806 = vmatpush1.bf16.msra.mxu0 %v773
          %807 = vmatprep.subr.bf16.mxu0 %v776
          %808 = vmatpush1.bf16.msra.mxu0 %v775
          %809 = vmatprep.subr.bf16.mxu0 %v778
          %810 = vmatpush1.bf16.msra.mxu0 %v777
          %811 = vmatprep.subr.bf16.mxu0 %v780
          %812 = vmatpush1.bf16.msra.mxu0 %v779
          %813 = vmatprep.subr.bf16.mxu0 0
          %814 = vmatpush1.bf16.msra.mxu0 0
          %815 = vmatprep.subr.bf16.mxu0 0
          %816 = vmatpush1.bf16.msra.mxu0 0
          %817 = vmatprep.subr.bf16.mxu0 0
          %818 = vmatpush1.bf16.msra.mxu0 0
          %819 = vmatprep.subr.bf16.mxu0 0
          %820 = vmatpush1.bf16.msra.mxu0 0
          %821 = vmatprep.subr.bf16.mxu0 0
          %822 = vmatpush1.bf16.msra.mxu0 0
          %823 = vmatprep.subr.bf16.mxu0 0
          %824 = vmatpush1.bf16.msra.mxu0 0
          %825 = vmatprep.subr.bf16.mxu0 0
          %826 = vmatpush1.bf16.msra.mxu0 0
          %827 = vmatprep.subr.bf16.mxu0 0
          %828 = vmatpush1.bf16.msra.mxu0 0
          %829 = vmatprep.mubr.bf16.mxu0 0
          %830 = vmatmul.mubr.bf16.gmra.mrb[0].mxu0 %v685
          %v831 = vpop.f32.mrb[0].mxu0
          %v832 = vadd.f32 %v710, %v831
          %v833 = vpop.f32.mrb[0].mxu0
          %v834 = vadd.f32 %v714, %v833
          %v835 = vpop.f32.mrb[0].mxu0
          %v836 = vadd.f32 %v710, %v835
          %v837 = vpop.f32.mrb[0].mxu0
          %v838 = vadd.f32 %v714, %v837
          %839 = vmatprep.mubr.bf16.mxu0 0
          %840 = vmatmul.mubr.bf16.gmra.mrb[0].mxu0 %v686
          %v841 = vpop.f32.mrb[0].mxu0
          %v842 = vadd.f32 %v710, %v841
          %v843 = vpop.f32.mrb[0].mxu0
          %v844 = vadd.f32 %v714, %v843
          %v845 = vpop.f32.mrb[0].mxu0
          %v846 = vadd.f32 %v710, %v845
          %v847 = vpop.f32.mrb[0].mxu0
          %v848 = vadd.f32 %v714, %v847
          %849 = vmatprep.mubr.bf16.mxu0 0
          %850 = vmatmul.mubr.bf16.gmra.mrb[0].mxu0 %v687
          %v851 = vpop.f32.mrb[0].mxu0
          %v852 = vadd.f32 %v710, %v851
          %v853 = vpop.f32.mrb[0].mxu0
          %v854 = vadd.f32 %v714, %v853
          %v855 = vpop.f32.mrb[0].mxu0
          %v856 = vadd.f32 %v710, %v855
          %v857 = vpop.f32.mrb[0].mxu0
          %v858 = vadd.f32 %v714, %v857
          %859 = vmatprep.mubr.bf16.mxu0 0
          %860 = vmatmul.mubr.bf16.gmra.mrb[0].mxu0 %v688
          %v861 = vpop.f32.mrb[0].mxu0
          %v862 = vadd.f32 %v710, %v861
          %v863 = vpop.f32.mrb[0].mxu0
          %v864 = vadd.f32 %v714, %v863
          %v865 = vpop.f32.mrb[0].mxu0
          %v866 = vadd.f32 %v710, %v865
          %v867 = vpop.f32.mrb[0].mxu0
          %v868 = vadd.f32 %v714, %v867
          %869 = vdwg.mxu0
          %v870 = vpack.c.bf16 %v836, %v832
          %v871 = vpack.c.bf16 %v838, %v834
          %v872 = vpack.c.bf16 %v846, %v842
          %v873 = vpack.c.bf16 %v848, %v844
          %v874 = vpack.c.bf16 %v856, %v852
          %v875 = vpack.c.bf16 %v858, %v854
          %v876 = vpack.c.bf16 %v866, %v862
          %v877 = vpack.c.bf16 %v868, %v864
          %vm878 = vcmask 261120
          %879 = vst.msk [vmem:[#allocation2] sm:$0xff] %vm878, %v870
          %880 = vst.msk [vmem:[#allocation2 + $0x8] sm:$0xff] %vm878, %v872
          %881 = vst.msk [vmem:[#allocation2 + $0x10] sm:$0xff] %vm878, %v874
          %882 = vst.msk [vmem:[#allocation2 + $0x18] sm:$0xff] %vm878, %v876
          %883 = vst.msk [vmem:[#allocation3] sm:$0xff] %vm878, %v871
          %884 = vst.msk [vmem:[#allocation3 + $0x8] sm:$0xff] %vm878, %v873
          %885 = vst.msk [vmem:[#allocation3 + $0x10] sm:$0xff] %vm878, %v875
          %886 = vst.msk [vmem:[#allocation3 + $0x18] sm:$0xff] %vm878, %v877
          %891 = vrot.lane.b32.xlu0 %v870, 96
          %v892 = vpop.permute.xlu0 %891
          %893 = vrot.lane.b32.xlu0 %v872, 96
          %v894 = vpop.permute.xlu0 %893
          %895 = vrot.lane.b32.xlu0 %v874, 96
          %v896 = vpop.permute.xlu0 %895
          %897 = vrot.lane.b32.xlu0 %v876, 96
          %v898 = vpop.permute.xlu0 %897
          %s903 = scalar_lea.vmem [#allocation2], 32
          %904 = vst.msk [vmem:[%s903] sm:$0xff] %vm878, %v892
          %905 = vst.msk [vmem:[%s903 + $0x8] sm:$0xff] %vm878, %v894
          %906 = vst.msk [vmem:[%s903 + $0x10] sm:$0xff] %vm878, %v896
          %907 = vst.msk [vmem:[%s903 + $0x18] sm:$0xff] %vm878, %v898
          %912 = vrot.lane.b32.xlu0 %v871, 96
          %v913 = vpop.permute.xlu0 %912
          %914 = vrot.lane.b32.xlu0 %v873, 96
          %v915 = vpop.permute.xlu0 %914
          %916 = vrot.lane.b32.xlu0 %v875, 96
          %v917 = vpop.permute.xlu0 %916
          %918 = vrot.lane.b32.xlu0 %v877, 96
          %v919 = vpop.permute.xlu0 %918
          %s924 = scalar_lea.vmem [#allocation3], 32
          %925 = vst.msk [vmem:[%s924] sm:$0xff] %vm878, %v913
          %926 = vst.msk [vmem:[%s924 + $0x8] sm:$0xff] %vm878, %v915
          %927 = vst.msk [vmem:[%s924 + $0x10] sm:$0xff] %vm878, %v917
          %928 = vst.msk [vmem:[%s924 + $0x18] sm:$0xff] %vm878, %v919
          %929 = vrot.lane.b32.xlu0 %v870, 64
          %v930 = vpop.permute.xlu0 %929
          %931 = vrot.lane.b32.xlu0 %v872, 64
          %v932 = vpop.permute.xlu0 %931
          %933 = vrot.lane.b32.xlu0 %v874, 64
          %v934 = vpop.permute.xlu0 %933
          %935 = vrot.lane.b32.xlu0 %v876, 64
          %v936 = vpop.permute.xlu0 %935
          %s941 = scalar_lea.vmem [#allocation2], 64
          %942 = vst.msk [vmem:[%s941] sm:$0xff] %vm878, %v930
          %943 = vst.msk [vmem:[%s941 + $0x8] sm:$0xff] %vm878, %v932
          %944 = vst.msk [vmem:[%s941 + $0x10] sm:$0xff] %vm878, %v934
          %945 = vst.msk [vmem:[%s941 + $0x18] sm:$0xff] %vm878, %v936
          %946 = vrot.lane.b32.xlu0 %v871, 64
          %v947 = vpop.permute.xlu0 %946
          %948 = vrot.lane.b32.xlu0 %v873, 64
          %v949 = vpop.permute.xlu0 %948
          %950 = vrot.lane.b32.xlu0 %v875, 64
          %v951 = vpop.permute.xlu0 %950
          %952 = vrot.lane.b32.xlu0 %v877, 64
          %v953 = vpop.permute.xlu0 %952
          %s958 = scalar_lea.vmem [#allocation3], 64
          %959 = vst.msk [vmem:[%s958] sm:$0xff] %vm878, %v947
          %960 = vst.msk [vmem:[%s958 + $0x8] sm:$0xff] %vm878, %v949
          %961 = vst.msk [vmem:[%s958 + $0x10] sm:$0xff] %vm878, %v951
          %962 = vst.msk [vmem:[%s958 + $0x18] sm:$0xff] %vm878, %v953
          %963 = vrot.lane.b32.xlu0 %v870, 32
          %v964 = vpop.permute.xlu0 %963
          %965 = vrot.lane.b32.xlu0 %v872, 32
          %v966 = vpop.permute.xlu0 %965
          %967 = vrot.lane.b32.xlu0 %v874, 32
          %v968 = vpop.permute.xlu0 %967
          %969 = vrot.lane.b32.xlu0 %v876, 32
          %v970 = vpop.permute.xlu0 %969
          %s975 = scalar_lea.vmem [#allocation2], 96
          %976 = vst.msk [vmem:[%s975] sm:$0xff] %vm878, %v964
          %977 = vst.msk [vmem:[%s975 + $0x8] sm:$0xff] %vm878, %v966
          %978 = vst.msk [vmem:[%s975 + $0x10] sm:$0xff] %vm878, %v968
          %979 = vst.msk [vmem:[%s975 + $0x18] sm:$0xff] %vm878, %v970
          %980 = vrot.lane.b32.xlu0 %v871, 32
          %v981 = vpop.permute.xlu0 %980
          %982 = vrot.lane.b32.xlu0 %v873, 32
          %v983 = vpop.permute.xlu0 %982
          %984 = vrot.lane.b32.xlu0 %v875, 32
          %v985 = vpop.permute.xlu0 %984
          %986 = vrot.lane.b32.xlu0 %v877, 32
          %v987 = vpop.permute.xlu0 %986
          %s992 = scalar_lea.vmem [#allocation3], 96
          %993 = vst.msk [vmem:[%s992] sm:$0xff] %vm878, %v981
          %994 = vst.msk [vmem:[%s992 + $0x8] sm:$0xff] %vm878, %v983
          %995 = vst.msk [vmem:[%s992 + $0x10] sm:$0xff] %vm878, %v985
          %996 = vst.msk [vmem:[%s992 + $0x18] sm:$0xff] %vm878, %v987
        $region116: #{tpu_custom_call.1} parent=83 // pred_fallthru
          _
        %v997 = vld [vmem:[%s587] sm:$0xff]
        %v998 = vld [vmem:[%s587 + $0x8] sm:$0xff]
        %v999 = vld [vmem:[%s587 + $0x10] sm:$0xff]
        %v1000 = vld [vmem:[%s587 + $0x18] sm:$0xff]
        %v1001 = vpack.c.bf16 %v998, %v997
        %v1002 = vpack.c.bf16 %v1000, %v999
        %v1003 = vld [vmem:[#allocation11] sm:$0xf]
        %v1004 = vld [vmem:[#allocation11 + $0x4] sm:$0xf]
        %v1005 = vld [vmem:[#allocation11 + $0x8] sm:$0xf]
        %v1006 = vld [vmem:[#allocation11 + $0xc] sm:$0xf]
        %v1007 = vld [vmem:[#allocation11 + $0x10] sm:$0xf]
        %v1008 = vld [vmem:[#allocation11 + $0x14] sm:$0xf]
        %v1009 = vld [vmem:[#allocation11 + $0x18] sm:$0xf]
        %v1010 = vld [vmem:[#allocation11 + $0x1c] sm:$0xf]
        %v1011 = vld [vmem:[#allocation11 + $0x20] sm:$0xf]
        %v1012 = vld [vmem:[#allocation11 + $0x24] sm:$0xf]
        %v1013 = vld [vmem:[#allocation11 + $0x28] sm:$0xf]
        %v1014 = vld [vmem:[#allocation11 + $0x2c] sm:$0xf]
        %v1015 = vld [vmem:[#allocation11 + $0x30] sm:$0xf]
        %v1016 = vld [vmem:[#allocation11 + $0x34] sm:$0xf]
        %v1017 = vld [vmem:[#allocation11 + $0x38] sm:$0xf]
        %v1018 = vld [vmem:[#allocation11 + $0x3c] sm:$0xf]
        %v1019 = vld [vmem:[%s3] sm:$0x1]
        %v1021 = vlaneseq
        %v1022 = vshrl.u32 %v1021, 7
        %v1023 = vsub.s32 0, %v1022
        %v1024 = vrot.slane %v1019, %v1023
        %v1042 = vunpack.c.l.b16 %v1003
        %v1043 = vunpack.c.l.b16 %v1004
        %v1044 = vunpack.c.l.b16 %v1005
        %v1045 = vunpack.c.l.b16 %v1006
        %v1046 = vunpack.c.l.b16 %v1007
        %v1047 = vunpack.c.l.b16 %v1008
        %v1048 = vunpack.c.l.b16 %v1009
        %v1049 = vunpack.c.l.b16 %v1010
        %v1050 = vunpack.c.l.b16 %v1011
        %v1051 = vunpack.c.l.b16 %v1012
        %v1052 = vunpack.c.l.b16 %v1013
        %v1053 = vunpack.c.l.b16 %v1014
        %v1054 = vunpack.c.l.b16 %v1015
        %v1055 = vunpack.c.l.b16 %v1016
        %v1056 = vunpack.c.l.b16 %v1017
        %v1057 = vunpack.c.l.b16 %v1018
        %v1058 = vpack.c.b16 %v1043, %v1042
        %v1059 = vpack.c.b16 %v1045, %v1044
        %v1060 = vpack.c.b16 %v1047, %v1046
        %v1061 = vpack.c.b16 %v1049, %v1048
        %v1062 = vpack.c.b16 %v1051, %v1050
        %v1063 = vpack.c.b16 %v1053, %v1052
        %v1064 = vpack.c.b16 %v1055, %v1054
        %v1065 = vpack.c.b16 %v1057, %v1056
        %1074 = vmatprep.subr.bf16.mxu0 0
        %1075 = vmatpush1.bf16.msra.mxu0 %v1058
        %1076 = vmatprep.subr.bf16.mxu0 0
        %1077 = vmatpush1.bf16.msra.mxu0 %v1059
        %1078 = vmatprep.subr.bf16.mxu0 0
        %1079 = vmatpush1.bf16.msra.mxu0 %v1060
        %1080 = vmatprep.subr.bf16.mxu0 0
        %1081 = vmatpush1.bf16.msra.mxu0 %v1061
        %1082 = vmatprep.subr.bf16.mxu0 0
        %1083 = vmatpush1.bf16.msra.mxu0 %v1062
        %1084 = vmatprep.subr.bf16.mxu0 0
        %1085 = vmatpush1.bf16.msra.mxu0 %v1063
        %1086 = vmatprep.subr.bf16.mxu0 0
        %1087 = vmatpush1.bf16.msra.mxu0 %v1064
        %1088 = vmatprep.subr.bf16.mxu0 0
        %1089 = vmatpush1.bf16.msra.mxu0 %v1065
        %1090 = vmatprep.subr.bf16.mxu0 0
        %1091 = vmatpush1.bf16.msra.mxu0 0
        %1092 = vmatprep.subr.bf16.mxu0 0
        %1093 = vmatpush1.bf16.msra.mxu0 0
        %1094 = vmatprep.subr.bf16.mxu0 0
        %1095 = vmatpush1.bf16.msra.mxu0 0
        %1096 = vmatprep.subr.bf16.mxu0 0
        %1097 = vmatpush1.bf16.msra.mxu0 0
        %1098 = vmatprep.subr.bf16.mxu0 0
        %1099 = vmatpush1.bf16.msra.mxu0 0
        %1100 = vmatprep.subr.bf16.mxu0 0
        %1101 = vmatpush1.bf16.msra.mxu0 0
        %1102 = vmatprep.subr.bf16.mxu0 0
        %1103 = vmatpush1.bf16.msra.mxu0 0
        %1104 = vmatprep.subr.bf16.mxu0 0
        %1105 = vmatpush1.bf16.msra.mxu0 0
        %1106 = vmatprep.mubr.bf16.mxu0 0
        %1107 = vmatmul.mubr.bf16.gmra.mrb[0].mxu0 %v1001
        %v1108 = vpop.f32.mrb[0].mxu0
        %v1109 = vadd.f32 %v1024, %v1108
        %v1110 = vpop.f32.mrb[0].mxu0
        %v1111 = vpop.f32.mrb[0].mxu0
        %v1112 = vadd.f32 %v1024, %v1111
        %v1113 = vpop.f32.mrb[0].mxu0
        %1114 = vmatprep.mubr.bf16.mxu0 0
        %1115 = vmatmul.mubr.bf16.gmra.mrb[0].mxu0 %v1002
        %v1116 = vpop.f32.mrb[0].mxu0
        %v1117 = vadd.f32 %v1024, %v1116
        %v1118 = vpop.f32.mrb[0].mxu0
        %v1119 = vpop.f32.mrb[0].mxu0
        %v1120 = vadd.f32 %v1024, %v1119
        %v1121 = vpop.f32.mrb[0].mxu0
        %1122 = vdwg.mxu0
        %v1123 = vmul.f32 %v1109, 0.17677669
        %v1124 = vmul.f32 %v1112, 0.17677669
        %v1125 = vmul.f32 %v1117, 0.17677669
        %v1126 = vmul.f32 %v1120, 0.17677669
        %v1127 = vpack.c.bf16 %v1124, %v1123
        %v1128 = vpack.c.bf16 %v1126, %v1125
        %vm1129 = vcmask 261120
        %1130 = vst.msk [vmem:[#allocation4] sm:$0xff] %vm1129, %v1127
        %1131 = vst.msk [vmem:[#allocation4 + $0x8] sm:$0xff] %vm1129, %v1128
        %1134 = vrot.lane.b32.xlu0 %v1127, 96
        %v1135 = vpop.permute.xlu0 %1134
        %1136 = vrot.lane.b32.xlu0 %v1128, 96
        %v1137 = vpop.permute.xlu0 %1136
        %s1140 = scalar_lea.vmem [#allocation4], 16
        %1141 = vst.msk [vmem:[%s1140] sm:$0xff] %vm1129, %v1135
        %1142 = vst.msk [vmem:[%s1140 + $0x8] sm:$0xff] %vm1129, %v1137
        %1143 = vrot.lane.b32.xlu0 %v1127, 64
        %v1144 = vpop.permute.xlu0 %1143
        %1145 = vrot.lane.b32.xlu0 %v1128, 64
        %v1146 = vpop.permute.xlu0 %1145
        %s1149 = scalar_lea.vmem [#allocation4], 32
        %1150 = vst.msk [vmem:[%s1149] sm:$0xff] %vm1129, %v1144
        %1151 = vst.msk [vmem:[%s1149 + $0x8] sm:$0xff] %vm1129, %v1146
        %1152 = vrot.lane.b32.xlu0 %v1127, 32
        %v1153 = vpop.permute.xlu0 %1152
        %1154 = vrot.lane.b32.xlu0 %v1128, 32
        %v1155 = vpop.permute.xlu0 %1154
        %s1158 = scalar_lea.vmem [#allocation4], 48
        %1159 = vst.msk [vmem:[%s1158] sm:$0xff] %vm1129, %v1153
        %1160 = vst.msk [vmem:[%s1158 + $0x8] sm:$0xff] %vm1129, %v1155
        %v1161 = vld [vmem:[#allocation4] sm:$0xff]
        %v1162 = vld [vmem:[#allocation4 + $0x8] sm:$0xff]
        %v1163 = vld [vmem:[#allocation4 + $0x10] sm:$0xff]
        %v1164 = vld [vmem:[#allocation4 + $0x18] sm:$0xff]
        %v1165 = vld [vmem:[#allocation4 + $0x20] sm:$0xff]
        %v1166 = vld [vmem:[#allocation4 + $0x28] sm:$0xff]
        %v1167 = vld [vmem:[#allocation4 + $0x30] sm:$0xff]
        %v1168 = vld [vmem:[#allocation4 + $0x38] sm:$0xff]
        %v1169 = vld [vmem:[#allocation2] sm:$0xff]
        %v1170 = vld [vmem:[#allocation2 + $0x8] sm:$0xff]
        %v1171 = vld [vmem:[#allocation2 + $0x10] sm:$0xff]
        %v1172 = vld [vmem:[#allocation2 + $0x18] sm:$0xff]
        %v1173 = vld [vmem:[#allocation2 + $0x20] sm:$0xff]
        %v1174 = vld [vmem:[#allocation2 + $0x28] sm:$0xff]
        %v1175 = vld [vmem:[#allocation2 + $0x30] sm:$0xff]
        %v1176 = vld [vmem:[#allocation2 + $0x38] sm:$0xff]
        %v1177 = vld [vmem:[#allocation2 + $0x40] sm:$0xff]
        %v1178 = vld [vmem:[#allocation2 + $0x48] sm:$0xff]
        %v1179 = vld [vmem:[#allocation2 + $0x50] sm:$0xff]
        %v1180 = vld [vmem:[#allocation2 + $0x58] sm:$0xff]
        %v1181 = vld [vmem:[#allocation2 + $0x60] sm:$0xff]
        %v1182 = vld [vmem:[#allocation2 + $0x68] sm:$0xff]
        %v1183 = vld [vmem:[#allocation2 + $0x70] sm:$0xff]
        %v1184 = vld [vmem:[#allocation2 + $0x78] sm:$0xff]
        %v1186 = vsel %vm1129, %v1161, 0
        %v1189 = vsel %vm1129, %v1162, 0
        %v1192 = vsel %vm1129, %v1169, 0
        %v1195 = vsel %vm1129, %v1170, 0
        %v1198 = vsel %vm1129, %v1171, 0
        %v1201 = vsel %vm1129, %v1172, 0
        %1203 = vmatprep.subr.bf16.mxu0 0
        %1204 = vmatpush1.bf16.xpose.msra.mxu0 %v1192
        %1205 = vmatprep.subr.bf16.mxu0 0
        %1206 = vmatpush1.bf16.xpose.msra.mxu0 %v1195
        %1207 = vmatprep.subr.bf16.mxu0 0
        %1208 = vmatpush1.bf16.xpose.msra.mxu0 %v1198
        %1209 = vmatprep.subr.bf16.mxu0 0
        %1210 = vmatpush1.bf16.xpose.msra.mxu0 %v1201
        %1211 = vmatprep.subr.bf16.mxu0 0
        %1212 = vmatpush1.bf16.xpose.msra.mxu0 0
        %1213 = vmatprep.subr.bf16.mxu0 0
        %1214 = vmatpush1.bf16.xpose.msra.mxu0 0
        %1215 = vmatprep.subr.bf16.mxu0 0
        %1216 = vmatpush1.bf16.xpose.msra.mxu0 0
        %1217 = vmatprep.subr.bf16.mxu0 0
        %1218 = vmatpush1.bf16.xpose.msra.mxu0 0
        %1219 = vmatprep.subr.bf16.mxu0 0
        %1220 = vmatpush1.bf16.xpose.msra.mxu0 0
        %1221 = vmatprep.subr.bf16.mxu0 0
        %1222 = vmatpush1.bf16.xpose.msra.mxu0 0
        %1223 = vmatprep.subr.bf16.mxu0 0
        %1224 = vmatpush1.bf16.xpose.msra.mxu0 0
        %1225 = vmatprep.subr.bf16.mxu0 0
        %1226 = vmatpush1.bf16.xpose.msra.mxu0 0
        %1227 = vmatprep.subr.bf16.mxu0 0
        %1228 = vmatpush1.bf16.xpose.msra.mxu0 0
        %1229 = vmatprep.subr.bf16.mxu0 0
        %1230 = vmatpush1.bf16.xpose.msra.mxu0 0
        %1231 = vmatprep.subr.bf16.mxu0 0
        %1232 = vmatpush1.bf16.xpose.msra.mxu0 0
        %1233 = vmatprep.subr.bf16.mxu0 0
        %1234 = vmatpush1.bf16.xpose.msra.mxu0 0
        %1235 = vmatprep.mubr.bf16.mxu0 0
        %1236 = vmatmul.mubr.bf16.gmra.mrb[0].mxu0 %v1186
        %v1237 = vpop.f32.mrb[0].mxu0
        %v1238 = vadd.f32 0.0, %v1237
        %v1239 = vpop.f32.mrb[0].mxu0
        %v1240 = vpop.f32.mrb[0].mxu0
        %v1241 = vadd.f32 0.0, %v1240
        %v1242 = vpop.f32.mrb[0].mxu0
        %1243 = vmatprep.mubr.bf16.mxu0 0
        %1244 = vmatmul.mubr.bf16.gmra.mrb[0].mxu0 %v1189
        %v1245 = vpop.f32.mrb[0].mxu0
        %v1246 = vadd.f32 0.0, %v1245
        %v1247 = vpop.f32.mrb[0].mxu0
        %v1248 = vpop.f32.mrb[0].mxu0
        %v1249 = vadd.f32 0.0, %v1248
        %v1250 = vpop.f32.mrb[0].mxu0
        %1251 = vdwg.mxu0
        %v1253 = vsel %vm1129, %v1163, 0
        %v1256 = vsel %vm1129, %v1164, 0
        %v1259 = vsel %vm1129, %v1173, 0
        %v1262 = vsel %vm1129, %v1174, 0
        %v1265 = vsel %vm1129, %v1175, 0
        %v1268 = vsel %vm1129, %v1176, 0
        %1270 = vmatprep.subr.bf16.mxu0 0
        %1271 = vmatpush1.bf16.xpose.msra.mxu0 %v1259
        %1272 = vmatprep.subr.bf16.mxu0 0
        %1273 = vmatpush1.bf16.xpose.msra.mxu0 %v1262
        %1274 = vmatprep.subr.bf16.mxu0 0
        %1275 = vmatpush1.bf16.xpose.msra.mxu0 %v1265
        %1276 = vmatprep.subr.bf16.mxu0 0
        %1277 = vmatpush1.bf16.xpose.msra.mxu0 %v1268
        %1278 = vmatprep.subr.bf16.mxu0 0
        %1279 = vmatpush1.bf16.xpose.msra.mxu0 0
        %1280 = vmatprep.subr.bf16.mxu0 0
        %1281 = vmatpush1.bf16.xpose.msra.mxu0 0
        %1282 = vmatprep.subr.bf16.mxu0 0
        %1283 = vmatpush1.bf16.xpose.msra.mxu0 0
        %1284 = vmatprep.subr.bf16.mxu0 0
        %1285 = vmatpush1.bf16.xpose.msra.mxu0 0
        %1286 = vmatprep.subr.bf16.mxu0 0
        %1287 = vmatpush1.bf16.xpose.msra.mxu0 0
        %1288 = vmatprep.subr.bf16.mxu0 0
        %1289 = vmatpush1.bf16.xpose.msra.mxu0 0
        %1290 = vmatprep.subr.bf16.mxu0 0
        %1291 = vmatpush1.bf16.xpose.msra.mxu0 0
        %1292 = vmatprep.subr.bf16.mxu0 0
        %1293 = vmatpush1.bf16.xpose.msra.mxu0 0
        %1294 = vmatprep.subr.bf16.mxu0 0
        %1295 = vmatpush1.bf16.xpose.msra.mxu0 0
        %1296 = vmatprep.subr.bf16.mxu0 0
        %1297 = vmatpush1.bf16.xpose.msra.mxu0 0
        %1298 = vmatprep.subr.bf16.mxu0 0
        %1299 = vmatpush1.bf16.xpose.msra.mxu0 0
        %1300 = vmatprep.subr.bf16.mxu0 0
        %1301 = vmatpush1.bf16.xpose.msra.mxu0 0
        %1302 = vmatprep.mubr.bf16.mxu0 0
        %1303 = vmatmul.mubr.bf16.gmra.mrb[0].mxu0 %v1253
        %v1304 = vpop.f32.mrb[0].mxu0
        %v1305 = vadd.f32 0.0, %v1304
        %v1306 = vpop.f32.mrb[0].mxu0
        %v1307 = vpop.f32.mrb[0].mxu0
        %v1308 = vadd.f32 0.0, %v1307
        %v1309 = vpop.f32.mrb[0].mxu0
        %1310 = vmatprep.mubr.bf16.mxu0 0
        %1311 = vmatmul.mubr.bf16.gmra.mrb[0].mxu0 %v1256
        %v1312 = vpop.f32.mrb[0].mxu0
        %v1313 = vadd.f32 0.0, %v1312
        %v1314 = vpop.f32.mrb[0].mxu0
        %v1315 = vpop.f32.mrb[0].mxu0
        %v1316 = vadd.f32 0.0, %v1315
        %v1317 = vpop.f32.mrb[0].mxu0
        %1318 = vdwg.mxu0
        %v1320 = vsel %vm1129, %v1165, 0
        %v1323 = vsel %vm1129, %v1166, 0
        %v1326 = vsel %vm1129, %v1177, 0
        %v1329 = vsel %vm1129, %v1178, 0
        %v1332 = vsel %vm1129, %v1179, 0
        %v1335 = vsel %vm1129, %v1180, 0
        %1337 = vmatprep.subr.bf16.mxu0 0
        %1338 = vmatpush1.bf16.xpose.msra.mxu0 %v1326
        %1339 = vmatprep.subr.bf16.mxu0 0
        %1340 = vmatpush1.bf16.xpose.msra.mxu0 %v1329
        %1341 = vmatprep.subr.bf16.mxu0 0
        %1342 = vmatpush1.bf16.xpose.msra.mxu0 %v1332
        %1343 = vmatprep.subr.bf16.mxu0 0
        %1344 = vmatpush1.bf16.xpose.msra.mxu0 %v1335
        %1345 = vmatprep.subr.bf16.mxu0 0
        %1346 = vmatpush1.bf16.xpose.msra.mxu0 0
        %1347 = vmatprep.subr.bf16.mxu0 0
        %1348 = vmatpush1.bf16.xpose.msra.mxu0 0
        %1349 = vmatprep.subr.bf16.mxu0 0
        %1350 = vmatpush1.bf16.xpose.msra.mxu0 0
        %1351 = vmatprep.subr.bf16.mxu0 0
        %1352 = vmatpush1.bf16.xpose.msra.mxu0 0
        %1353 = vmatprep.subr.bf16.mxu0 0
        %1354 = vmatpush1.bf16.xpose.msra.mxu0 0
        %1355 = vmatprep.subr.bf16.mxu0 0
        %1356 = vmatpush1.bf16.xpose.msra.mxu0 0
        %1357 = vmatprep.subr.bf16.mxu0 0
        %1358 = vmatpush1.bf16.xpose.msra.mxu0 0
        %1359 = vmatprep.subr.bf16.mxu0 0
        %1360 = vmatpush1.bf16.xpose.msra.mxu0 0
        %1361 = vmatprep.subr.bf16.mxu0 0
        %1362 = vmatpush1.bf16.xpose.msra.mxu0 0
        %1363 = vmatprep.subr.bf16.mxu0 0
        %1364 = vmatpush1.bf16.xpose.msra.mxu0 0
        %1365 = vmatprep.subr.bf16.mxu0 0
        %1366 = vmatpush1.bf16.xpose.msra.mxu0 0
        %1367 = vmatprep.subr.bf16.mxu0 0
        %1368 = vmatpush1.bf16.xpose.msra.mxu0 0
        %1369 = vmatprep.mubr.bf16.mxu0 0
        %1370 = vmatmul.mubr.bf16.gmra.mrb[0].mxu0 %v1320
        %v1371 = vpop.f32.mrb[0].mxu0
        %v1372 = vadd.f32 0.0, %v1371
        %v1373 = vpop.f32.mrb[0].mxu0
        %v1374 = vpop.f32.mrb[0].mxu0
        %v1375 = vadd.f32 0.0, %v1374
        %v1376 = vpop.f32.mrb[0].mxu0
        %1377 = vmatprep.mubr.bf16.mxu0 0
        %1378 = vmatmul.mubr.bf16.gmra.mrb[0].mxu0 %v1323
        %v1379 = vpop.f32.mrb[0].mxu0
        %v1380 = vadd.f32 0.0, %v1379
        %v1381 = vpop.f32.mrb[0].mxu0
        %v1382 = vpop.f32.mrb[0].mxu0
        %v1383 = vadd.f32 0.0, %v1382
        %v1384 = vpop.f32.mrb[0].mxu0
        %1385 = vdwg.mxu0
        %v1387 = vsel %vm1129, %v1167, 0
        %v1390 = vsel %vm1129, %v1168, 0
        %v1393 = vsel %vm1129, %v1181, 0
        %v1396 = vsel %vm1129, %v1182, 0
        %v1399 = vsel %vm1129, %v1183, 0
        %v1402 = vsel %vm1129, %v1184, 0
        %1404 = vmatprep.subr.bf16.mxu0 0
        %1405 = vmatpush1.bf16.xpose.msra.mxu0 %v1393
        %1406 = vmatprep.subr.bf16.mxu0 0
        %1407 = vmatpush1.bf16.xpose.msra.mxu0 %v1396
        %1408 = vmatprep.subr.bf16.mxu0 0
        %1409 = vmatpush1.bf16.xpose.msra.mxu0 %v1399
        %1410 = vmatprep.subr.bf16.mxu0 0
        %1411 = vmatpush1.bf16.xpose.msra.mxu0 %v1402
        %1412 = vmatprep.subr.bf16.mxu0 0
        %1413 = vmatpush1.bf16.xpose.msra.mxu0 0
        %1414 = vmatprep.subr.bf16.mxu0 0
        %1415 = vmatpush1.bf16.xpose.msra.mxu0 0
        %1416 = vmatprep.subr.bf16.mxu0 0
        %1417 = vmatpush1.bf16.xpose.msra.mxu0 0
        %1418 = vmatprep.subr.bf16.mxu0 0
        %1419 = vmatpush1.bf16.xpose.msra.mxu0 0
        %1420 = vmatprep.subr.bf16.mxu0 0
        %1421 = vmatpush1.bf16.xpose.msra.mxu0 0
        %1422 = vmatprep.subr.bf16.mxu0 0
        %1423 = vmatpush1.bf16.xpose.msra.mxu0 0
        %1424 = vmatprep.subr.bf16.mxu0 0
        %1425 = vmatpush1.bf16.xpose.msra.mxu0 0
        %1426 = vmatprep.subr.bf16.mxu0 0
        %1427 = vmatpush1.bf16.xpose.msra.mxu0 0
        %1428 = vmatprep.subr.bf16.mxu0 0
        %1429 = vmatpush1.bf16.xpose.msra.mxu0 0
        %1430 = vmatprep.subr.bf16.mxu0 0
        %1431 = vmatpush1.bf16.xpose.msra.mxu0 0
        %1432 = vmatprep.subr.bf16.mxu0 0
        %1433 = vmatpush1.bf16.xpose.msra.mxu0 0
        %1434 = vmatprep.subr.bf16.mxu0 0
        %1435 = vmatpush1.bf16.xpose.msra.mxu0 0
        %1436 = vmatprep.mubr.bf16.mxu0 0
        %1437 = vmatmul.mubr.bf16.gmra.mrb[0].mxu0 %v1387
        %v1438 = vpop.f32.mrb[0].mxu0
        %v1439 = vadd.f32 0.0, %v1438
        %v1440 = vpop.f32.mrb[0].mxu0
        %v1441 = vpop.f32.mrb[0].mxu0
        %v1442 = vadd.f32 0.0, %v1441
        %v1443 = vpop.f32.mrb[0].mxu0
        %1444 = vmatprep.mubr.bf16.mxu0 0
        %1445 = vmatmul.mubr.bf16.gmra.mrb[0].mxu0 %v1390
        %v1446 = vpop.f32.mrb[0].mxu0
        %v1447 = vadd.f32 0.0, %v1446
        %v1448 = vpop.f32.mrb[0].mxu0
        %v1449 = vpop.f32.mrb[0].mxu0
        %v1450 = vadd.f32 0.0, %v1449
        %v1451 = vpop.f32.mrb[0].mxu0
        %1452 = vdwg.mxu0
        %vm1453 = vcmask 523264
        %v1454 = vsel %vm1453, %v1238, -inf
        %1455 = vmax.xlane.f32.xlu0 %v1454
        %v1456 = vpop.xlane.xlu0 %1455
        %v1457 = vsel %vm1453, %v1241, -inf
        %1458 = vmax.xlane.f32.xlu0 %v1457
        %v1459 = vpop.xlane.xlu0 %1458
        %v1460 = vsel %vm1453, %v1246, -inf
        %1461 = vmax.xlane.f32.xlu0 %v1460
        %v1462 = vpop.xlane.xlu0 %1461
        %v1463 = vsel %vm1453, %v1249, -inf
        %1464 = vmax.xlane.f32.xlu0 %v1463
        %v1465 = vpop.xlane.xlu0 %1464
        %v1466 = vsel %vm1453, %v1305, -inf
        %1467 = vmax.xlane.f32.xlu0 %v1466
        %v1468 = vpop.xlane.xlu0 %1467
        %v1469 = vsel %vm1453, %v1308, -inf
        %1470 = vmax.xlane.f32.xlu0 %v1469
        %v1471 = vpop.xlane.xlu0 %1470
        %v1472 = vsel %vm1453, %v1313, -inf
        %1473 = vmax.xlane.f32.xlu0 %v1472
        %v1474 = vpop.xlane.xlu0 %1473
        %v1475 = vsel %vm1453, %v1316, -inf
        %1476 = vmax.xlane.f32.xlu0 %v1475
        %v1477 = vpop.xlane.xlu0 %1476
        %v1478 = vsel %vm1453, %v1372, -inf
        %1479 = vmax.xlane.f32.xlu0 %v1478
        %v1480 = vpop.xlane.xlu0 %1479
        %v1481 = vsel %vm1453, %v1375, -inf
        %1482 = vmax.xlane.f32.xlu0 %v1481
        %v1483 = vpop.xlane.xlu0 %1482
        %v1484 = vsel %vm1453, %v1380, -inf
        %1485 = vmax.xlane.f32.xlu0 %v1484
        %v1486 = vpop.xlane.xlu0 %1485
        %v1487 = vsel %vm1453, %v1383, -inf
        %1488 = vmax.xlane.f32.xlu0 %v1487
        %v1489 = vpop.xlane.xlu0 %1488
        %v1490 = vsel %vm1453, %v1439, -inf
        %1491 = vmax.xlane.f32.xlu0 %v1490
        %v1492 = vpop.xlane.xlu0 %1491
        %v1493 = vsel %vm1453, %v1442, -inf
        %1494 = vmax.xlane.f32.xlu0 %v1493
        %v1495 = vpop.xlane.xlu0 %1494
        %v1496 = vsel %vm1453, %v1447, -inf
        %1497 = vmax.xlane.f32.xlu0 %v1496
        %v1498 = vpop.xlane.xlu0 %1497
        %v1499 = vsel %vm1453, %v1450, -inf
        %1500 = vmax.xlane.f32.xlu0 %v1499
        %v1501 = vpop.xlane.xlu0 %1500
        %v1502 = vsub.f32 %v1238, %v1456
        %v1503 = vsub.f32 %v1241, %v1459
        %v1504 = vsub.f32 %v1246, %v1462
        %v1505 = vsub.f32 %v1249, %v1465
        %v1506 = vsub.f32 %v1305, %v1468
        %v1507 = vsub.f32 %v1308, %v1471
        %v1508 = vsub.f32 %v1313, %v1474
        %v1509 = vsub.f32 %v1316, %v1477
        %v1510 = vsub.f32 %v1372, %v1480
        %v1511 = vsub.f32 %v1375, %v1483
        %v1512 = vsub.f32 %v1380, %v1486
        %v1513 = vsub.f32 %v1383, %v1489
        %v1514 = vsub.f32 %v1439, %v1492
        %v1515 = vsub.f32 %v1442, %v1495
        %v1516 = vsub.f32 %v1447, %v1498
        %v1517 = vsub.f32 %v1450, %v1501
        %v1518 = vmul.f32 %v1502, 1.442695
        %v1519 = vpow.pop %v1518
        %v1520 = vmul.f32 %v1503, 1.442695
        %v1521 = vpow.pop %v1520
        %v1522 = vmul.f32 %v1504, 1.442695
        %v1523 = vpow.pop %v1522
        %v1524 = vmul.f32 %v1505, 1.442695
        %v1525 = vpow.pop %v1524
        %v1526 = vmul.f32 %v1506, 1.442695
        %v1527 = vpow.pop %v1526
        %v1528 = vmul.f32 %v1507, 1.442695
        %v1529 = vpow.pop %v1528
        %v1530 = vmul.f32 %v1508, 1.442695
        %v1531 = vpow.pop %v1530
        %v1532 = vmul.f32 %v1509, 1.442695
        %v1533 = vpow.pop %v1532
        %v1534 = vmul.f32 %v1510, 1.442695
        %v1535 = vpow.pop %v1534
        %v1536 = vmul.f32 %v1511, 1.442695
        %v1537 = vpow.pop %v1536
        %v1538 = vmul.f32 %v1512, 1.442695
        %v1539 = vpow.pop %v1538
        %v1540 = vmul.f32 %v1513, 1.442695
        %v1541 = vpow.pop %v1540
        %v1542 = vmul.f32 %v1514, 1.442695
        %v1543 = vpow.pop %v1542
        %v1544 = vmul.f32 %v1515, 1.442695
        %v1545 = vpow.pop %v1544
        %v1546 = vmul.f32 %v1516, 1.442695
        %v1547 = vpow.pop %v1546
        %v1548 = vmul.f32 %v1517, 1.442695
        %v1549 = vpow.pop %v1548
        %v1550 = vsel %vm1453, %v1519, 0.0
        %1551 = vadd.xlane.f32.xlu0 %v1550
        %v1552 = vpop.xlane.xlu0 %1551
        %v1553 = vsel %vm1453, %v1521, 0.0
        %1554 = vadd.xlane.f32.xlu0 %v1553
        %v1555 = vpop.xlane.xlu0 %1554
        %v1556 = vsel %vm1453, %v1523, 0.0
        %1557 = vadd.xlane.f32.xlu0 %v1556
        %v1558 = vpop.xlane.xlu0 %1557
        %v1559 = vsel %vm1453, %v1525, 0.0
        %1560 = vadd.xlane.f32.xlu0 %v1559
        %v1561 = vpop.xlane.xlu0 %1560
        %v1562 = vsel %vm1453, %v1527, 0.0
        %1563 = vadd.xlane.f32.xlu0 %v1562
        %v1564 = vpop.xlane.xlu0 %1563
        %v1565 = vsel %vm1453, %v1529, 0.0
        %1566 = vadd.xlane.f32.xlu0 %v1565
        %v1567 = vpop.xlane.xlu0 %1566
        %v1568 = vsel %vm1453, %v1531, 0.0
        %1569 = vadd.xlane.f32.xlu0 %v1568
        %v1570 = vpop.xlane.xlu0 %1569
        %v1571 = vsel %vm1453, %v1533, 0.0
        %1572 = vadd.xlane.f32.xlu0 %v1571
        %v1573 = vpop.xlane.xlu0 %1572
        %v1574 = vsel %vm1453, %v1535, 0.0
        %1575 = vadd.xlane.f32.xlu0 %v1574
        %v1576 = vpop.xlane.xlu0 %1575
        %v1577 = vsel %vm1453, %v1537, 0.0
        %1578 = vadd.xlane.f32.xlu0 %v1577
        %v1579 = vpop.xlane.xlu0 %1578
        %v1580 = vsel %vm1453, %v1539, 0.0
        %1581 = vadd.xlane.f32.xlu0 %v1580
        %v1582 = vpop.xlane.xlu0 %1581
        %v1583 = vsel %vm1453, %v1541, 0.0
        %1584 = vadd.xlane.f32.xlu0 %v1583
        %v1585 = vpop.xlane.xlu0 %1584
        %v1586 = vsel %vm1453, %v1543, 0.0
        %1587 = vadd.xlane.f32.xlu0 %v1586
        %v1588 = vpop.xlane.xlu0 %1587
        %v1589 = vsel %vm1453, %v1545, 0.0
        %1590 = vadd.xlane.f32.xlu0 %v1589
        %v1591 = vpop.xlane.xlu0 %1590
        %v1592 = vsel %vm1453, %v1547, 0.0
        %1593 = vadd.xlane.f32.xlu0 %v1592
        %v1594 = vpop.xlane.xlu0 %1593
        %v1595 = vsel %vm1453, %v1549, 0.0
        %1596 = vadd.xlane.f32.xlu0 %v1595
        %v1597 = vpop.xlane.xlu0 %1596
        %v1598 = vrcp.pop %v1552
        %v1599 = vrcp.pop %v1555
        %v1600 = vrcp.pop %v1558
        %v1601 = vrcp.pop %v1561
        %v1602 = vrcp.pop %v1564
        %v1603 = vrcp.pop %v1567
        %v1604 = vrcp.pop %v1570
        %v1605 = vrcp.pop %v1573
        %v1606 = vrcp.pop %v1576
        %v1607 = vrcp.pop %v1579
        %v1608 = vrcp.pop %v1582
        %v1609 = vrcp.pop %v1585
        %v1610 = vrcp.pop %v1588
        %v1611 = vrcp.pop %v1591
        %v1612 = vrcp.pop %v1594
        %v1613 = vrcp.pop %v1597
        %v1614 = vmul.f32 %v1552, %v1598
        %v1615 = vmul.f32 %v1555, %v1599
        %v1616 = vmul.f32 %v1558, %v1600
        %v1617 = vmul.f32 %v1561, %v1601
        %v1618 = vmul.f32 %v1564, %v1602
        %v1619 = vmul.f32 %v1567, %v1603
        %v1620 = vmul.f32 %v1570, %v1604
        %v1621 = vmul.f32 %v1573, %v1605
        %v1622 = vmul.f32 %v1576, %v1606
        %v1623 = vmul.f32 %v1579, %v1607
        %v1624 = vmul.f32 %v1582, %v1608
        %v1625 = vmul.f32 %v1585, %v1609
        %v1626 = vmul.f32 %v1588, %v1610
        %v1627 = vmul.f32 %v1591, %v1611
        %v1628 = vmul.f32 %v1594, %v1612
        %v1629 = vmul.f32 %v1597, %v1613
        %v1630 = vsub.f32 2.0, %v1614
        %v1631 = vsub.f32 2.0, %v1615
        %v1632 = vsub.f32 2.0, %v1616
        %v1633 = vsub.f32 2.0, %v1617
        %v1634 = vsub.f32 2.0, %v1618
        %v1635 = vsub.f32 2.0, %v1619
        %v1636 = vsub.f32 2.0, %v1620
        %v1637 = vsub.f32 2.0, %v1621
        %v1638 = vsub.f32 2.0, %v1622
        %v1639 = vsub.f32 2.0, %v1623
        %v1640 = vsub.f32 2.0, %v1624
        %v1641 = vsub.f32 2.0, %v1625
        %v1642 = vsub.f32 2.0, %v1626
        %v1643 = vsub.f32 2.0, %v1627
        %v1644 = vsub.f32 2.0, %v1628
        %v1645 = vsub.f32 2.0, %v1629
        %v1646 = vmul.f32 %v1598, %v1630
        %v1647 = vmul.f32 %v1599, %v1631
        %v1648 = vmul.f32 %v1600, %v1632
        %v1649 = vmul.f32 %v1601, %v1633
        %v1650 = vmul.f32 %v1602, %v1634
        %v1651 = vmul.f32 %v1603, %v1635
        %v1652 = vmul.f32 %v1604, %v1636
        %v1653 = vmul.f32 %v1605, %v1637
        %v1654 = vmul.f32 %v1606, %v1638
        %v1655 = vmul.f32 %v1607, %v1639
        %v1656 = vmul.f32 %v1608, %v1640
        %v1657 = vmul.f32 %v1609, %v1641
        %v1658 = vmul.f32 %v1610, %v1642
        %v1659 = vmul.f32 %v1611, %v1643
        %v1660 = vmul.f32 %v1612, %v1644
        %v1661 = vmul.f32 %v1613, %v1645
        %v1662 = vmul.f32 %v1519, %v1646
        %v1663 = vmul.f32 %v1521, %v1647
        %v1664 = vmul.f32 %v1523, %v1648
        %v1665 = vmul.f32 %v1525, %v1649
        %v1666 = vmul.f32 %v1527, %v1650
        %v1667 = vmul.f32 %v1529, %v1651
        %v1668 = vmul.f32 %v1531, %v1652
        %v1669 = vmul.f32 %v1533, %v1653
        %v1670 = vmul.f32 %v1535, %v1654
        %v1671 = vmul.f32 %v1537, %v1655
        %v1672 = vmul.f32 %v1539, %v1656
        %v1673 = vmul.f32 %v1541, %v1657
        %v1674 = vmul.f32 %v1543, %v1658
        %v1675 = vmul.f32 %v1545, %v1659
        %v1676 = vmul.f32 %v1547, %v1660
        %v1677 = vmul.f32 %v1549, %v1661
        %v1678 = vpack.c.bf16 %v1663, %v1662
        %v1679 = vpack.c.bf16 %v1665, %v1664
        %v1680 = vpack.c.bf16 %v1667, %v1666
        %v1681 = vpack.c.bf16 %v1669, %v1668
        %v1682 = vpack.c.bf16 %v1671, %v1670
        %v1683 = vpack.c.bf16 %v1673, %v1672
        %v1684 = vpack.c.bf16 %v1675, %v1674
        %v1685 = vpack.c.bf16 %v1677, %v1676
        %v1686 = vld [vmem:[#allocation3] sm:$0xff]
        %v1687 = vld [vmem:[#allocation3 + $0x8] sm:$0xff]
        %v1688 = vld [vmem:[#allocation3 + $0x10] sm:$0xff]
        %v1689 = vld [vmem:[#allocation3 + $0x18] sm:$0xff]
        %v1690 = vld [vmem:[#allocation3 + $0x20] sm:$0xff]
        %v1691 = vld [vmem:[#allocation3 + $0x28] sm:$0xff]
        %v1692 = vld [vmem:[#allocation3 + $0x30] sm:$0xff]
        %v1693 = vld [vmem:[#allocation3 + $0x38] sm:$0xff]
        %v1694 = vld [vmem:[#allocation3 + $0x40] sm:$0xff]
        %v1695 = vld [vmem:[#allocation3 + $0x48] sm:$0xff]
        %v1696 = vld [vmem:[#allocation3 + $0x50] sm:$0xff]
        %v1697 = vld [vmem:[#allocation3 + $0x58] sm:$0xff]
        %v1698 = vld [vmem:[#allocation3 + $0x60] sm:$0xff]
        %v1699 = vld [vmem:[#allocation3 + $0x68] sm:$0xff]
        %v1700 = vld [vmem:[#allocation3 + $0x70] sm:$0xff]
        %v1701 = vld [vmem:[#allocation3 + $0x78] sm:$0xff]
        %v1703 = vsel %vm1453, %v1678, 0
        %v1706 = vsel %vm1453, %v1679, 0
        %1708 = vmatprep.subr.bf16.mxu0 0
        %1709 = vmatpush1.bf16.msra.mxu0 %v1686
        %1710 = vmatprep.subr.bf16.mxu0 0
        %1711 = vmatpush1.bf16.msra.mxu0 %v1687
        %1712 = vmatprep.subr.bf16.mxu0 0
        %1713 = vmatpush1.bf16.msra.mxu0 %v1688
        %1714 = vmatprep.subr.bf16.mxu0 0
        %1715 = vmatpush1.bf16.msra.mxu0 %v1689
        %1716 = vmatprep.subr.bf16.mxu0 0
        %1717 = vmatpush1.bf16.msra.mxu0 0
        %1718 = vmatprep.subr.bf16.mxu0 0
        %1719 = vmatpush1.bf16.msra.mxu0 0
        %1720 = vmatprep.subr.bf16.mxu0 0
        %1721 = vmatpush1.bf16.msra.mxu0 0
        %1722 = vmatprep.subr.bf16.mxu0 0
        %1723 = vmatpush1.bf16.msra.mxu0 0
        %1724 = vmatprep.subr.bf16.mxu0 0
        %1725 = vmatpush1.bf16.msra.mxu0 0
        %1726 = vmatprep.subr.bf16.mxu0 0
        %1727 = vmatpush1.bf16.msra.mxu0 0
        %1728 = vmatprep.subr.bf16.mxu0 0
        %1729 = vmatpush1.bf16.msra.mxu0 0
        %1730 = vmatprep.subr.bf16.mxu0 0
        %1731 = vmatpush1.bf16.msra.mxu0 0
        %1732 = vmatprep.subr.bf16.mxu0 0
        %1733 = vmatpush1.bf16.msra.mxu0 0
        %1734 = vmatprep.subr.bf16.mxu0 0
        %1735 = vmatpush1.bf16.msra.mxu0 0
        %1736 = vmatprep.subr.bf16.mxu0 0
        %1737 = vmatpush1.bf16.msra.mxu0 0
        %1738 = vmatprep.subr.bf16.mxu0 0
        %1739 = vmatpush1.bf16.msra.mxu0 0
        %1740 = vmatprep.mubr.bf16.mxu0 0
        %1741 = vmatmul.mubr.bf16.gmra.mrb[0].mxu0 %v1703
        %v1742 = vpop.f32.mrb[0].mxu0
        %v1743 = vadd.f32 0.0, %v1742
        %v1744 = vpop.f32.mrb[0].mxu0
        %v1745 = vpop.f32.mrb[0].mxu0
        %v1746 = vadd.f32 0.0, %v1745
        %v1747 = vpop.f32.mrb[0].mxu0
        %1748 = vmatprep.mubr.bf16.mxu0 0
        %1749 = vmatmul.mubr.bf16.gmra.mrb[0].mxu0 %v1706
        %v1750 = vpop.f32.mrb[0].mxu0
        %v1751 = vadd.f32 0.0, %v1750
        %v1752 = vpop.f32.mrb[0].mxu0
        %v1753 = vpop.f32.mrb[0].mxu0
        %v1754 = vadd.f32 0.0, %v1753
        %v1755 = vpop.f32.mrb[0].mxu0
        %1756 = vdwg.mxu0
        %v1758 = vsel %vm1453, %v1680, 0
        %v1761 = vsel %vm1453, %v1681, 0
        %1763 = vmatprep.subr.bf16.mxu0 0
        %1764 = vmatpush1.bf16.msra.mxu0 %v1690
        %1765 = vmatprep.subr.bf16.mxu0 0
        %1766 = vmatpush1.bf16.msra.mxu0 %v1691
        %1767 = vmatprep.subr.bf16.mxu0 0
        %1768 = vmatpush1.bf16.msra.mxu0 %v1692
        %1769 = vmatprep.subr.bf16.mxu0 0
        %1770 = vmatpush1.bf16.msra.mxu0 %v1693
        %1771 = vmatprep.subr.bf16.mxu0 0
        %1772 = vmatpush1.bf16.msra.mxu0 0
        %1773 = vmatprep.subr.bf16.mxu0 0
        %1774 = vmatpush1.bf16.msra.mxu0 0
        %1775 = vmatprep.subr.bf16.mxu0 0
        %1776 = vmatpush1.bf16.msra.mxu0 0
        %1777 = vmatprep.subr.bf16.mxu0 0
        %1778 = vmatpush1.bf16.msra.mxu0 0
        %1779 = vmatprep.subr.bf16.mxu0 0
        %1780 = vmatpush1.bf16.msra.mxu0 0
        %1781 = vmatprep.subr.bf16.mxu0 0
        %1782 = vmatpush1.bf16.msra.mxu0 0
        %1783 = vmatprep.subr.bf16.mxu0 0
        %1784 = vmatpush1.bf16.msra.mxu0 0
        %1785 = vmatprep.subr.bf16.mxu0 0
        %1786 = vmatpush1.bf16.msra.mxu0 0
        %1787 = vmatprep.subr.bf16.mxu0 0
        %1788 = vmatpush1.bf16.msra.mxu0 0
        %1789 = vmatprep.subr.bf16.mxu0 0
        %1790 = vmatpush1.bf16.msra.mxu0 0
        %1791 = vmatprep.subr.bf16.mxu0 0
        %1792 = vmatpush1.bf16.msra.mxu0 0
        %1793 = vmatprep.subr.bf16.mxu0 0
        %1794 = vmatpush1.bf16.msra.mxu0 0
        %1795 = vmatprep.mubr.bf16.mxu0 0
        %1796 = vmatmul.mubr.bf16.gmra.mrb[0].mxu0 %v1758
        %v1797 = vpop.f32.mrb[0].mxu0
        %v1798 = vadd.f32 0.0, %v1797
        %v1799 = vpop.f32.mrb[0].mxu0
        %v1800 = vpop.f32.mrb[0].mxu0
        %v1801 = vadd.f32 0.0, %v1800
        %v1802 = vpop.f32.mrb[0].mxu0
        %1803 = vmatprep.mubr.bf16.mxu0 0
        %1804 = vmatmul.mubr.bf16.gmra.mrb[0].mxu0 %v1761
        %v1805 = vpop.f32.mrb[0].mxu0
        %v1806 = vadd.f32 0.0, %v1805
        %v1807 = vpop.f32.mrb[0].mxu0
        %v1808 = vpop.f32.mrb[0].mxu0
        %v1809 = vadd.f32 0.0, %v1808
        %v1810 = vpop.f32.mrb[0].mxu0
        %1811 = vdwg.mxu0
        %v1813 = vsel %vm1453, %v1682, 0
        %v1816 = vsel %vm1453, %v1683, 0
        %1818 = vmatprep.subr.bf16.mxu0 0
        %1819 = vmatpush1.bf16.msra.mxu0 %v1694
        %1820 = vmatprep.subr.bf16.mxu0 0
        %1821 = vmatpush1.bf16.msra.mxu0 %v1695
        %1822 = vmatprep.subr.bf16.mxu0 0
        %1823 = vmatpush1.bf16.msra.mxu0 %v1696
        %1824 = vmatprep.subr.bf16.mxu0 0
        %1825 = vmatpush1.bf16.msra.mxu0 %v1697
        %1826 = vmatprep.subr.bf16.mxu0 0
        %1827 = vmatpush1.bf16.msra.mxu0 0
        %1828 = vmatprep.subr.bf16.mxu0 0
        %1829 = vmatpush1.bf16.msra.mxu0 0
        %1830 = vmatprep.subr.bf16.mxu0 0
        %1831 = vmatpush1.bf16.msra.mxu0 0
        %1832 = vmatprep.subr.bf16.mxu0 0
        %1833 = vmatpush1.bf16.msra.mxu0 0
        %1834 = vmatprep.subr.bf16.mxu0 0
        %1835 = vmatpush1.bf16.msra.mxu0 0
        %1836 = vmatprep.subr.bf16.mxu0 0
        %1837 = vmatpush1.bf16.msra.mxu0 0
        %1838 = vmatprep.subr.bf16.mxu0 0
        %1839 = vmatpush1.bf16.msra.mxu0 0
        %1840 = vmatprep.subr.bf16.mxu0 0
        %1841 = vmatpush1.bf16.msra.mxu0 0
        %1842 = vmatprep.subr.bf16.mxu0 0
        %1843 = vmatpush1.bf16.msra.mxu0 0
        %1844 = vmatprep.subr.bf16.mxu0 0
        %1845 = vmatpush1.bf16.msra.mxu0 0
        %1846 = vmatprep.subr.bf16.mxu0 0
        %1847 = vmatpush1.bf16.msra.mxu0 0
        %1848 = vmatprep.subr.bf16.mxu0 0
        %1849 = vmatpush1.bf16.msra.mxu0 0
        %1850 = vmatprep.mubr.bf16.mxu0 0
        %1851 = vmatmul.mubr.bf16.gmra.mrb[0].mxu0 %v1813
        %v1852 = vpop.f32.mrb[0].mxu0
        %v1853 = vadd.f32 0.0, %v1852
        %v1854 = vpop.f32.mrb[0].mxu0
        %v1855 = vpop.f32.mrb[0].mxu0
        %v1856 = vadd.f32 0.0, %v1855
        %v1857 = vpop.f32.mrb[0].mxu0
        %1858 = vmatprep.mubr.bf16.mxu0 0
        %1859 = vmatmul.mubr.bf16.gmra.mrb[0].mxu0 %v1816
        %v1860 = vpop.f32.mrb[0].mxu0
        %v1861 = vadd.f32 0.0, %v1860
        %v1862 = vpop.f32.mrb[0].mxu0
        %v1863 = vpop.f32.mrb[0].mxu0
        %v1864 = vadd.f32 0.0, %v1863
        %v1865 = vpop.f32.mrb[0].mxu0
        %1866 = vdwg.mxu0
        %v1868 = vsel %vm1453, %v1684, 0
        %v1871 = vsel %vm1453, %v1685, 0
        %1873 = vmatprep.subr.bf16.mxu0 0
        %1874 = vmatpush1.bf16.msra.mxu0 %v1698
        %1875 = vmatprep.subr.bf16.mxu0 0
        %1876 = vmatpush1.bf16.msra.mxu0 %v1699
        %1877 = vmatprep.subr.bf16.mxu0 0
        %1878 = vmatpush1.bf16.msra.mxu0 %v1700
        %1879 = vmatprep.subr.bf16.mxu0 0
        %1880 = vmatpush1.bf16.msra.mxu0 %v1701
        %1881 = vmatprep.subr.bf16.mxu0 0
        %1882 = vmatpush1.bf16.msra.mxu0 0
        %1883 = vmatprep.subr.bf16.mxu0 0
        %1884 = vmatpush1.bf16.msra.mxu0 0
        %1885 = vmatprep.subr.bf16.mxu0 0
        %1886 = vmatpush1.bf16.msra.mxu0 0
        %1887 = vmatprep.subr.bf16.mxu0 0
        %1888 = vmatpush1.bf16.msra.mxu0 0
        %1889 = vmatprep.subr.bf16.mxu0 0
        %1890 = vmatpush1.bf16.msra.mxu0 0
        %1891 = vmatprep.subr.bf16.mxu0 0
        %1892 = vmatpush1.bf16.msra.mxu0 0
        %1893 = vmatprep.subr.bf16.mxu0 0
        %1894 = vmatpush1.bf16.msra.mxu0 0
        %1895 = vmatprep.subr.bf16.mxu0 0
        %1896 = vmatpush1.bf16.msra.mxu0 0
        %1897 = vmatprep.subr.bf16.mxu0 0
        %1898 = vmatpush1.bf16.msra.mxu0 0
        %1899 = vmatprep.subr.bf16.mxu0 0
        %1900 = vmatpush1.bf16.msra.mxu0 0
        %1901 = vmatprep.subr.bf16.mxu0 0
        %1902 = vmatpush1.bf16.msra.mxu0 0
        %1903 = vmatprep.subr.bf16.mxu0 0
        %1904 = vmatpush1.bf16.msra.mxu0 0
        %1905 = vmatprep.mubr.bf16.mxu0 0
        %1906 = vmatmul.mubr.bf16.gmra.mrb[0].mxu0 %v1868
        %v1907 = vpop.f32.mrb[0].mxu0
        %v1908 = vadd.f32 0.0, %v1907
        %v1909 = vpop.f32.mrb[0].mxu0
        %v1910 = vpop.f32.mrb[0].mxu0
        %v1911 = vadd.f32 0.0, %v1910
        %v1912 = vpop.f32.mrb[0].mxu0
        %1913 = vmatprep.mubr.bf16.mxu0 0
        %1914 = vmatmul.mubr.bf16.gmra.mrb[0].mxu0 %v1871
        %v1915 = vpop.f32.mrb[0].mxu0
        %v1916 = vadd.f32 0.0, %v1915
        %v1917 = vpop.f32.mrb[0].mxu0
        %v1918 = vpop.f32.mrb[0].mxu0
        %v1919 = vadd.f32 0.0, %v1918
        %v1920 = vpop.f32.mrb[0].mxu0
        %1921 = vdwg.mxu0
        %v1922 = vpack.c.bf16 %v1746, %v1743
        %v1923 = vpack.c.bf16 %v1754, %v1751
        %1924 = vst.msk [vmem:[#allocation5] sm:$0xff] %vm1129, %v1922
        %1925 = vst.msk [vmem:[#allocation5 + $0x8] sm:$0xff] %vm1129, %v1923
        %v1926 = vpack.c.bf16 %v1801, %v1798
        %v1927 = vpack.c.bf16 %v1809, %v1806
        %1930 = vrot.lane.b32.xlu0 %v1926, 32
        %v1931 = vpop.permute.xlu0 %1930
        %1932 = vrot.lane.b32.xlu0 %v1927, 32
        %v1933 = vpop.permute.xlu0 %1932
        %vm1936 = vcmask 523520
        %1937 = vst.msk [vmem:[#allocation5] sm:$0xff] %vm1936, %v1931
        %1938 = vst.msk [vmem:[#allocation5 + $0x8] sm:$0xff] %vm1936, %v1933
        %v1939 = vpack.c.bf16 %v1856, %v1853
        %v1940 = vpack.c.bf16 %v1864, %v1861
        %1943 = vrot.lane.b32.xlu0 %v1939, 64
        %v1944 = vpop.permute.xlu0 %1943
        %1945 = vrot.lane.b32.xlu0 %v1940, 64
        %v1946 = vpop.permute.xlu0 %1945
        %vm1949 = vcmask 785920
        %1950 = vst.msk [vmem:[#allocation5] sm:$0xff] %vm1949, %v1944
        %1951 = vst.msk [vmem:[#allocation5 + $0x8] sm:$0xff] %vm1949, %v1946
        %v1952 = vpack.c.bf16 %v1911, %v1908
        %v1953 = vpack.c.bf16 %v1919, %v1916
        %1956 = vrot.lane.b32.xlu0 %v1952, 96
        %v1957 = vpop.permute.xlu0 %1956
        %1958 = vrot.lane.b32.xlu0 %v1953, 96
        %v1959 = vpop.permute.xlu0 %1958
        %vm1962 = vcmask 1048320
        %1963 = vst.msk [vmem:[#allocation5] sm:$0xff] %vm1962, %v1957
        %1964 = vst.msk [vmem:[#allocation5 + $0x8] sm:$0xff] %vm1962, %v1959
        %v1965 = vld [vmem:[#allocation5] sm:$0xff]
        %v1966 = vld [vmem:[#allocation5 + $0x8] sm:$0xff]
        %v1967 = vld [vmem:[#allocation14] sm:$0xf]
        %v1968 = vld [vmem:[#allocation14 + $0x4] sm:$0xf]
        %v1969 = vld [vmem:[#allocation14 + $0x8] sm:$0xf]
        %v1970 = vld [vmem:[#allocation14 + $0xc] sm:$0xf]
        %v1971 = vld [vmem:[#allocation14 + $0x10] sm:$0xf]
        %v1972 = vld [vmem:[#allocation14 + $0x14] sm:$0xf]
        %v1973 = vld [vmem:[#allocation14 + $0x18] sm:$0xf]
        %v1974 = vld [vmem:[#allocation14 + $0x1c] sm:$0xf]
        %v1975 = vld [vmem:[#allocation14 + $0x20] sm:$0xf]
        %v1976 = vld [vmem:[#allocation14 + $0x24] sm:$0xf]
        %v1977 = vld [vmem:[#allocation14 + $0x28] sm:$0xf]
        %v1978 = vld [vmem:[#allocation14 + $0x2c] sm:$0xf]
        %v1979 = vld [vmem:[#allocation14 + $0x30] sm:$0xf]
        %v1980 = vld [vmem:[#allocation14 + $0x34] sm:$0xf]
        %v1981 = vld [vmem:[#allocation14 + $0x38] sm:$0xf]
        %v1982 = vld [vmem:[#allocation14 + $0x3c] sm:$0xf]
        %v1983 = vld [vmem:[%s7] sm:$0x1]
        %v1985 = vlaneseq
        %v1986 = vshrl.u32 %v1985, 7
        %v1987 = vsub.s32 0, %v1986
        %v1988 = vrot.slane %v1983, %v1987
        %v2006 = vunpack.c.l.b16 %v1967
        %v2007 = vunpack.c.l.b16 %v1968
        %v2008 = vunpack.c.l.b16 %v1969
        %v2009 = vunpack.c.l.b16 %v1970
        %v2010 = vunpack.c.l.b16 %v1971
        %v2011 = vunpack.c.l.b16 %v1972
        %v2012 = vunpack.c.l.b16 %v1973
        %v2013 = vunpack.c.l.b16 %v1974
        %v2014 = vunpack.c.l.b16 %v1975
        %v2015 = vunpack.c.l.b16 %v1976
        %v2016 = vunpack.c.l.b16 %v1977
        %v2017 = vunpack.c.l.b16 %v1978
        %v2018 = vunpack.c.l.b16 %v1979
        %v2019 = vunpack.c.l.b16 %v1980
        %v2020 = vunpack.c.l.b16 %v1981
        %v2021 = vunpack.c.l.b16 %v1982
        %v2022 = vpack.c.b16 %v2007, %v2006
        %v2023 = vpack.c.b16 %v2009, %v2008
        %v2024 = vpack.c.b16 %v2011, %v2010
        %v2025 = vpack.c.b16 %v2013, %v2012
        %v2026 = vpack.c.b16 %v2015, %v2014
        %v2027 = vpack.c.b16 %v2017, %v2016
        %v2028 = vpack.c.b16 %v2019, %v2018
        %v2029 = vpack.c.b16 %v2021, %v2020
        %2038 = vmatprep.subr.bf16.mxu0 0
        %2039 = vmatpush1.bf16.msra.mxu0 %v2022
        %2040 = vmatprep.subr.bf16.mxu0 0
        %2041 = vmatpush1.bf16.msra.mxu0 %v2023
        %2042 = vmatprep.subr.bf16.mxu0 0
        %2043 = vmatpush1.bf16.msra.mxu0 %v2024
        %2044 = vmatprep.subr.bf16.mxu0 0
        %2045 = vmatpush1.bf16.msra.mxu0 %v2025
        %2046 = vmatprep.subr.bf16.mxu0 0
        %2047 = vmatpush1.bf16.msra.mxu0 %v2026
        %2048 = vmatprep.subr.bf16.mxu0 0
        %2049 = vmatpush1.bf16.msra.mxu0 %v2027
        %2050 = vmatprep.subr.bf16.mxu0 0
        %2051 = vmatpush1.bf16.msra.mxu0 %v2028
        %2052 = vmatprep.subr.bf16.mxu0 0
        %2053 = vmatpush1.bf16.msra.mxu0 %v2029
        %2054 = vmatprep.subr.bf16.mxu0 0
        %2055 = vmatpush1.bf16.msra.mxu0 0
        %2056 = vmatprep.subr.bf16.mxu0 0
        %2057 = vmatpush1.bf16.msra.mxu0 0
        %2058 = vmatprep.subr.bf16.mxu0 0
        %2059 = vmatpush1.bf16.msra.mxu0 0
        %2060 = vmatprep.subr.bf16.mxu0 0
        %2061 = vmatpush1.bf16.msra.mxu0 0
        %2062 = vmatprep.subr.bf16.mxu0 0
        %2063 = vmatpush1.bf16.msra.mxu0 0
        %2064 = vmatprep.subr.bf16.mxu0 0
        %2065 = vmatpush1.bf16.msra.mxu0 0
        %2066 = vmatprep.subr.bf16.mxu0 0
        %2067 = vmatpush1.bf16.msra.mxu0 0
        %2068 = vmatprep.subr.bf16.mxu0 0
        %2069 = vmatpush1.bf16.msra.mxu0 0
        %2070 = vmatprep.mubr.bf16.mxu0 0
        %2071 = vmatmul.mubr.bf16.gmra.mrb[0].mxu0 %v1965
        %v2072 = vpop.f32.mrb[0].mxu0
        %v2073 = vadd.f32 %v1988, %v2072
        %v2074 = vpop.f32.mrb[0].mxu0
        %v2075 = vpop.f32.mrb[0].mxu0
        %v2076 = vadd.f32 %v1988, %v2075
        %v2077 = vpop.f32.mrb[0].mxu0
        %2078 = vmatprep.mubr.bf16.mxu0 0
        %2079 = vmatmul.mubr.bf16.gmra.mrb[0].mxu0 %v1966
        %v2080 = vpop.f32.mrb[0].mxu0
        %v2081 = vadd.f32 %v1988, %v2080
        %v2082 = vpop.f32.mrb[0].mxu0
        %v2083 = vpop.f32.mrb[0].mxu0
        %v2084 = vadd.f32 %v1988, %v2083
        %v2085 = vpop.f32.mrb[0].mxu0
        %2086 = vdwg.mxu0
        %v2087 = vadd.f32 %v997, %v2073
        %v2088 = vadd.f32 %v998, %v2076
        %v2089 = vadd.f32 %v999, %v2081
        %v2090 = vadd.f32 %v1000, %v2084
        %2091 = vadd.xlane.f32.xlu0 %v2087
        %v2092 = vpop.xlane.xlu0 %2091
        %2093 = vadd.xlane.f32.xlu0 %v2088
        %v2094 = vpop.xlane.xlu0 %2093
        %2095 = vadd.xlane.f32.xlu0 %v2089
        %v2096 = vpop.xlane.xlu0 %2095
        %2097 = vadd.xlane.f32.xlu0 %v2090
        %v2098 = vpop.xlane.xlu0 %2097
        %v2099 = vrcp.pop 128.0
        %v2100 = vmul.f32 %v2092, %v2099
        %v2101 = vmul.f32 %v2094, %v2099
        %v2102 = vmul.f32 %v2096, %v2099
        %v2103 = vmul.f32 %v2098, %v2099
        %v2104 = vsub.f32 %v2087, %v2100
        %v2105 = vsub.f32 %v2088, %v2101
        %v2106 = vsub.f32 %v2089, %v2102
        %v2107 = vsub.f32 %v2090, %v2103
        %v2108 = vmul.f32 %v2104, %v2104
        %v2109 = vmul.f32 %v2105, %v2105
        %v2110 = vmul.f32 %v2106, %v2106
        %v2111 = vmul.f32 %v2107, %v2107
        %2112 = vadd.xlane.f32.xlu0 %v2108
        %v2113 = vpop.xlane.xlu0 %2112
        %2114 = vadd.xlane.f32.xlu0 %v2109
        %v2115 = vpop.xlane.xlu0 %2114
        %2116 = vadd.xlane.f32.xlu0 %v2110
        %v2117 = vpop.xlane.xlu0 %2116
        %2118 = vadd.xlane.f32.xlu0 %v2111
        %v2119 = vpop.xlane.xlu0 %2118
        %v2120 = vmul.f32 %v2113, %v2099
        %v2121 = vmul.f32 %v2115, %v2099
        %v2122 = vmul.f32 %v2117, %v2099
        %v2123 = vmul.f32 %v2119, %v2099
        %v2124 = vadd.f32 %v2120, 1e-05
        %v2125 = vadd.f32 %v2121, 1e-05
        %v2126 = vadd.f32 %v2122, 1e-05
        %v2127 = vadd.f32 %v2123, 1e-05
        %v2128 = vrsqrt.pop %v2124
        %v2129 = vrsqrt.pop %v2125
        %v2130 = vrsqrt.pop %v2126
        %v2131 = vrsqrt.pop %v2127
        %v2132 = vmul.f32 %v2104, %v2128
        %v2133 = vmul.f32 %v2105, %v2129
        %v2134 = vmul.f32 %v2106, %v2130
        %v2135 = vmul.f32 %v2107, %v2131
        %v2136 = vld [vmem:[%s8] sm:$0x1]
        %v2138 = vlaneseq
        %v2139 = vshrl.u32 %v2138, 7
        %v2140 = vsub.s32 0, %v2139
        %v2141 = vrot.slane %v2136, %v2140
        %v2143 = vmul.f32 %v2132, %v2141
        %v2144 = vmul.f32 %v2133, %v2141
        %v2145 = vmul.f32 %v2134, %v2141
        %v2146 = vmul.f32 %v2135, %v2141
        %v2147 = vld [vmem:[%s9] sm:$0x1]
        %v2149 = vlaneseq
        %v2150 = vshrl.u32 %v2149, 7
        %v2151 = vsub.s32 0, %v2150
        %v2152 = vrot.slane %v2147, %v2151
        %v2154 = vadd.f32 %v2143, %v2152
        %v2155 = vadd.f32 %v2144, %v2152
        %v2156 = vadd.f32 %v2145, %v2152
        %v2157 = vadd.f32 %v2146, %v2152
        %v2158 = vpack.c.bf16 %v2155, %v2154
        %v2159 = vpack.c.bf16 %v2157, %v2156
        %v2160 = vld [vmem:[#allocation15] sm:$0xff]
        %v2161 = vld [vmem:[#allocation15 + $0x8] sm:$0xff]
        %v2162 = vld [vmem:[#allocation15 + $0x10] sm:$0xff]
        %v2163 = vld [vmem:[#allocation15 + $0x18] sm:$0xff]
        %v2164 = vld [vmem:[#allocation15 + $0x20] sm:$0xff]
        %v2165 = vld [vmem:[#allocation15 + $0x28] sm:$0xff]
        %v2166 = vld [vmem:[#allocation15 + $0x30] sm:$0xff]
        %v2167 = vld [vmem:[#allocation15 + $0x38] sm:$0xff]
        %v2168 = vld [vmem:[#allocation15 + $0x40] sm:$0xff]
        %v2169 = vld [vmem:[#allocation15 + $0x48] sm:$0xff]
        %v2170 = vld [vmem:[#allocation15 + $0x50] sm:$0xff]
        %v2171 = vld [vmem:[#allocation15 + $0x58] sm:$0xff]
        %v2172 = vld [vmem:[#allocation15 + $0x60] sm:$0xff]
        %v2173 = vld [vmem:[#allocation15 + $0x68] sm:$0xff]
        %v2174 = vld [vmem:[#allocation15 + $0x70] sm:$0xff]
        %v2175 = vld [vmem:[#allocation15 + $0x78] sm:$0xff]
        %v2176 = vld [vmem:[#allocation15 + $0x80] sm:$0xff]
        %v2177 = vld [vmem:[#allocation15 + $0x88] sm:$0xff]
        %v2178 = vld [vmem:[#allocation15 + $0x90] sm:$0xff]
        %v2179 = vld [vmem:[#allocation15 + $0x98] sm:$0xff]
        %v2180 = vld [vmem:[#allocation15 + $0xa0] sm:$0xff]
        %v2181 = vld [vmem:[#allocation15 + $0xa8] sm:$0xff]
        %v2182 = vld [vmem:[#allocation15 + $0xb0] sm:$0xff]
        %v2183 = vld [vmem:[#allocation15 + $0xb8] sm:$0xff]
        %v2184 = vld [vmem:[#allocation15 + $0xc0] sm:$0xff]
        %v2185 = vld [vmem:[#allocation15 + $0xc8] sm:$0xff]
        %v2186 = vld [vmem:[#allocation15 + $0xd0] sm:$0xff]
        %v2187 = vld [vmem:[#allocation15 + $0xd8] sm:$0xff]
        %v2188 = vld [vmem:[#allocation15 + $0xe0] sm:$0xff]
        %v2189 = vld [vmem:[#allocation15 + $0xe8] sm:$0xff]
        %v2190 = vld [vmem:[#allocation15 + $0xf0] sm:$0xff]
        %v2191 = vld [vmem:[#allocation15 + $0xf8] sm:$0xff]
        %v2192 = vld [vmem:[%s11] sm:$0xf]
        %v2194 = vlaneseq
        %v2195 = vshrl.u32 %v2194, 7
        %v2196 = vsub.s32 0, %v2195
        %v2197 = vrot.slane %v2192, %v2196
        %v2198 = vlaneseq
        %v2199 = vshrl.u32 %v2198, 7
        %v2200 = vsub.s32 1, %v2199
        %v2201 = vrot.slane %v2192, %v2200
        %v2202 = vlaneseq
        %v2203 = vshrl.u32 %v2202, 7
        %v2204 = vsub.s32 2, %v2203
        %v2205 = vrot.slane %v2192, %v2204
        %v2206 = vlaneseq
        %v2207 = vshrl.u32 %v2206, 7
        %v2208 = vsub.s32 3, %v2207
        %v2209 = vrot.slane %v2192, %v2208
        %v2246 = vunpack.c.l.b16 %v2160
        %v2247 = vunpack.c.h.b16 %v2160
        %v2248 = vunpack.c.l.b16 %v2161
        %v2249 = vunpack.c.h.b16 %v2161
        %v2250 = vunpack.c.l.b16 %v2162
        %v2251 = vunpack.c.h.b16 %v2162
        %v2252 = vunpack.c.l.b16 %v2163
        %v2253 = vunpack.c.h.b16 %v2163
        %v2254 = vunpack.c.l.b16 %v2164
        %v2255 = vunpack.c.h.b16 %v2164
        %v2256 = vunpack.c.l.b16 %v2165
        %v2257 = vunpack.c.h.b16 %v2165
        %v2258 = vunpack.c.l.b16 %v2166
        %v2259 = vunpack.c.h.b16 %v2166
        %v2260 = vunpack.c.l.b16 %v2167
        %v2261 = vunpack.c.h.b16 %v2167
        %v2262 = vunpack.c.l.b16 %v2168
        %v2263 = vunpack.c.h.b16 %v2168
        %v2264 = vunpack.c.l.b16 %v2169
        %v2265 = vunpack.c.h.b16 %v2169
        %v2266 = vunpack.c.l.b16 %v2170
        %v2267 = vunpack.c.h.b16 %v2170
        %v2268 = vunpack.c.l.b16 %v2171
        %v2269 = vunpack.c.h.b16 %v2171
        %v2270 = vunpack.c.l.b16 %v2172
        %v2271 = vunpack.c.h.b16 %v2172
        %v2272 = vunpack.c.l.b16 %v2173
        %v2273 = vunpack.c.h.b16 %v2173
        %v2274 = vunpack.c.l.b16 %v2174
        %v2275 = vunpack.c.h.b16 %v2174
        %v2276 = vunpack.c.l.b16 %v2175
        %v2277 = vunpack.c.h.b16 %v2175
        %v2278 = vunpack.c.l.b16 %v2176
        %v2279 = vunpack.c.h.b16 %v2176
        %v2280 = vunpack.c.l.b16 %v2177
        %v2281 = vunpack.c.h.b16 %v2177
        %v2282 = vunpack.c.l.b16 %v2178
        %v2283 = vunpack.c.h.b16 %v2178
        %v2284 = vunpack.c.l.b16 %v2179
        %v2285 = vunpack.c.h.b16 %v2179
        %v2286 = vunpack.c.l.b16 %v2180
        %v2287 = vunpack.c.h.b16 %v2180
        %v2288 = vunpack.c.l.b16 %v2181
        %v2289 = vunpack.c.h.b16 %v2181
        %v2290 = vunpack.c.l.b16 %v2182
        %v2291 = vunpack.c.h.b16 %v2182
        %v2292 = vunpack.c.l.b16 %v2183
        %v2293 = vunpack.c.h.b16 %v2183
        %v2294 = vunpack.c.l.b16 %v2184
        %v2295 = vunpack.c.h.b16 %v2184
        %v2296 = vunpack.c.l.b16 %v2185
        %v2297 = vunpack.c.h.b16 %v2185
        %v2298 = vunpack.c.l.b16 %v2186
        %v2299 = vunpack.c.h.b16 %v2186
        %v2300 = vunpack.c.l.b16 %v2187
        %v2301 = vunpack.c.h.b16 %v2187
        %v2302 = vunpack.c.l.b16 %v2188
        %v2303 = vunpack.c.h.b16 %v2188
        %v2304 = vunpack.c.l.b16 %v2189
        %v2305 = vunpack.c.h.b16 %v2189
        %v2306 = vunpack.c.l.b16 %v2190
        %v2307 = vunpack.c.h.b16 %v2190
        %v2308 = vunpack.c.l.b16 %v2191
        %v2309 = vunpack.c.h.b16 %v2191
        %v2310 = vpack.c.b16 %v2250, %v2246
        %v2311 = vpack.c.b16 %v2251, %v2247
        %v2312 = vpack.c.b16 %v2252, %v2248
        %v2313 = vpack.c.b16 %v2253, %v2249
        %v2314 = vpack.c.b16 %v2258, %v2254
        %v2315 = vpack.c.b16 %v2259, %v2255
        %v2316 = vpack.c.b16 %v2260, %v2256
        %v2317 = vpack.c.b16 %v2261, %v2257
        %v2318 = vpack.c.b16 %v2266, %v2262
        %v2319 = vpack.c.b16 %v2267, %v2263
        %v2320 = vpack.c.b16 %v2268, %v2264
        %v2321 = vpack.c.b16 %v2269, %v2265
        %v2322 = vpack.c.b16 %v2274, %v2270
        %v2323 = vpack.c.b16 %v2275, %v2271
        %v2324 = vpack.c.b16 %v2276, %v2272
        %v2325 = vpack.c.b16 %v2277, %v2273
        %v2326 = vpack.c.b16 %v2282, %v2278
        %v2327 = vpack.c.b16 %v2283, %v2279
        %v2328 = vpack.c.b16 %v2284, %v2280
        %v2329 = vpack.c.b16 %v2285, %v2281
        %v2330 = vpack.c.b16 %v2290, %v2286
        %v2331 = vpack.c.b16 %v2291, %v2287
        %v2332 = vpack.c.b16 %v2292, %v2288
        %v2333 = vpack.c.b16 %v2293, %v2289
        %v2334 = vpack.c.b16 %v2298, %v2294
        %v2335 = vpack.c.b16 %v2299, %v2295
        %v2336 = vpack.c.b16 %v2300, %v2296
        %v2337 = vpack.c.b16 %v2301, %v2297
        %v2338 = vpack.c.b16 %v2306, %v2302
        %v2339 = vpack.c.b16 %v2307, %v2303
        %v2340 = vpack.c.b16 %v2308, %v2304
        %v2341 = vpack.c.b16 %v2309, %v2305
        %2374 = vmatprep.subr.bf16.mxu0 %v2311
        %2375 = vmatpush1.bf16.msra.mxu0 %v2310
        %2376 = vmatprep.subr.bf16.mxu0 %v2315
        %2377 = vmatpush1.bf16.msra.mxu0 %v2314
        %2378 = vmatprep.subr.bf16.mxu0 %v2319
        %2379 = vmatpush1.bf16.msra.mxu0 %v2318
        %2380 = vmatprep.subr.bf16.mxu0 %v2323
        %2381 = vmatpush1.bf16.msra.mxu0 %v2322
        %2382 = vmatprep.subr.bf16.mxu0 %v2327
        %2383 = vmatpush1.bf16.msra.mxu0 %v2326
        %2384 = vmatprep.subr.bf16.mxu0 %v2331
        %2385 = vmatpush1.bf16.msra.mxu0 %v2330
        %2386 = vmatprep.subr.bf16.mxu0 %v2335
        %2387 = vmatpush1.bf16.msra.mxu0 %v2334
        %2388 = vmatprep.subr.bf16.mxu0 %v2339
        %2389 = vmatpush1.bf16.msra.mxu0 %v2338
        %2390 = vmatprep.subr.bf16.mxu0 0
        %2391 = vmatpush1.bf16.msra.mxu0 0
        %2392 = vmatprep.subr.bf16.mxu0 0
        %2393 = vmatpush1.bf16.msra.mxu0 0
        %2394 = vmatprep.subr.bf16.mxu0 0
        %2395 = vmatpush1.bf16.msra.mxu0 0
        %2396 = vmatprep.subr.bf16.mxu0 0
        %2397 = vmatpush1.bf16.msra.mxu0 0
        %2398 = vmatprep.subr.bf16.mxu0 0
        %2399 = vmatpush1.bf16.msra.mxu0 0
        %2400 = vmatprep.subr.bf16.mxu0 0
        %2401 = vmatpush1.bf16.msra.mxu0 0
        %2402 = vmatprep.subr.bf16.mxu0 0
        %2403 = vmatpush1.bf16.msra.mxu0 0
        %2404 = vmatprep.subr.bf16.mxu0 0
        %2405 = vmatpush1.bf16.msra.mxu0 0
        %2406 = vmatprep.mubr.bf16.mxu0 0
        %2407 = vmatmul.mubr.bf16.gmra.mrb[0].mxu0 %v2158
        %v2408 = vpop.f32.mrb[0].mxu0
        %v2409 = vadd.f32 %v2197, %v2408
        %v2410 = vpop.f32.mrb[0].mxu0
        %v2411 = vadd.f32 %v2201, %v2410
        %v2412 = vpop.f32.mrb[0].mxu0
        %v2413 = vadd.f32 %v2197, %v2412
        %v2414 = vpop.f32.mrb[0].mxu0
        %v2415 = vadd.f32 %v2201, %v2414
        %2416 = vmatprep.mubr.bf16.mxu0 0
        %2417 = vmatmul.mubr.bf16.gmra.mrb[0].mxu0 %v2159
        %v2418 = vpop.f32.mrb[0].mxu0
        %v2419 = vadd.f32 %v2197, %v2418
        %v2420 = vpop.f32.mrb[0].mxu0
        %v2421 = vadd.f32 %v2201, %v2420
        %v2422 = vpop.f32.mrb[0].mxu0
        %v2423 = vadd.f32 %v2197, %v2422
        %v2424 = vpop.f32.mrb[0].mxu0
        %v2425 = vadd.f32 %v2201, %v2424
        %2426 = vdwg.mxu0
        %2427 = vmatprep.subr.bf16.mxu0 %v2313
        %2428 = vmatpush1.bf16.msra.mxu0 %v2312
        %2429 = vmatprep.subr.bf16.mxu0 %v2317
        %2430 = vmatpush1.bf16.msra.mxu0 %v2316
        %2431 = vmatprep.subr.bf16.mxu0 %v2321
        %2432 = vmatpush1.bf16.msra.mxu0 %v2320
        %2433 = vmatprep.subr.bf16.mxu0 %v2325
        %2434 = vmatpush1.bf16.msra.mxu0 %v2324
        %2435 = vmatprep.subr.bf16.mxu0 %v2329
        %2436 = vmatpush1.bf16.msra.mxu0 %v2328
        %2437 = vmatprep.subr.bf16.mxu0 %v2333
        %2438 = vmatpush1.bf16.msra.mxu0 %v2332
        %2439 = vmatprep.subr.bf16.mxu0 %v2337
        %2440 = vmatpush1.bf16.msra.mxu0 %v2336
        %2441 = vmatprep.subr.bf16.mxu0 %v2341
        %2442 = vmatpush1.bf16.msra.mxu0 %v2340
        %2443 = vmatprep.subr.bf16.mxu0 0
        %2444 = vmatpush1.bf16.msra.mxu0 0
        %2445 = vmatprep.subr.bf16.mxu0 0
        %2446 = vmatpush1.bf16.msra.mxu0 0
        %2447 = vmatprep.subr.bf16.mxu0 0
        %2448 = vmatpush1.bf16.msra.mxu0 0
        %2449 = vmatprep.subr.bf16.mxu0 0
        %2450 = vmatpush1.bf16.msra.mxu0 0
        %2451 = vmatprep.subr.bf16.mxu0 0
        %2452 = vmatpush1.bf16.msra.mxu0 0
        %2453 = vmatprep.subr.bf16.mxu0 0
        %2454 = vmatpush1.bf16.msra.mxu0 0
        %2455 = vmatprep.subr.bf16.mxu0 0
        %2456 = vmatpush1.bf16.msra.mxu0 0
        %2457 = vmatprep.subr.bf16.mxu0 0
        %2458 = vmatpush1.bf16.msra.mxu0 0
        %2459 = vmatprep.mubr.bf16.mxu0 0
        %2460 = vmatmul.mubr.bf16.gmra.mrb[0].mxu0 %v2158
        %v2461 = vpop.f32.mrb[0].mxu0
        %v2462 = vadd.f32 %v2205, %v2461
        %v2463 = vpop.f32.mrb[0].mxu0
        %v2464 = vadd.f32 %v2209, %v2463
        %v2465 = vpop.f32.mrb[0].mxu0
        %v2466 = vadd.f32 %v2205, %v2465
        %v2467 = vpop.f32.mrb[0].mxu0
        %v2468 = vadd.f32 %v2209, %v2467
        %2469 = vmatprep.mubr.bf16.mxu0 0
        %2470 = vmatmul.mubr.bf16.gmra.mrb[0].mxu0 %v2159
        %v2471 = vpop.f32.mrb[0].mxu0
        %v2472 = vadd.f32 %v2205, %v2471
        %v2473 = vpop.f32.mrb[0].mxu0
        %v2474 = vadd.f32 %v2209, %v2473
        %v2475 = vpop.f32.mrb[0].mxu0
        %v2476 = vadd.f32 %v2205, %v2475
        %v2477 = vpop.f32.mrb[0].mxu0
        %v2478 = vadd.f32 %v2209, %v2477
        %2479 = vdwg.mxu0
        %v2480 = vmax.f32 %v2409, 0.0
        %v2481 = vmax.f32 %v2411, 0.0
        %v2482 = vmax.f32 %v2462, 0.0
        %v2483 = vmax.f32 %v2464, 0.0
        %v2484 = vmax.f32 %v2413, 0.0
        %v2485 = vmax.f32 %v2415, 0.0
        %v2486 = vmax.f32 %v2466, 0.0
        %v2487 = vmax.f32 %v2468, 0.0
        %v2488 = vmax.f32 %v2419, 0.0
        %v2489 = vmax.f32 %v2421, 0.0
        %v2490 = vmax.f32 %v2472, 0.0
        %v2491 = vmax.f32 %v2474, 0.0
        %v2492 = vmax.f32 %v2423, 0.0
        %v2493 = vmax.f32 %v2425, 0.0
        %v2494 = vmax.f32 %v2476, 0.0
        %v2495 = vmax.f32 %v2478, 0.0
        %v2496 = vpack.c.bf16 %v2484, %v2480
        %v2497 = vpack.c.bf16 %v2485, %v2481
        %v2498 = vpack.c.bf16 %v2486, %v2482
        %v2499 = vpack.c.bf16 %v2487, %v2483
        %v2500 = vpack.c.bf16 %v2492, %v2488
        %v2501 = vpack.c.bf16 %v2493, %v2489
        %v2502 = vpack.c.bf16 %v2494, %v2490
        %v2503 = vpack.c.bf16 %v2495, %v2491
        %v2504 = vld [vmem:[#allocation17] sm:$0xf]
        %v2505 = vld [vmem:[#allocation17 + $0x4] sm:$0xf]
        %v2506 = vld [vmem:[#allocation17 + $0x8] sm:$0xf]
        %v2507 = vld [vmem:[#allocation17 + $0xc] sm:$0xf]
        %v2508 = vld [vmem:[#allocation17 + $0x10] sm:$0xf]
        %v2509 = vld [vmem:[#allocation17 + $0x14] sm:$0xf]
        %v2510 = vld [vmem:[#allocation17 + $0x18] sm:$0xf]
        %v2511 = vld [vmem:[#allocation17 + $0x1c] sm:$0xf]
        %v2512 = vld [vmem:[#allocation17 + $0x20] sm:$0xf]
        %v2513 = vld [vmem:[#allocation17 + $0x24] sm:$0xf]
        %v2514 = vld [vmem:[#allocation17 + $0x28] sm:$0xf]
        %v2515 = vld [vmem:[#allocation17 + $0x2c] sm:$0xf]
        %v2516 = vld [vmem:[#allocation17 + $0x30] sm:$0xf]
        %v2517 = vld [vmem:[#allocation17 + $0x34] sm:$0xf]
        %v2518 = vld [vmem:[#allocation17 + $0x38] sm:$0xf]
        %v2519 = vld [vmem:[#allocation17 + $0x3c] sm:$0xf]
        %v2520 = vld [vmem:[#allocation17 + $0x40] sm:$0xf]
        %v2521 = vld [vmem:[#allocation17 + $0x44] sm:$0xf]
        %v2522 = vld [vmem:[#allocation17 + $0x48] sm:$0xf]
        %v2523 = vld [vmem:[#allocation17 + $0x4c] sm:$0xf]
        %v2524 = vld [vmem:[#allocation17 + $0x50] sm:$0xf]
        %v2525 = vld [vmem:[#allocation17 + $0x54] sm:$0xf]
        %v2526 = vld [vmem:[#allocation17 + $0x58] sm:$0xf]
        %v2527 = vld [vmem:[#allocation17 + $0x5c] sm:$0xf]
        %v2528 = vld [vmem:[#allocation17 + $0x60] sm:$0xf]
        %v2529 = vld [vmem:[#allocation17 + $0x64] sm:$0xf]
        %v2530 = vld [vmem:[#allocation17 + $0x68] sm:$0xf]
        %v2531 = vld [vmem:[#allocation17 + $0x6c] sm:$0xf]
        %v2532 = vld [vmem:[#allocation17 + $0x70] sm:$0xf]
        %v2533 = vld [vmem:[#allocation17 + $0x74] sm:$0xf]
        %v2534 = vld [vmem:[#allocation17 + $0x78] sm:$0xf]
        %v2535 = vld [vmem:[#allocation17 + $0x7c] sm:$0xf]
        %v2536 = vld [vmem:[#allocation17 + $0x80] sm:$0xf]
        %v2537 = vld [vmem:[#allocation17 + $0x84] sm:$0xf]
        %v2538 = vld [vmem:[#allocation17 + $0x88] sm:$0xf]
        %v2539 = vld [vmem:[#allocation17 + $0x8c] sm:$0xf]
        %v2540 = vld [vmem:[#allocation17 + $0x90] sm:$0xf]
        %v2541 = vld [vmem:[#allocation17 + $0x94] sm:$0xf]
        %v2542 = vld [vmem:[#allocation17 + $0x98] sm:$0xf]
        %v2543 = vld [vmem:[#allocation17 + $0x9c] sm:$0xf]
        %v2544 = vld [vmem:[#allocation17 + $0xa0] sm:$0xf]
        %v2545 = vld [vmem:[#allocation17 + $0xa4] sm:$0xf]
        %v2546 = vld [vmem:[#allocation17 + $0xa8] sm:$0xf]
        %v2547 = vld [vmem:[#allocation17 + $0xac] sm:$0xf]
        %v2548 = vld [vmem:[#allocation17 + $0xb0] sm:$0xf]
        %v2549 = vld [vmem:[#allocation17 + $0xb4] sm:$0xf]
        %v2550 = vld [vmem:[#allocation17 + $0xb8] sm:$0xf]
        %v2551 = vld [vmem:[#allocation17 + $0xbc] sm:$0xf]
        %v2552 = vld [vmem:[#allocation17 + $0xc0] sm:$0xf]
        %v2553 = vld [vmem:[#allocation17 + $0xc4] sm:$0xf]
        %v2554 = vld [vmem:[#allocation17 + $0xc8] sm:$0xf]
        %v2555 = vld [vmem:[#allocation17 + $0xcc] sm:$0xf]
        %v2556 = vld [vmem:[#allocation17 + $0xd0] sm:$0xf]
        %v2557 = vld [vmem:[#allocation17 + $0xd4] sm:$0xf]
        %v2558 = vld [vmem:[#allocation17 + $0xd8] sm:$0xf]
        %v2559 = vld [vmem:[#allocation17 + $0xdc] sm:$0xf]
        %v2560 = vld [vmem:[#allocation17 + $0xe0] sm:$0xf]
        %v2561 = vld [vmem:[#allocation17 + $0xe4] sm:$0xf]
        %v2562 = vld [vmem:[#allocation17 + $0xe8] sm:$0xf]
        %v2563 = vld [vmem:[#allocation17 + $0xec] sm:$0xf]
        %v2564 = vld [vmem:[#allocation17 + $0xf0] sm:$0xf]
        %v2565 = vld [vmem:[#allocation17 + $0xf4] sm:$0xf]
        %v2566 = vld [vmem:[#allocation17 + $0xf8] sm:$0xf]
        %v2567 = vld [vmem:[#allocation17 + $0xfc] sm:$0xf]
        %v2568 = vld [vmem:[%s13] sm:$0x1]
        %v2570 = vlaneseq
        %v2571 = vshrl.u32 %v2570, 7
        %v2572 = vsub.s32 0, %v2571
        %v2573 = vrot.slane %v2568, %v2572
        %v2639 = vunpack.c.l.b16 %v2504
        %v2640 = vunpack.c.l.b16 %v2505
        %v2641 = vunpack.c.l.b16 %v2506
        %v2642 = vunpack.c.l.b16 %v2507
        %v2643 = vunpack.c.l.b16 %v2508
        %v2644 = vunpack.c.l.b16 %v2509
        %v2645 = vunpack.c.l.b16 %v2510
        %v2646 = vunpack.c.l.b16 %v2511
        %v2647 = vunpack.c.l.b16 %v2512
        %v2648 = vunpack.c.l.b16 %v2513
        %v2649 = vunpack.c.l.b16 %v2514
        %v2650 = vunpack.c.l.b16 %v2515
        %v2651 = vunpack.c.l.b16 %v2516
        %v2652 = vunpack.c.l.b16 %v2517
        %v2653 = vunpack.c.l.b16 %v2518
        %v2654 = vunpack.c.l.b16 %v2519
        %v2655 = vunpack.c.l.b16 %v2520
        %v2656 = vunpack.c.l.b16 %v2521
        %v2657 = vunpack.c.l.b16 %v2522
        %v2658 = vunpack.c.l.b16 %v2523
        %v2659 = vunpack.c.l.b16 %v2524
        %v2660 = vunpack.c.l.b16 %v2525
        %v2661 = vunpack.c.l.b16 %v2526
        %v2662 = vunpack.c.l.b16 %v2527
        %v2663 = vunpack.c.l.b16 %v2528
        %v2664 = vunpack.c.l.b16 %v2529
        %v2665 = vunpack.c.l.b16 %v2530
        %v2666 = vunpack.c.l.b16 %v2531
        %v2667 = vunpack.c.l.b16 %v2532
        %v2668 = vunpack.c.l.b16 %v2533
        %v2669 = vunpack.c.l.b16 %v2534
        %v2670 = vunpack.c.l.b16 %v2535
        %v2671 = vunpack.c.l.b16 %v2536
        %v2672 = vunpack.c.l.b16 %v2537
        %v2673 = vunpack.c.l.b16 %v2538
        %v2674 = vunpack.c.l.b16 %v2539
        %v2675 = vunpack.c.l.b16 %v2540
        %v2676 = vunpack.c.l.b16 %v2541
        %v2677 = vunpack.c.l.b16 %v2542
        %v2678 = vunpack.c.l.b16 %v2543
        %v2679 = vunpack.c.l.b16 %v2544
        %v2680 = vunpack.c.l.b16 %v2545
        %v2681 = vunpack.c.l.b16 %v2546
        %v2682 = vunpack.c.l.b16 %v2547
        %v2683 = vunpack.c.l.b16 %v2548
        %v2684 = vunpack.c.l.b16 %v2549
        %v2685 = vunpack.c.l.b16 %v2550
        %v2686 = vunpack.c.l.b16 %v2551
        %v2687 = vunpack.c.l.b16 %v2552
        %v2688 = vunpack.c.l.b16 %v2553
        %v2689 = vunpack.c.l.b16 %v2554
        %v2690 = vunpack.c.l.b16 %v2555
        %v2691 = vunpack.c.l.b16 %v2556
        %v2692 = vunpack.c.l.b16 %v2557
        %v2693 = vunpack.c.l.b16 %v2558
        %v2694 = vunpack.c.l.b16 %v2559
        %v2695 = vunpack.c.l.b16 %v2560
        %v2696 = vunpack.c.l.b16 %v2561
        %v2697 = vunpack.c.l.b16 %v2562
        %v2698 = vunpack.c.l.b16 %v2563
        %v2699 = vunpack.c.l.b16 %v2564
        %v2700 = vunpack.c.l.b16 %v2565
        %v2701 = vunpack.c.l.b16 %v2566
        %v2702 = vunpack.c.l.b16 %v2567
        %v2703 = vpack.c.b16 %v2640, %v2639
        %v2704 = vpack.c.b16 %v2642, %v2641
        %v2705 = vpack.c.b16 %v2644, %v2643
        %v2706 = vpack.c.b16 %v2646, %v2645
        %v2707 = vpack.c.b16 %v2648, %v2647
        %v2708 = vpack.c.b16 %v2650, %v2649
        %v2709 = vpack.c.b16 %v2652, %v2651
        %v2710 = vpack.c.b16 %v2654, %v2653
        %v2711 = vpack.c.b16 %v2656, %v2655
        %v2712 = vpack.c.b16 %v2658, %v2657
        %v2713 = vpack.c.b16 %v2660, %v2659
        %v2714 = vpack.c.b16 %v2662, %v2661
        %v2715 = vpack.c.b16 %v2664, %v2663
        %v2716 = vpack.c.b16 %v2666, %v2665
        %v2717 = vpack.c.b16 %v2668, %v2667
        %v2718 = vpack.c.b16 %v2670, %v2669
        %v2719 = vpack.c.b16 %v2672, %v2671
        %v2720 = vpack.c.b16 %v2674, %v2673
        %v2721 = vpack.c.b16 %v2676, %v2675
        %v2722 = vpack.c.b16 %v2678, %v2677
        %v2723 = vpack.c.b16 %v2680, %v2679
        %v2724 = vpack.c.b16 %v2682, %v2681
        %v2725 = vpack.c.b16 %v2684, %v2683
        %v2726 = vpack.c.b16 %v2686, %v2685
        %v2727 = vpack.c.b16 %v2688, %v2687
        %v2728 = vpack.c.b16 %v2690, %v2689
        %v2729 = vpack.c.b16 %v2692, %v2691
        %v2730 = vpack.c.b16 %v2694, %v2693
        %v2731 = vpack.c.b16 %v2696, %v2695
        %v2732 = vpack.c.b16 %v2698, %v2697
        %v2733 = vpack.c.b16 %v2700, %v2699
        %v2734 = vpack.c.b16 %v2702, %v2701
        %2767 = vmatprep.subr.bf16.mxu0 0
        %2768 = vmatpush1.bf16.msra.mxu0 %v2703
        %2769 = vmatprep.subr.bf16.mxu0 0
        %2770 = vmatpush1.bf16.msra.mxu0 %v2704
        %2771 = vmatprep.subr.bf16.mxu0 0
        %2772 = vmatpush1.bf16.msra.mxu0 %v2705
        %2773 = vmatprep.subr.bf16.mxu0 0
        %2774 = vmatpush1.bf16.msra.mxu0 %v2706
        %2775 = vmatprep.subr.bf16.mxu0 0
        %2776 = vmatpush1.bf16.msra.mxu0 %v2707
        %2777 = vmatprep.subr.bf16.mxu0 0
        %2778 = vmatpush1.bf16.msra.mxu0 %v2708
        %2779 = vmatprep.subr.bf16.mxu0 0
        %2780 = vmatpush1.bf16.msra.mxu0 %v2709
        %2781 = vmatprep.subr.bf16.mxu0 0
        %2782 = vmatpush1.bf16.msra.mxu0 %v2710
        %2783 = vmatprep.subr.bf16.mxu0 0
        %2784 = vmatpush1.bf16.msra.mxu0 %v2711
        %2785 = vmatprep.subr.bf16.mxu0 0
        %2786 = vmatpush1.bf16.msra.mxu0 %v2712
        %2787 = vmatprep.subr.bf16.mxu0 0
        %2788 = vmatpush1.bf16.msra.mxu0 %v2713
        %2789 = vmatprep.subr.bf16.mxu0 0
        %2790 = vmatpush1.bf16.msra.mxu0 %v2714
        %2791 = vmatprep.subr.bf16.mxu0 0
        %2792 = vmatpush1.bf16.msra.mxu0 %v2715
        %2793 = vmatprep.subr.bf16.mxu0 0
        %2794 = vmatpush1.bf16.msra.mxu0 %v2716
        %2795 = vmatprep.subr.bf16.mxu0 0
        %2796 = vmatpush1.bf16.msra.mxu0 %v2717
        %2797 = vmatprep.subr.bf16.mxu0 0
        %2798 = vmatpush1.bf16.msra.mxu0 %v2718
        %2799 = vmatprep.mubr.bf16.mxu0 %v2497
        %2800 = vmatmul.mubr.bf16.gmra.mrb[0].mxu0 %v2496
        %v2801 = vpop.f32.mrb[0].mxu0
        %v2802 = vadd.f32 %v2573, %v2801
        %v2803 = vpop.f32.mrb[0].mxu0
        %v2804 = vpop.f32.mrb[0].mxu0
        %v2805 = vadd.f32 %v2573, %v2804
        %v2806 = vpop.f32.mrb[0].mxu0
        %2807 = vmatprep.mubr.bf16.mxu0 %v2501
        %2808 = vmatmul.mubr.bf16.gmra.mrb[0].mxu0 %v2500
        %v2809 = vpop.f32.mrb[0].mxu0
        %v2810 = vadd.f32 %v2573, %v2809
        %v2811 = vpop.f32.mrb[0].mxu0
        %v2812 = vpop.f32.mrb[0].mxu0
        %v2813 = vadd.f32 %v2573, %v2812
        %v2814 = vpop.f32.mrb[0].mxu0
        %2815 = vdwg.mxu0
        %2816 = vmatprep.subr.bf16.mxu0 0
        %2817 = vmatpush1.bf16.msra.mxu0 %v2719
        %2818 = vmatprep.subr.bf16.mxu0 0
        %2819 = vmatpush1.bf16.msra.mxu0 %v2720
        %2820 = vmatprep.subr.bf16.mxu0 0
        %2821 = vmatpush1.bf16.msra.mxu0 %v2721
        %2822 = vmatprep.subr.bf16.mxu0 0
        %2823 = vmatpush1.bf16.msra.mxu0 %v2722
        %2824 = vmatprep.subr.bf16.mxu0 0
        %2825 = vmatpush1.bf16.msra.mxu0 %v2723
        %2826 = vmatprep.subr.bf16.mxu0 0
        %2827 = vmatpush1.bf16.msra.mxu0 %v2724
        %2828 = vmatprep.subr.bf16.mxu0 0
        %2829 = vmatpush1.bf16.msra.mxu0 %v2725
        %2830 = vmatprep.subr.bf16.mxu0 0
        %2831 = vmatpush1.bf16.msra.mxu0 %v2726
        %2832 = vmatprep.subr.bf16.mxu0 0
        %2833 = vmatpush1.bf16.msra.mxu0 %v2727
        %2834 = vmatprep.subr.bf16.mxu0 0
        %2835 = vmatpush1.bf16.msra.mxu0 %v2728
        %2836 = vmatprep.subr.bf16.mxu0 0
        %2837 = vmatpush1.bf16.msra.mxu0 %v2729
        %2838 = vmatprep.subr.bf16.mxu0 0
        %2839 = vmatpush1.bf16.msra.mxu0 %v2730
        %2840 = vmatprep.subr.bf16.mxu0 0
        %2841 = vmatpush1.bf16.msra.mxu0 %v2731
        %2842 = vmatprep.subr.bf16.mxu0 0
        %2843 = vmatpush1.bf16.msra.mxu0 %v2732
        %2844 = vmatprep.subr.bf16.mxu0 0
        %2845 = vmatpush1.bf16.msra.mxu0 %v2733
        %2846 = vmatprep.subr.bf16.mxu0 0
        %2847 = vmatpush1.bf16.msra.mxu0 %v2734
        %2848 = vmatprep.mubr.bf16.mxu0 %v2499
        %2849 = vmatmul.mubr.bf16.gmra.mrb[0].mxu0 %v2498
        %v2850 = vpop.f32.mrb[0].mxu0
        %v2851 = vadd.f32 %v2802, %v2850
        %v2852 = vpop.f32.mrb[0].mxu0
        %v2853 = vpop.f32.mrb[0].mxu0
        %v2854 = vadd.f32 %v2805, %v2853
        %v2855 = vpop.f32.mrb[0].mxu0
        %2856 = vmatprep.mubr.bf16.mxu0 %v2503
        %2857 = vmatmul.mubr.bf16.gmra.mrb[0].mxu0 %v2502
        %v2858 = vpop.f32.mrb[0].mxu0
        %v2859 = vadd.f32 %v2810, %v2858
        %v2860 = vpop.f32.mrb[0].mxu0
        %v2861 = vpop.f32.mrb[0].mxu0
        %v2862 = vadd.f32 %v2813, %v2861
        %v2863 = vpop.f32.mrb[0].mxu0
        %2864 = vdwg.mxu0
        %v2865 = vadd.f32 %v2154, %v2851
        %v2866 = vadd.f32 %v2155, %v2854
        %v2867 = vadd.f32 %v2156, %v2859
        %v2868 = vadd.f32 %v2157, %v2862
        %2869 = vadd.xlane.f32.xlu0 %v2865
        %v2870 = vpop.xlane.xlu0 %2869
        %2871 = vadd.xlane.f32.xlu0 %v2866
        %v2872 = vpop.xlane.xlu0 %2871
        %2873 = vadd.xlane.f32.xlu0 %v2867
        %v2874 = vpop.xlane.xlu0 %2873
        %2875 = vadd.xlane.f32.xlu0 %v2868
        %v2876 = vpop.xlane.xlu0 %2875
        %v2877 = vmul.f32 %v2870, %v2099
        %v2878 = vmul.f32 %v2872, %v2099
        %v2879 = vmul.f32 %v2874, %v2099
        %v2880 = vmul.f32 %v2876, %v2099
        %v2881 = vsub.f32 %v2865, %v2877
        %v2882 = vsub.f32 %v2866, %v2878
        %v2883 = vsub.f32 %v2867, %v2879
        %v2884 = vsub.f32 %v2868, %v2880
        %v2885 = vmul.f32 %v2881, %v2881
        %v2886 = vmul.f32 %v2882, %v2882
        %v2887 = vmul.f32 %v2883, %v2883
        %v2888 = vmul.f32 %v2884, %v2884
        %2889 = vadd.xlane.f32.xlu0 %v2885
        %v2890 = vpop.xlane.xlu0 %2889
        %2891 = vadd.xlane.f32.xlu0 %v2886
        %v2892 = vpop.xlane.xlu0 %2891
        %2893 = vadd.xlane.f32.xlu0 %v2887
        %v2894 = vpop.xlane.xlu0 %2893
        %2895 = vadd.xlane.f32.xlu0 %v2888
        %v2896 = vpop.xlane.xlu0 %2895
        %v2897 = vmul.f32 %v2890, %v2099
        %v2898 = vmul.f32 %v2892, %v2099
        %v2899 = vmul.f32 %v2894, %v2099
        %v2900 = vmul.f32 %v2896, %v2099
        %v2901 = vadd.f32 %v2897, 1e-05
        %v2902 = vadd.f32 %v2898, 1e-05
        %v2903 = vadd.f32 %v2899, 1e-05
        %v2904 = vadd.f32 %v2900, 1e-05
        %v2905 = vrsqrt.pop %v2901
        %v2906 = vrsqrt.pop %v2902
        %v2907 = vrsqrt.pop %v2903
        %v2908 = vrsqrt.pop %v2904
        %v2909 = vmul.f32 %v2881, %v2905
        %v2910 = vmul.f32 %v2882, %v2906
        %v2911 = vmul.f32 %v2883, %v2907
        %v2912 = vmul.f32 %v2884, %v2908
        %v2913 = vld [vmem:[%s14] sm:$0x1]
        %v2915 = vlaneseq
        %v2916 = vshrl.u32 %v2915, 7
        %v2917 = vsub.s32 0, %v2916
        %v2918 = vrot.slane %v2913, %v2917
        %v2920 = vmul.f32 %v2909, %v2918
        %v2921 = vmul.f32 %v2910, %v2918
        %v2922 = vmul.f32 %v2911, %v2918
        %v2923 = vmul.f32 %v2912, %v2918
        %v2924 = vld [vmem:[%s15] sm:$0x1]
        %v2926 = vlaneseq
        %v2927 = vshrl.u32 %v2926, 7
        %v2928 = vsub.s32 0, %v2927
        %v2929 = vrot.slane %v2924, %v2928
        %v2931 = vadd.f32 %v2920, %v2929
        %v2932 = vadd.f32 %v2921, %v2929
        %v2933 = vadd.f32 %v2922, %v2929
        %v2934 = vadd.f32 %v2923, %v2929
        %2935 = vst [vmem:[%s669] sm:$0xff] %v2931
        %2936 = vst [vmem:[%s669 + $0x8] sm:$0xff] %v2932
        %2937 = vst [vmem:[%s669 + $0x10] sm:$0xff] %v2933
        %2938 = vst [vmem:[%s669 + $0x18] sm:$0xff] %v2934
        %s2939 = sand.u32 %s408, 1
        %s2940 = scalar_lea.sflag [#allocation8], %s2939
        %s2941 = sand.u32 %s408, 1
        %s2942 = smul.addr %s2941, 32
        %s2943 = scalar_lea.vmem [#allocation18], %s2942
        // Predicated region
        $region117: #{tpu_custom_call.1} parent=83 // pred_check
          %p2944 = pneg %p418
        $region118: #{tpu_custom_call.1} parent=83 // pred_check_branch
          %2946 = sbr.rel (%p2944) target = $region120
        $region119: #{tpu_custom_call.1} parent=83 // pred_region
          %s2947 = smul.u32 4, %s43
          %s2949 = ssub.s32 512, 512
          %2950 = vsyncadd %s2940, %s2949
          %s2951 = smul.addr %s42, 8
          %s2952 = sadd.s32 %s2947, %s2951
          %s2953 = smul.addr %s2952, 128
          %s2954 = scalar_lea.hbm %s16, %s2953
          %s2955 = sshll.u32 %s2943, 4
          %s2956 = int_to_ptr.vmem [resolvable:$true] %s2955
          %2961 = dma.vmem_to_hbm [thread:$0]  %s2956, 512, %s2954, %s2940, 128, 128, 8
        $region120: #{tpu_custom_call.1} parent=83 // pred_fallthru
          _
      $region84: #{tpu_custom_call.1} parent=5 // pred_fallthru
        _
      %p2962 = scmp.le.s32.totalorder 2, %s33
      // Predicated region
      $region121: #{tpu_custom_call.1} parent=5 // pred_check
        %p2963 = pneg %p2962
      $region122: #{tpu_custom_call.1} parent=5 // pred_check_branch
        %2965 = sbr.rel (%p2963) target = $region124
      $region123: #{tpu_custom_call.1} parent=5 // pred_region
        %s2966 = ssub.s32 %s33, 2
        // Predicated region
        $region125: #{tpu_custom_call.1} parent=123 // pred_check
          %p2967 = pneg %p424
        $region126: #{tpu_custom_call.1} parent=123 // pred_check_branch
          %2969 = sbr.rel (%p2967) target = $region128
        $region127: #{tpu_custom_call.1} parent=123 // pred_region
          %s2970 = sand.u32 %s409, 1
          %s2971 = scalar_lea.sflag [#allocation8], %s2970
          %s2972 = sand.u32 %s409, 1
          %s2973 = smul.addr %s2972, 32
          %s2974 = scalar_lea.vmem [#allocation18], %s2973
          %2975 = dma.done %s2971, 512
        $region128: #{tpu_custom_call.1} parent=123 // pred_fallthru
          _
      $region124: #{tpu_custom_call.1} parent=5 // pred_fallthru
        _
    $region6: #{tpu_custom_call.1} parent=1 // loop_footer
      %s37 = sadd.s32 1, %s33
    $region7: #{tpu_custom_call.1} parent=1 // loop_footer_branch
      %32 = sbr.rel target = $region3
    $region8: #{tpu_custom_call.1} parent=1 // loop_exit
      _
    %2976 = vsyncpa [#allocation7], 1
    %s2977 = scalar_lea.sflag [#allocation7], 1
    %2978 = vsyncpa %s2977, 1
    %2979 = vsyncpa [#allocation10], 1
    %s2980 = scalar_lea.sflag [#allocation10], 1
    %2981 = vsyncpa %s2980, 1
    %2982 = vsyncpa [#allocation13], 1
    %2983 = vsyncpa [#allocation16], 1
    %2984 = vsyncpa [#allocation8], 1
    %s2985 = scalar_lea.sflag [#allocation8], 1
    %2986 = vsyncpa %s2985, 1

</llo_original>
